<compile_context>
chip_gen: v7x
topology: tpu7x:2x2x1
jax: 0.10.0
libtpu: 0.0.40
codegen_flags: <defaults>
</compile_context>

<pallas_src>
import math

import jax
import jax.numpy as jnp
import numpy as np
from jax.experimental import pallas as pl
from jax.experimental.pallas import tpu as pltpu


# ------------------------------ kernel ---------------------------------------

def fused_transformer_kernel(x_ref, pe_ref,
                             wqb_ref, bqb_ref, wkb_ref, bkb_ref,
                             wv_ref, bv_ref, g1_ref, be1_ref,
                             fw1_ref, fb1_ref, fw2_ref, fb2_ref,
                             g2_ref, be2_ref, bias_ref, o_ref):
    # x_ref: (1, R, C) with R = T*N rows ordered r = t*N + n (native layout).
    _, R, C = x_ref.shape
    W = C - 2                              # Conv2d(T, T, (1, 3)), no padding
    L = wv_ref.shape[0]                    # number of stacked Transform layers
    scale = 1.0 / (C ** 0.5)
    f32 = jnp.float32

    def layer_norm(z, g, b):
        mu = jnp.mean(z, axis=-1, keepdims=True)
        var = jnp.mean(jnp.square(z - mu), axis=-1, keepdims=True)
        return (z - mu) * jax.lax.rsqrt(var + 1e-5) * g + b

    x2 = x_ref[0] + pe_ref[...]            # PositionalEncoding fused, (R, C)
    attn_bias = bias_ref[...]              # (R, R): 0 on same-node pairs, -1e30 off

    for l in range(L):                     # all layers fused in one pallas_call
        # stacked conv taps, shared by the q and k convolutions: (3R, W)
        xs = jnp.concatenate([x2[:, k:k + W] for k in range(3)], axis=0)

        # conv1 / conv2 as one 2-D matmul each (block-diagonal weights over nodes)
        q2 = (jnp.dot(wqb_ref[l], xs, preferred_element_type=f32)
              + bqb_ref[l]) * scale                                   # (R, W)
        k2 = jnp.dot(wkb_ref[l], xs, preferred_element_type=f32) + bkb_ref[l]

        # value = Linear(C, C)(x)
        v2 = jnp.dot(x2, wv_ref[l], preferred_element_type=f32) + bv_ref[l]

        # attention: scores only valid within a node -> additive -1e30 mask
        s = jax.lax.dot_general(q2, k2, (((1,), (1,)), ((), ())),
                                preferred_element_type=f32) + attn_bias
        s = s - jnp.max(s, axis=-1, keepdims=True)
        e = jnp.exp(s)                                                # masked -> 0
        p = e * pl.reciprocal(jnp.sum(e, axis=-1, keepdims=True), approx=False)

        h = jnp.dot(p, v2, preferred_element_type=f32) + x2           # + residual
        h = layer_norm(h, g1_ref[l], be1_ref[l])

        # feed-forward: Linear -> ReLU -> Linear, residual, LayerNorm
        f = jnp.maximum(jnp.dot(h, fw1_ref[l], preferred_element_type=f32)
                        + fb1_ref[l], 0.0)
        f = jnp.dot(f, fw2_ref[l], preferred_element_type=f32) + fb2_ref[l]
        x2 = layer_norm(f + h, g2_ref[l], be2_ref[l])

    o_ref[0] = x2.astype(o_ref.dtype)


# ------------------------------ wrapper --------------------------------------

_STACKED = ['wqb', 'bqb', 'wkb', 'bkb', 'wv', 'bv', 'g1', 'be1',
            'fw1', 'fb1', 'fw2', 'fb2', 'g2', 'be2']


def transformer_layer_forward(x_btnc, packed):
    # x_btnc: (B, T, N, C) exactly like the PyTorch module; returns same shape.
    B, T, N, C = x_btnc.shape
    R = T * N
    x2 = x_btnc.reshape(B, R, C)           # free reshape (contiguous), no transpose
    weights = [packed[name] for name in _STACKED]

    def full_spec(a):
        return pl.BlockSpec(a.shape, lambda b, nd=a.ndim: (0,) * nd)

    in_specs = ([pl.BlockSpec((1, R, C), lambda b: (b, 0, 0)),
                 full_spec(packed['pe2'])]
                + [full_spec(w) for w in weights]
                + [full_spec(packed['attn_bias'])])

    out = pl.pallas_call(
        fused_transformer_kernel,
        out_shape=jax.ShapeDtypeStruct((B, R, C), x_btnc.dtype),
        grid=(B,),
        in_specs=in_specs,
        out_specs=pl.BlockSpec((1, R, C), lambda b: (b, 0, 0)),
        compiler_params=pltpu.CompilerParams(dimension_semantics=("parallel",)),
    )(x2, packed['pe2'], *weights, packed['attn_bias'])
    return out.reshape(B, T, N, C)


# ----------------------- one-time parameter packing --------------------------

def pack_params(layer_params, pe_tc, num_nodes):
    """Load-time repack: stack layers along a leading axis and expand the conv
    weights to node-block-diagonal 2-D matrices so the kernel runs entirely on
    (T*N, C) tiles in native (B, T, N, C) row order (rows r = t*N + n)."""
    K, T, _ = np.asarray(layer_params[0]['wq']).shape
    C = np.asarray(layer_params[0]['wv']).shape[0]
    N = num_nodes
    R = T * N
    eye = np.eye(N, dtype=np.float32)

    def conv_big(w):                       # (3, T, T) -> (R, 3R)
        w = np.asarray(w, np.float32)
        return np.einsum('kot,nm->onktm', w, eye).reshape(R, K * R)

    def rows_big(b):                       # (T, 1) -> (R, 1)
        return np.repeat(np.asarray(b, np.float32), N, axis=0)

    packed = {
        'wqb': np.stack([conv_big(p['wq']) for p in layer_params]),
        'bqb': np.stack([rows_big(p['bq']) for p in layer_params]),
        'wkb': np.stack([conv_big(p['wk']) for p in layer_params]),
        'bkb': np.stack([rows_big(p['bk']) for p in layer_params]),
    }
    for name in ['wv', 'bv', 'g1', 'be1', 'fw1', 'fb1', 'fw2', 'fb2', 'g2', 'be2']:
        packed[name] = np.stack([np.asarray(p[name], np.float32)
                                 for p in layer_params])

    packed['pe2'] = np.repeat(np.asarray(pe_tc, np.float32), N, axis=0)   # (R, C)
    r = np.arange(R)
    same_node = (r[:, None] % N) == (r[None, :] % N)
    packed['attn_bias'] = np.where(same_node, 0.0, -1e30).astype(np.float32)
    return {k: jnp.asarray(v) for k, v in packed.items()}


# --------------------------- params / PE --------------------------------------

def make_pe(max_len, C):
    position = np.arange(max_len, dtype=np.float32)[:, None]
    div_term = np.exp(np.arange(0, C, 2, dtype=np.float32)
                      * -(math.log(10000.0) / C))
    pe = np.zeros((max_len, C), np.float32)
    pe[:, 0::2] = np.sin(position * div_term)
    pe[:, 1::2] = np.cos(position * div_term)
    return jnp.asarray(pe)


def init_transform_params(key, T, C):
    ks = jax.random.split(key, 10)

    def u(k, shape, fan_in):
        bound = 1.0 / math.sqrt(fan_in)
        return jax.random.uniform(k, shape, jnp.float32, -bound, bound)

    p = {}
    p['wq'] = u(ks[0], (3, T, T), T * 3)   # conv1 weight stored (k, out, in)
    p['bq'] = u(ks[1], (T, 1), T * 3)
    p['wk'] = u(ks[2], (3, T, T), T * 3)   # conv2
    p['bk'] = u(ks[3], (T, 1), T * 3)
    p['wv'] = u(ks[4], (C, C), C)          # vff Linear weight stored (in, out)
    p['bv'] = u(ks[5], (1, C), C)
    p['g1'] = jnp.ones((1, C), jnp.float32)
    p['be1'] = jnp.zeros((1, C), jnp.float32)
    p['fw1'] = u(ks[6], (C, C), C)         # ff Linear 1 (in, out)
    p['fb1'] = u(ks[7], (1, C), C)
    p['fw2'] = u(ks[8], (C, C), C)         # ff Linear 2 (in, out)
    p['fb2'] = u(ks[9], (1, C), C)
    p['g2'] = jnp.ones((1, C), jnp.float32)
    p['be2'] = jnp.zeros((1, C), jnp.float32)
    return p


# --------------------------- pure-JAX reference ------------------------------

def transform_ref(x, p):
    # x: (B, T, N, C), mirrors the PyTorch Transform.forward exactly.
    B, T, N, C = x.shape
    W = C - 2

    def conv(w, b):  # w: (3, out, in), b: (T, 1)
        out = sum(jnp.einsum('oi,binw->bonw', w[k], x[:, :, :, k:k + W])
                  for k in range(3))
        return out + b.reshape(1, T, 1, 1)

    q = conv(p['wq'], p['bq'])
    k = conv(p['wk'], p['bk'])
    v = x @ p['wv'] + p['bv'][0]
    q = jnp.transpose(q, (0, 2, 1, 3))
    k = jnp.transpose(k, (0, 2, 3, 1))
    v = jnp.transpose(v, (0, 2, 1, 3))
    A = jax.nn.softmax(q @ k / (C ** 0.5), axis=-1)
    val = A @ v
    val = jnp.transpose(val, (0, 2, 1, 3)) + x

    def ln(z, g, b):
        mu = z.mean(-1, keepdims=True)
        var = ((z - mu) ** 2).mean(-1, keepdims=True)
        return (z - mu) / jnp.sqrt(var + 1e-5) * g[0] + b[0]

    val = ln(val, p['g1'], p['be1'])
    h = jnp.maximum(val @ p['fw1'] + p['fb1'][0], 0.0)
    h = h @ p['fw2'] + p['fb2'][0]
    return ln(h + val, p['g2'], p['be2'])


def transformer_layer_ref(x, pe, layer_params):
    x = x + pe[None, :, None, :]
    for p in layer_params:
        x = transform_ref(x, p)
    return x


# ------------------------------- main ----------------------------------------

if __name__ == "__main__":
    # B=2 batch, T=12 time steps (fixed by Conv2d(12,12,...) / PE), N=8 nodes,
    # C=32 hidden features, 2 stacked Transform layers.
    B, T, N, C = 2, 12, 8, 32
    num_layer = 2
    # TODO(synk): the stateful score_his path (returning the softmaxed scores and
    # adding a persistent history on later calls) is not implemented; only the
    # default score_his=None forward path is modeled.

    key = jax.random.PRNGKey(0)
    kx, kp = jax.random.split(key)
    x = jax.random.normal(kx, (B, T, N, C), jnp.float32)
    pe = make_pe(12, C)
    params = [init_transform_params(k, T, C)
              for k in jax.random.split(kp, num_layer)]
    packed = pack_params(params, pe, N)

    fwd = jax.jit(transformer_layer_forward)
    out = jax.block_until_ready(fwd(x, packed))
    assert out.shape == (B, T, N, C)

    with jax.default_matmul_precision("float32"):
        ref = jax.block_until_ready(transformer_layer_ref(x, pe, params))
    np.testing.assert_allclose(np.asarray(out), np.asarray(ref),
                               rtol=2e-3, atol=2e-3)
    print("KERNEL_OK")
</pallas_src>

<mosaic_0001>
module attributes {stable_mosaic.version = 11 : i64} {
  func.func @fused_transformer_kernel(%arg0: i32, %arg1: memref<1x96x32xf32, #tpu.memory_space<vmem>>, %arg2: memref<96x32xf32, #tpu.memory_space<vmem>>, %arg3: memref<2x96x288xf32, #tpu.memory_space<vmem>>, %arg4: memref<2x96x1xf32, #tpu.memory_space<vmem>>, %arg5: memref<2x96x288xf32, #tpu.memory_space<vmem>>, %arg6: memref<2x96x1xf32, #tpu.memory_space<vmem>>, %arg7: memref<2x32x32xf32, #tpu.memory_space<vmem>>, %arg8: memref<2x1x32xf32, #tpu.memory_space<vmem>>, %arg9: memref<2x1x32xf32, #tpu.memory_space<vmem>>, %arg10: memref<2x1x32xf32, #tpu.memory_space<vmem>>, %arg11: memref<2x32x32xf32, #tpu.memory_space<vmem>>, %arg12: memref<2x1x32xf32, #tpu.memory_space<vmem>>, %arg13: memref<2x32x32xf32, #tpu.memory_space<vmem>>, %arg14: memref<2x1x32xf32, #tpu.memory_space<vmem>>, %arg15: memref<2x1x32xf32, #tpu.memory_space<vmem>>, %arg16: memref<2x1x32xf32, #tpu.memory_space<vmem>>, %arg17: memref<96x96xf32, #tpu.memory_space<vmem>>, %arg18: memref<1x96x32xf32, #tpu.memory_space<vmem>>) attributes {dimension_semantics = [#tpu.dimension_semantics<parallel>], iteration_bounds = array<i64: 2>, scalar_prefetch = 0 : i64, scratch_operands = 0 : i64, tpu.core_type = #tpu.core_type<tc>, window_params = [{transform_indices = @transform_0, window_bounds = array<i64: 1, 96, 32>}, {pipeline_mode = #tpu.pipeline_mode<synchronous>, transform_indices = @transform_1, window_bounds = array<i64: 96, 32>}, {pipeline_mode = #tpu.pipeline_mode<synchronous>, transform_indices = @transform_2, window_bounds = array<i64: 2, 96, 288>}, {pipeline_mode = #tpu.pipeline_mode<synchronous>, transform_indices = @transform_3, window_bounds = array<i64: 2, 96, 1>}, {pipeline_mode = #tpu.pipeline_mode<synchronous>, transform_indices = @transform_4, window_bounds = array<i64: 2, 96, 288>}, {pipeline_mode = #tpu.pipeline_mode<synchronous>, transform_indices = @transform_5, window_bounds = array<i64: 2, 96, 1>}, {pipeline_mode = #tpu.pipeline_mode<synchronous>, transform_indices = @transform_6, window_bounds = array<i64: 2, 32, 32>}, {pipeline_mode = #tpu.pipeline_mode<synchronous>, transform_indices = @transform_7, window_bounds = array<i64: 2, 1, 32>}, {pipeline_mode = #tpu.pipeline_mode<synchronous>, transform_indices = @transform_8, window_bounds = array<i64: 2, 1, 32>}, {pipeline_mode = #tpu.pipeline_mode<synchronous>, transform_indices = @transform_9, window_bounds = array<i64: 2, 1, 32>}, {pipeline_mode = #tpu.pipeline_mode<synchronous>, transform_indices = @transform_10, window_bounds = array<i64: 2, 32, 32>}, {pipeline_mode = #tpu.pipeline_mode<synchronous>, transform_indices = @transform_11, window_bounds = array<i64: 2, 1, 32>}, {pipeline_mode = #tpu.pipeline_mode<synchronous>, transform_indices = @transform_12, window_bounds = array<i64: 2, 32, 32>}, {pipeline_mode = #tpu.pipeline_mode<synchronous>, transform_indices = @transform_13, window_bounds = array<i64: 2, 1, 32>}, {pipeline_mode = #tpu.pipeline_mode<synchronous>, transform_indices = @transform_14, window_bounds = array<i64: 2, 1, 32>}, {pipeline_mode = #tpu.pipeline_mode<synchronous>, transform_indices = @transform_15, window_bounds = array<i64: 2, 1, 32>}, {pipeline_mode = #tpu.pipeline_mode<synchronous>, transform_indices = @transform_16, window_bounds = array<i64: 96, 96>}, {transform_indices = @transform_17, window_bounds = array<i64: 1, 96, 32>}]} {
    %c0 = arith.constant 0 : index
    %c0_0 = arith.constant 0 : index
    %c0_1 = arith.constant 0 : index
    %0 = vector.load %arg1[%c0, %c0_0, %c0_1] : memref<1x96x32xf32, #tpu.memory_space<vmem>>, vector<1x96x32xf32>
    %1 = vector.shape_cast %0 : vector<1x96x32xf32> to vector<96x32xf32>
    %c0_2 = arith.constant 0 : index
    %c0_3 = arith.constant 0 : index
    %2 = vector.load %arg2[%c0_2, %c0_3] : memref<96x32xf32, #tpu.memory_space<vmem>>, vector<96x32xf32>
    %3 = arith.addf %1, %2 : vector<96x32xf32>
    %c0_4 = arith.constant 0 : index
    %c0_5 = arith.constant 0 : index
    %4 = vector.load %arg17[%c0_4, %c0_5] : memref<96x96xf32, #tpu.memory_space<vmem>>, vector<96x96xf32>
    %5 = vector.extract_strided_slice %3 {offsets = [0, 0], sizes = [96, 30], strides = [1, 1]} : vector<96x32xf32> to vector<96x30xf32>
    %6 = vector.extract_strided_slice %3 {offsets = [0, 1], sizes = [96, 30], strides = [1, 1]} : vector<96x32xf32> to vector<96x30xf32>
    %7 = vector.extract_strided_slice %3 {offsets = [0, 2], sizes = [96, 30], strides = [1, 1]} : vector<96x32xf32> to vector<96x30xf32>
    %8 = tpu.concatenate %5, %6, %7 in 0 : vector<96x30xf32>, vector<96x30xf32>, vector<96x30xf32> -> vector<288x30xf32>
    %c0_6 = arith.constant 0 : index
    %c0_7 = arith.constant 0 : index
    %c0_8 = arith.constant 0 : index
    %9 = vector.load %arg3[%c0_6, %c0_7, %c0_8] : memref<2x96x288xf32, #tpu.memory_space<vmem>>, vector<1x96x288xf32>
    %10 = vector.shape_cast %9 : vector<1x96x288xf32> to vector<96x288xf32>
    %cst = arith.constant dense<0.000000e+00> : vector<96x30xf32>
    %11 = tpu.matmul %10, %8, %cst {dimension_numbers = #tpu.dot_dimension_numbers<[1], [0], [0], [1], [0, 0, 1, 1], [], []>} : vector<96x288xf32>, vector<288x30xf32>, vector<96x30xf32> -> vector<96x30xf32>
    %c0_9 = arith.constant 0 : index
    %c0_10 = arith.constant 0 : index
    %c0_11 = arith.constant 0 : index
    %12 = vector.load %arg4[%c0_9, %c0_10, %c0_11] : memref<2x96x1xf32, #tpu.memory_space<vmem>>, vector<1x96x1xf32>
    %13 = vector.shape_cast %12 : vector<1x96x1xf32> to vector<96x1xf32>
    %14 = vector.broadcast %13 : vector<96x1xf32> to vector<96x30xf32>
    %15 = arith.addf %11, %14 : vector<96x30xf32>
    %cst_12 = arith.constant 0.176776692 : f32
    %16 = vector.broadcast %cst_12 : f32 to vector<96x30xf32>
    %17 = arith.mulf %15, %16 : vector<96x30xf32>
    %c0_13 = arith.constant 0 : index
    %c0_14 = arith.constant 0 : index
    %c0_15 = arith.constant 0 : index
    %18 = vector.load %arg5[%c0_13, %c0_14, %c0_15] : memref<2x96x288xf32, #tpu.memory_space<vmem>>, vector<1x96x288xf32>
    %19 = vector.shape_cast %18 : vector<1x96x288xf32> to vector<96x288xf32>
    %cst_16 = arith.constant dense<0.000000e+00> : vector<96x30xf32>
    %20 = tpu.matmul %19, %8, %cst_16 {dimension_numbers = #tpu.dot_dimension_numbers<[1], [0], [0], [1], [0, 0, 1, 1], [], []>} : vector<96x288xf32>, vector<288x30xf32>, vector<96x30xf32> -> vector<96x30xf32>
    %c0_17 = arith.constant 0 : index
    %c0_18 = arith.constant 0 : index
    %c0_19 = arith.constant 0 : index
    %21 = vector.load %arg6[%c0_17, %c0_18, %c0_19] : memref<2x96x1xf32, #tpu.memory_space<vmem>>, vector<1x96x1xf32>
    %22 = vector.shape_cast %21 : vector<1x96x1xf32> to vector<96x1xf32>
    %23 = vector.broadcast %22 : vector<96x1xf32> to vector<96x30xf32>
    %24 = arith.addf %20, %23 : vector<96x30xf32>
    %c0_20 = arith.constant 0 : index
    %c0_21 = arith.constant 0 : index
    %c0_22 = arith.constant 0 : index
    %25 = vector.load %arg7[%c0_20, %c0_21, %c0_22] : memref<2x32x32xf32, #tpu.memory_space<vmem>>, vector<1x32x32xf32>
    %26 = vector.shape_cast %25 : vector<1x32x32xf32> to vector<32x32xf32>
    %cst_23 = arith.constant dense<0.000000e+00> : vector<96x32xf32>
    %27 = tpu.matmul %3, %26, %cst_23 {dimension_numbers = #tpu.dot_dimension_numbers<[1], [0], [0], [1], [0, 0, 1, 1], [], []>} : vector<96x32xf32>, vector<32x32xf32>, vector<96x32xf32> -> vector<96x32xf32>
    %c0_24 = arith.constant 0 : index
    %c0_25 = arith.constant 0 : index
    %c0_26 = arith.constant 0 : index
    %28 = vector.load %arg8[%c0_24, %c0_25, %c0_26] : memref<2x1x32xf32, #tpu.memory_space<vmem>>, vector<1x1x32xf32>
    %29 = vector.shape_cast %28 : vector<1x1x32xf32> to vector<1x32xf32>
    %30 = vector.broadcast %29 : vector<1x32xf32> to vector<96x32xf32>
    %31 = arith.addf %27, %30 : vector<96x32xf32>
    %cst_27 = arith.constant dense<0.000000e+00> : vector<96x96xf32>
    %32 = tpu.matmul %17, %24, %cst_27 {dimension_numbers = #tpu.dot_dimension_numbers<[1], [1], [0], [0], [0, 0, 1, 0], [], []>} : vector<96x30xf32>, vector<96x30xf32>, vector<96x96xf32> -> vector<96x96xf32>
    %33 = arith.addf %32, %4 : vector<96x96xf32>
    %cst_28 = arith.constant dense<0xFF800000> : vector<96xf32>
    %34 = vector.multi_reduction <maximumf>, %33, %cst_28 [1] : vector<96x96xf32> to vector<96xf32>
    %35 = vector.shape_cast %34 : vector<96xf32> to vector<96x1xf32>
    %36 = vector.broadcast %35 : vector<96x1xf32> to vector<96x96xf32>
    %37 = arith.subf %33, %36 : vector<96x96xf32>
    %38 = math.exp %37 : vector<96x96xf32>
    %cst_29 = arith.constant dense<0.000000e+00> : vector<96xf32>
    %39 = vector.multi_reduction <add>, %38, %cst_29 [1] : vector<96x96xf32> to vector<96xf32>
    %40 = vector.shape_cast %39 : vector<96xf32> to vector<96x1xf32>
    %41 = tpu.reciprocal %40 : vector<96x1xf32> -> vector<96x1xf32>
    %42 = vector.broadcast %41 : vector<96x1xf32> to vector<96x96xf32>
    %43 = arith.mulf %38, %42 : vector<96x96xf32>
    %cst_30 = arith.constant dense<0.000000e+00> : vector<96x32xf32>
    %44 = tpu.matmul %43, %31, %cst_30 {dimension_numbers = #tpu.dot_dimension_numbers<[1], [0], [0], [1], [0, 0, 1, 1], [], []>} : vector<96x96xf32>, vector<96x32xf32>, vector<96x32xf32> -> vector<96x32xf32>
    %45 = arith.addf %44, %3 : vector<96x32xf32>
    %c0_31 = arith.constant 0 : index
    %c0_32 = arith.constant 0 : index
    %c0_33 = arith.constant 0 : index
    %46 = vector.load %arg9[%c0_31, %c0_32, %c0_33] : memref<2x1x32xf32, #tpu.memory_space<vmem>>, vector<1x1x32xf32>
    %47 = vector.shape_cast %46 : vector<1x1x32xf32> to vector<1x32xf32>
    %c0_34 = arith.constant 0 : index
    %c0_35 = arith.constant 0 : index
    %c0_36 = arith.constant 0 : index
    %48 = vector.load %arg10[%c0_34, %c0_35, %c0_36] : memref<2x1x32xf32, #tpu.memory_space<vmem>>, vector<1x1x32xf32>
    %49 = vector.shape_cast %48 : vector<1x1x32xf32> to vector<1x32xf32>
    %cst_37 = arith.constant dense<0.000000e+00> : vector<96xf32>
    %50 = vector.multi_reduction <add>, %45, %cst_37 [1] : vector<96x32xf32> to vector<96xf32>
    %51 = vector.shape_cast %50 : vector<96xf32> to vector<96x1xf32>
    %cst_38 = arith.constant 3.200000e+01 : f32
    %52 = vector.broadcast %cst_38 : f32 to vector<96x1xf32>
    %53 = arith.divf %51, %52 : vector<96x1xf32>
    %54 = vector.broadcast %53 : vector<96x1xf32> to vector<96x32xf32>
    %55 = arith.subf %45, %54 : vector<96x32xf32>
    %56 = arith.mulf %55, %55 : vector<96x32xf32>
    %cst_39 = arith.constant dense<0.000000e+00> : vector<96xf32>
    %57 = vector.multi_reduction <add>, %56, %cst_39 [1] : vector<96x32xf32> to vector<96xf32>
    %58 = vector.shape_cast %57 : vector<96xf32> to vector<96x1xf32>
    %cst_40 = arith.constant 3.200000e+01 : f32
    %59 = vector.broadcast %cst_40 : f32 to vector<96x1xf32>
    %60 = arith.divf %58, %59 : vector<96x1xf32>
    %61 = vector.broadcast %53 : vector<96x1xf32> to vector<96x32xf32>
    %62 = arith.subf %45, %61 : vector<96x32xf32>
    %cst_41 = arith.constant 9.99999974E-6 : f32
    %63 = vector.broadcast %cst_41 : f32 to vector<96x1xf32>
    %64 = arith.addf %60, %63 : vector<96x1xf32>
    %65 = math.rsqrt %64 : vector<96x1xf32>
    %66 = vector.broadcast %65 : vector<96x1xf32> to vector<96x32xf32>
    %67 = arith.mulf %62, %66 : vector<96x32xf32>
    %68 = vector.broadcast %47 : vector<1x32xf32> to vector<96x32xf32>
    %69 = arith.mulf %67, %68 : vector<96x32xf32>
    %70 = vector.broadcast %49 : vector<1x32xf32> to vector<96x32xf32>
    %71 = arith.addf %69, %70 : vector<96x32xf32>
    %c0_42 = arith.constant 0 : index
    %c0_43 = arith.constant 0 : index
    %c0_44 = arith.constant 0 : index
    %72 = vector.load %arg11[%c0_42, %c0_43, %c0_44] : memref<2x32x32xf32, #tpu.memory_space<vmem>>, vector<1x32x32xf32>
    %73 = vector.shape_cast %72 : vector<1x32x32xf32> to vector<32x32xf32>
    %cst_45 = arith.constant dense<0.000000e+00> : vector<96x32xf32>
    %74 = tpu.matmul %71, %73, %cst_45 {dimension_numbers = #tpu.dot_dimension_numbers<[1], [0], [0], [1], [0, 0, 1, 1], [], []>} : vector<96x32xf32>, vector<32x32xf32>, vector<96x32xf32> -> vector<96x32xf32>
    %c0_46 = arith.constant 0 : index
    %c0_47 = arith.constant 0 : index
    %c0_48 = arith.constant 0 : index
    %75 = vector.load %arg12[%c0_46, %c0_47, %c0_48] : memref<2x1x32xf32, #tpu.memory_space<vmem>>, vector<1x1x32xf32>
    %76 = vector.shape_cast %75 : vector<1x1x32xf32> to vector<1x32xf32>
    %77 = vector.broadcast %76 : vector<1x32xf32> to vector<96x32xf32>
    %78 = arith.addf %74, %77 : vector<96x32xf32>
    %cst_49 = arith.constant 0.000000e+00 : f32
    %79 = vector.broadcast %cst_49 : f32 to vector<96x32xf32>
    %80 = arith.maximumf %78, %79 : vector<96x32xf32>
    %c0_50 = arith.constant 0 : index
    %c0_51 = arith.constant 0 : index
    %c0_52 = arith.constant 0 : index
    %81 = vector.load %arg13[%c0_50, %c0_51, %c0_52] : memref<2x32x32xf32, #tpu.memory_space<vmem>>, vector<1x32x32xf32>
    %82 = vector.shape_cast %81 : vector<1x32x32xf32> to vector<32x32xf32>
    %cst_53 = arith.constant dense<0.000000e+00> : vector<96x32xf32>
    %83 = tpu.matmul %80, %82, %cst_53 {dimension_numbers = #tpu.dot_dimension_numbers<[1], [0], [0], [1], [0, 0, 1, 1], [], []>} : vector<96x32xf32>, vector<32x32xf32>, vector<96x32xf32> -> vector<96x32xf32>
    %c0_54 = arith.constant 0 : index
    %c0_55 = arith.constant 0 : index
    %c0_56 = arith.constant 0 : index
    %84 = vector.load %arg14[%c0_54, %c0_55, %c0_56] : memref<2x1x32xf32, #tpu.memory_space<vmem>>, vector<1x1x32xf32>
    %85 = vector.shape_cast %84 : vector<1x1x32xf32> to vector<1x32xf32>
    %86 = vector.broadcast %85 : vector<1x32xf32> to vector<96x32xf32>
    %87 = arith.addf %83, %86 : vector<96x32xf32>
    %88 = arith.addf %87, %71 : vector<96x32xf32>
    %c0_57 = arith.constant 0 : index
    %c0_58 = arith.constant 0 : index
    %c0_59 = arith.constant 0 : index
    %89 = vector.load %arg15[%c0_57, %c0_58, %c0_59] : memref<2x1x32xf32, #tpu.memory_space<vmem>>, vector<1x1x32xf32>
    %90 = vector.shape_cast %89 : vector<1x1x32xf32> to vector<1x32xf32>
    %c0_60 = arith.constant 0 : index
    %c0_61 = arith.constant 0 : index
    %c0_62 = arith.constant 0 : index
    %91 = vector.load %arg16[%c0_60, %c0_61, %c0_62] : memref<2x1x32xf32, #tpu.memory_space<vmem>>, vector<1x1x32xf32>
    %92 = vector.shape_cast %91 : vector<1x1x32xf32> to vector<1x32xf32>
    %cst_63 = arith.constant dense<0.000000e+00> : vector<96xf32>
    %93 = vector.multi_reduction <add>, %88, %cst_63 [1] : vector<96x32xf32> to vector<96xf32>
    %94 = vector.shape_cast %93 : vector<96xf32> to vector<96x1xf32>
    %cst_64 = arith.constant 3.200000e+01 : f32
    %95 = vector.broadcast %cst_64 : f32 to vector<96x1xf32>
    %96 = arith.divf %94, %95 : vector<96x1xf32>
    %97 = vector.broadcast %96 : vector<96x1xf32> to vector<96x32xf32>
    %98 = arith.subf %88, %97 : vector<96x32xf32>
    %99 = arith.mulf %98, %98 : vector<96x32xf32>
    %cst_65 = arith.constant dense<0.000000e+00> : vector<96xf32>
    %100 = vector.multi_reduction <add>, %99, %cst_65 [1] : vector<96x32xf32> to vector<96xf32>
    %101 = vector.shape_cast %100 : vector<96xf32> to vector<96x1xf32>
    %cst_66 = arith.constant 3.200000e+01 : f32
    %102 = vector.broadcast %cst_66 : f32 to vector<96x1xf32>
    %103 = arith.divf %101, %102 : vector<96x1xf32>
    %104 = vector.broadcast %96 : vector<96x1xf32> to vector<96x32xf32>
    %105 = arith.subf %88, %104 : vector<96x32xf32>
    %cst_67 = arith.constant 9.99999974E-6 : f32
    %106 = vector.broadcast %cst_67 : f32 to vector<96x1xf32>
    %107 = arith.addf %103, %106 : vector<96x1xf32>
    %108 = math.rsqrt %107 : vector<96x1xf32>
    %109 = vector.broadcast %108 : vector<96x1xf32> to vector<96x32xf32>
    %110 = arith.mulf %105, %109 : vector<96x32xf32>
    %111 = vector.broadcast %90 : vector<1x32xf32> to vector<96x32xf32>
    %112 = arith.mulf %110, %111 : vector<96x32xf32>
    %113 = vector.broadcast %92 : vector<1x32xf32> to vector<96x32xf32>
    %114 = arith.addf %112, %113 : vector<96x32xf32>
    %115 = vector.extract_strided_slice %114 {offsets = [0, 0], sizes = [96, 30], strides = [1, 1]} : vector<96x32xf32> to vector<96x30xf32>
    %116 = vector.extract_strided_slice %114 {offsets = [0, 1], sizes = [96, 30], strides = [1, 1]} : vector<96x32xf32> to vector<96x30xf32>
    %117 = vector.extract_strided_slice %114 {offsets = [0, 2], sizes = [96, 30], strides = [1, 1]} : vector<96x32xf32> to vector<96x30xf32>
    %118 = tpu.concatenate %115, %116, %117 in 0 : vector<96x30xf32>, vector<96x30xf32>, vector<96x30xf32> -> vector<288x30xf32>
    %c1 = arith.constant 1 : index
    %c0_68 = arith.constant 0 : index
    %c0_69 = arith.constant 0 : index
    %119 = vector.load %arg3[%c1, %c0_68, %c0_69] : memref<2x96x288xf32, #tpu.memory_space<vmem>>, vector<1x96x288xf32>
    %120 = vector.shape_cast %119 : vector<1x96x288xf32> to vector<96x288xf32>
    %cst_70 = arith.constant dense<0.000000e+00> : vector<96x30xf32>
    %121 = tpu.matmul %120, %118, %cst_70 {dimension_numbers = #tpu.dot_dimension_numbers<[1], [0], [0], [1], [0, 0, 1, 1], [], []>} : vector<96x288xf32>, vector<288x30xf32>, vector<96x30xf32> -> vector<96x30xf32>
    %c1_71 = arith.constant 1 : index
    %c0_72 = arith.constant 0 : index
    %c0_73 = arith.constant 0 : index
    %122 = vector.load %arg4[%c1_71, %c0_72, %c0_73] : memref<2x96x1xf32, #tpu.memory_space<vmem>>, vector<1x96x1xf32>
    %123 = vector.shape_cast %122 : vector<1x96x1xf32> to vector<96x1xf32>
    %124 = vector.broadcast %123 : vector<96x1xf32> to vector<96x30xf32>
    %125 = arith.addf %121, %124 : vector<96x30xf32>
    %cst_74 = arith.constant 0.176776692 : f32
    %126 = vector.broadcast %cst_74 : f32 to vector<96x30xf32>
    %127 = arith.mulf %125, %126 : vector<96x30xf32>
    %c1_75 = arith.constant 1 : index
    %c0_76 = arith.constant 0 : index
    %c0_77 = arith.constant 0 : index
    %128 = vector.load %arg5[%c1_75, %c0_76, %c0_77] : memref<2x96x288xf32, #tpu.memory_space<vmem>>, vector<1x96x288xf32>
    %129 = vector.shape_cast %128 : vector<1x96x288xf32> to vector<96x288xf32>
    %cst_78 = arith.constant dense<0.000000e+00> : vector<96x30xf32>
    %130 = tpu.matmul %129, %118, %cst_78 {dimension_numbers = #tpu.dot_dimension_numbers<[1], [0], [0], [1], [0, 0, 1, 1], [], []>} : vector<96x288xf32>, vector<288x30xf32>, vector<96x30xf32> -> vector<96x30xf32>
    %c1_79 = arith.constant 1 : index
    %c0_80 = arith.constant 0 : index
    %c0_81 = arith.constant 0 : index
    %131 = vector.load %arg6[%c1_79, %c0_80, %c0_81] : memref<2x96x1xf32, #tpu.memory_space<vmem>>, vector<1x96x1xf32>
    %132 = vector.shape_cast %131 : vector<1x96x1xf32> to vector<96x1xf32>
    %133 = vector.broadcast %132 : vector<96x1xf32> to vector<96x30xf32>
    %134 = arith.addf %130, %133 : vector<96x30xf32>
    %c1_82 = arith.constant 1 : index
    %c0_83 = arith.constant 0 : index
    %c0_84 = arith.constant 0 : index
    %135 = vector.load %arg7[%c1_82, %c0_83, %c0_84] : memref<2x32x32xf32, #tpu.memory_space<vmem>>, vector<1x32x32xf32>
    %136 = vector.shape_cast %135 : vector<1x32x32xf32> to vector<32x32xf32>
    %cst_85 = arith.constant dense<0.000000e+00> : vector<96x32xf32>
    %137 = tpu.matmul %114, %136, %cst_85 {dimension_numbers = #tpu.dot_dimension_numbers<[1], [0], [0], [1], [0, 0, 1, 1], [], []>} : vector<96x32xf32>, vector<32x32xf32>, vector<96x32xf32> -> vector<96x32xf32>
    %c1_86 = arith.constant 1 : index
    %c0_87 = arith.constant 0 : index
    %c0_88 = arith.constant 0 : index
    %138 = vector.load %arg8[%c1_86, %c0_87, %c0_88] : memref<2x1x32xf32, #tpu.memory_space<vmem>>, vector<1x1x32xf32>
    %139 = vector.shape_cast %138 : vector<1x1x32xf32> to vector<1x32xf32>
    %140 = vector.broadcast %139 : vector<1x32xf32> to vector<96x32xf32>
    %141 = arith.addf %137, %140 : vector<96x32xf32>
    %cst_89 = arith.constant dense<0.000000e+00> : vector<96x96xf32>
    %142 = tpu.matmul %127, %134, %cst_89 {dimension_numbers = #tpu.dot_dimension_numbers<[1], [1], [0], [0], [0, 0, 1, 0], [], []>} : vector<96x30xf32>, vector<96x30xf32>, vector<96x96xf32> -> vector<96x96xf32>
    %143 = arith.addf %142, %4 : vector<96x96xf32>
    %cst_90 = arith.constant dense<0xFF800000> : vector<96xf32>
    %144 = vector.multi_reduction <maximumf>, %143, %cst_90 [1] : vector<96x96xf32> to vector<96xf32>
    %145 = vector.shape_cast %144 : vector<96xf32> to vector<96x1xf32>
    %146 = vector.broadcast %145 : vector<96x1xf32> to vector<96x96xf32>
    %147 = arith.subf %143, %146 : vector<96x96xf32>
    %148 = math.exp %147 : vector<96x96xf32>
    %cst_91 = arith.constant dense<0.000000e+00> : vector<96xf32>
    %149 = vector.multi_reduction <add>, %148, %cst_91 [1] : vector<96x96xf32> to vector<96xf32>
    %150 = vector.shape_cast %149 : vector<96xf32> to vector<96x1xf32>
    %151 = tpu.reciprocal %150 : vector<96x1xf32> -> vector<96x1xf32>
    %152 = vector.broadcast %151 : vector<96x1xf32> to vector<96x96xf32>
    %153 = arith.mulf %148, %152 : vector<96x96xf32>
    %cst_92 = arith.constant dense<0.000000e+00> : vector<96x32xf32>
    %154 = tpu.matmul %153, %141, %cst_92 {dimension_numbers = #tpu.dot_dimension_numbers<[1], [0], [0], [1], [0, 0, 1, 1], [], []>} : vector<96x96xf32>, vector<96x32xf32>, vector<96x32xf32> -> vector<96x32xf32>
    %155 = arith.addf %154, %114 : vector<96x32xf32>
    %c1_93 = arith.constant 1 : index
    %c0_94 = arith.constant 0 : index
    %c0_95 = arith.constant 0 : index
    %156 = vector.load %arg9[%c1_93, %c0_94, %c0_95] : memref<2x1x32xf32, #tpu.memory_space<vmem>>, vector<1x1x32xf32>
    %157 = vector.shape_cast %156 : vector<1x1x32xf32> to vector<1x32xf32>
    %c1_96 = arith.constant 1 : index
    %c0_97 = arith.constant 0 : index
    %c0_98 = arith.constant 0 : index
    %158 = vector.load %arg10[%c1_96, %c0_97, %c0_98] : memref<2x1x32xf32, #tpu.memory_space<vmem>>, vector<1x1x32xf32>
    %159 = vector.shape_cast %158 : vector<1x1x32xf32> to vector<1x32xf32>
    %cst_99 = arith.constant dense<0.000000e+00> : vector<96xf32>
    %160 = vector.multi_reduction <add>, %155, %cst_99 [1] : vector<96x32xf32> to vector<96xf32>
    %161 = vector.shape_cast %160 : vector<96xf32> to vector<96x1xf32>
    %cst_100 = arith.constant 3.200000e+01 : f32
    %162 = vector.broadcast %cst_100 : f32 to vector<96x1xf32>
    %163 = arith.divf %161, %162 : vector<96x1xf32>
    %164 = vector.broadcast %163 : vector<96x1xf32> to vector<96x32xf32>
    %165 = arith.subf %155, %164 : vector<96x32xf32>
    %166 = arith.mulf %165, %165 : vector<96x32xf32>
    %cst_101 = arith.constant dense<0.000000e+00> : vector<96xf32>
    %167 = vector.multi_reduction <add>, %166, %cst_101 [1] : vector<96x32xf32> to vector<96xf32>
    %168 = vector.shape_cast %167 : vector<96xf32> to vector<96x1xf32>
    %cst_102 = arith.constant 3.200000e+01 : f32
    %169 = vector.broadcast %cst_102 : f32 to vector<96x1xf32>
    %170 = arith.divf %168, %169 : vector<96x1xf32>
    %171 = vector.broadcast %163 : vector<96x1xf32> to vector<96x32xf32>
    %172 = arith.subf %155, %171 : vector<96x32xf32>
    %cst_103 = arith.constant 9.99999974E-6 : f32
    %173 = vector.broadcast %cst_103 : f32 to vector<96x1xf32>
    %174 = arith.addf %170, %173 : vector<96x1xf32>
    %175 = math.rsqrt %174 : vector<96x1xf32>
    %176 = vector.broadcast %175 : vector<96x1xf32> to vector<96x32xf32>
    %177 = arith.mulf %172, %176 : vector<96x32xf32>
    %178 = vector.broadcast %157 : vector<1x32xf32> to vector<96x32xf32>
    %179 = arith.mulf %177, %178 : vector<96x32xf32>
    %180 = vector.broadcast %159 : vector<1x32xf32> to vector<96x32xf32>
    %181 = arith.addf %179, %180 : vector<96x32xf32>
    %c1_104 = arith.constant 1 : index
    %c0_105 = arith.constant 0 : index
    %c0_106 = arith.constant 0 : index
    %182 = vector.load %arg11[%c1_104, %c0_105, %c0_106] : memref<2x32x32xf32, #tpu.memory_space<vmem>>, vector<1x32x32xf32>
    %183 = vector.shape_cast %182 : vector<1x32x32xf32> to vector<32x32xf32>
    %cst_107 = arith.constant dense<0.000000e+00> : vector<96x32xf32>
    %184 = tpu.matmul %181, %183, %cst_107 {dimension_numbers = #tpu.dot_dimension_numbers<[1], [0], [0], [1], [0, 0, 1, 1], [], []>} : vector<96x32xf32>, vector<32x32xf32>, vector<96x32xf32> -> vector<96x32xf32>
    %c1_108 = arith.constant 1 : index
    %c0_109 = arith.constant 0 : index
    %c0_110 = arith.constant 0 : index
    %185 = vector.load %arg12[%c1_108, %c0_109, %c0_110] : memref<2x1x32xf32, #tpu.memory_space<vmem>>, vector<1x1x32xf32>
    %186 = vector.shape_cast %185 : vector<1x1x32xf32> to vector<1x32xf32>
    %187 = vector.broadcast %186 : vector<1x32xf32> to vector<96x32xf32>
    %188 = arith.addf %184, %187 : vector<96x32xf32>
    %cst_111 = arith.constant 0.000000e+00 : f32
    %189 = vector.broadcast %cst_111 : f32 to vector<96x32xf32>
    %190 = arith.maximumf %188, %189 : vector<96x32xf32>
    %c1_112 = arith.constant 1 : index
    %c0_113 = arith.constant 0 : index
    %c0_114 = arith.constant 0 : index
    %191 = vector.load %arg13[%c1_112, %c0_113, %c0_114] : memref<2x32x32xf32, #tpu.memory_space<vmem>>, vector<1x32x32xf32>
    %192 = vector.shape_cast %191 : vector<1x32x32xf32> to vector<32x32xf32>
    %cst_115 = arith.constant dense<0.000000e+00> : vector<96x32xf32>
    %193 = tpu.matmul %190, %192, %cst_115 {dimension_numbers = #tpu.dot_dimension_numbers<[1], [0], [0], [1], [0, 0, 1, 1], [], []>} : vector<96x32xf32>, vector<32x32xf32>, vector<96x32xf32> -> vector<96x32xf32>
    %c1_116 = arith.constant 1 : index
    %c0_117 = arith.constant 0 : index
    %c0_118 = arith.constant 0 : index
    %194 = vector.load %arg14[%c1_116, %c0_117, %c0_118] : memref<2x1x32xf32, #tpu.memory_space<vmem>>, vector<1x1x32xf32>
    %195 = vector.shape_cast %194 : vector<1x1x32xf32> to vector<1x32xf32>
    %196 = vector.broadcast %195 : vector<1x32xf32> to vector<96x32xf32>
    %197 = arith.addf %193, %196 : vector<96x32xf32>
    %198 = arith.addf %197, %181 : vector<96x32xf32>
    %c1_119 = arith.constant 1 : index
    %c0_120 = arith.constant 0 : index
    %c0_121 = arith.constant 0 : index
    %199 = vector.load %arg15[%c1_119, %c0_120, %c0_121] : memref<2x1x32xf32, #tpu.memory_space<vmem>>, vector<1x1x32xf32>
    %200 = vector.shape_cast %199 : vector<1x1x32xf32> to vector<1x32xf32>
    %c1_122 = arith.constant 1 : index
    %c0_123 = arith.constant 0 : index
    %c0_124 = arith.constant 0 : index
    %201 = vector.load %arg16[%c1_122, %c0_123, %c0_124] : memref<2x1x32xf32, #tpu.memory_space<vmem>>, vector<1x1x32xf32>
    %202 = vector.shape_cast %201 : vector<1x1x32xf32> to vector<1x32xf32>
    %cst_125 = arith.constant dense<0.000000e+00> : vector<96xf32>
    %203 = vector.multi_reduction <add>, %198, %cst_125 [1] : vector<96x32xf32> to vector<96xf32>
    %204 = vector.shape_cast %203 : vector<96xf32> to vector<96x1xf32>
    %cst_126 = arith.constant 3.200000e+01 : f32
    %205 = vector.broadcast %cst_126 : f32 to vector<96x1xf32>
    %206 = arith.divf %204, %205 : vector<96x1xf32>
    %207 = vector.broadcast %206 : vector<96x1xf32> to vector<96x32xf32>
    %208 = arith.subf %198, %207 : vector<96x32xf32>
    %209 = arith.mulf %208, %208 : vector<96x32xf32>
    %cst_127 = arith.constant dense<0.000000e+00> : vector<96xf32>
    %210 = vector.multi_reduction <add>, %209, %cst_127 [1] : vector<96x32xf32> to vector<96xf32>
    %211 = vector.shape_cast %210 : vector<96xf32> to vector<96x1xf32>
    %cst_128 = arith.constant 3.200000e+01 : f32
    %212 = vector.broadcast %cst_128 : f32 to vector<96x1xf32>
    %213 = arith.divf %211, %212 : vector<96x1xf32>
    %214 = vector.broadcast %206 : vector<96x1xf32> to vector<96x32xf32>
    %215 = arith.subf %198, %214 : vector<96x32xf32>
    %cst_129 = arith.constant 9.99999974E-6 : f32
    %216 = vector.broadcast %cst_129 : f32 to vector<96x1xf32>
    %217 = arith.addf %213, %216 : vector<96x1xf32>
    %218 = math.rsqrt %217 : vector<96x1xf32>
    %219 = vector.broadcast %218 : vector<96x1xf32> to vector<96x32xf32>
    %220 = arith.mulf %215, %219 : vector<96x32xf32>
    %221 = vector.broadcast %200 : vector<1x32xf32> to vector<96x32xf32>
    %222 = arith.mulf %220, %221 : vector<96x32xf32>
    %223 = vector.broadcast %202 : vector<1x32xf32> to vector<96x32xf32>
    %224 = arith.addf %222, %223 : vector<96x32xf32>
    %c0_130 = arith.constant 0 : index
    %c0_131 = arith.constant 0 : index
    %c0_132 = arith.constant 0 : index
    %225 = vector.load %arg18[%c0_130, %c0_131, %c0_132] : memref<1x96x32xf32, #tpu.memory_space<vmem>>, vector<1x96x32xf32>
    %226 = vector.shape_cast %225 : vector<1x96x32xf32> to vector<96x32xf32>
    %227 = vector.shape_cast %224 : vector<96x32xf32> to vector<1x96x32xf32>
    tpu.vector_store %arg18[%c0_130, %c0_131, %c0_132], %227 {strides = array<i32>} : memref<1x96x32xf32, #tpu.memory_space<vmem>>, vector<1x96x32xf32>,
    return
  }
  func.func @transform_0(%arg0: i32) -> (i32, i32, i32) {
    %c0_i32 = arith.constant 0 : i32
    %c0_i32_0 = arith.constant 0 : i32
    %c0_i32_1 = arith.constant 0 : i32
    return %arg0, %c0_i32, %c0_i32_0 : i32, i32, i32
  }
  func.func @transform_1(%arg0: i32) -> (i32, i32) {
    %c0_i32 = arith.constant 0 : i32
    %c0_i32_0 = arith.constant 0 : i32
    %c0_i32_1 = arith.constant 0 : i32
    return %c0_i32, %c0_i32_0 : i32, i32
  }
  func.func @transform_2(%arg0: i32) -> (i32, i32, i32) {
    %c0_i32 = arith.constant 0 : i32
    %c0_i32_0 = arith.constant 0 : i32
    %c0_i32_1 = arith.constant 0 : i32
    %c0_i32_2 = arith.constant 0 : i32
    return %c0_i32, %c0_i32_0, %c0_i32_1 : i32, i32, i32
  }
  func.func @transform_3(%arg0: i32) -> (i32, i32, i32) {
    %c0_i32 = arith.constant 0 : i32
    %c0_i32_0 = arith.constant 0 : i32
    %c0_i32_1 = arith.constant 0 : i32
    %c0_i32_2 = arith.constant 0 : i32
    return %c0_i32, %c0_i32_0, %c0_i32_1 : i32, i32, i32
  }
  func.func @transform_4(%arg0: i32) -> (i32, i32, i32) {
    %c0_i32 = arith.constant 0 : i32
    %c0_i32_0 = arith.constant 0 : i32
    %c0_i32_1 = arith.constant 0 : i32
    %c0_i32_2 = arith.constant 0 : i32
    return %c0_i32, %c0_i32_0, %c0_i32_1 : i32, i32, i32
  }
  func.func @transform_5(%arg0: i32) -> (i32, i32, i32) {
    %c0_i32 = arith.constant 0 : i32
    %c0_i32_0 = arith.constant 0 : i32
    %c0_i32_1 = arith.constant 0 : i32
    %c0_i32_2 = arith.constant 0 : i32
    return %c0_i32, %c0_i32_0, %c0_i32_1 : i32, i32, i32
  }
  func.func @transform_6(%arg0: i32) -> (i32, i32, i32) {
    %c0_i32 = arith.constant 0 : i32
    %c0_i32_0 = arith.constant 0 : i32
    %c0_i32_1 = arith.constant 0 : i32
    %c0_i32_2 = arith.constant 0 : i32
    return %c0_i32, %c0_i32_0, %c0_i32_1 : i32, i32, i32
  }
  func.func @transform_7(%arg0: i32) -> (i32, i32, i32) {
    %c0_i32 = arith.constant 0 : i32
    %c0_i32_0 = arith.constant 0 : i32
    %c0_i32_1 = arith.constant 0 : i32
    %c0_i32_2 = arith.constant 0 : i32
    return %c0_i32, %c0_i32_0, %c0_i32_1 : i32, i32, i32
  }
  func.func @transform_8(%arg0: i32) -> (i32, i32, i32) {
    %c0_i32 = arith.constant 0 : i32
    %c0_i32_0 = arith.constant 0 : i32
    %c0_i32_1 = arith.constant 0 : i32
    %c0_i32_2 = arith.constant 0 : i32
    return %c0_i32, %c0_i32_0, %c0_i32_1 : i32, i32, i32
  }
  func.func @transform_9(%arg0: i32) -> (i32, i32, i32) {
    %c0_i32 = arith.constant 0 : i32
    %c0_i32_0 = arith.constant 0 : i32
    %c0_i32_1 = arith.constant 0 : i32
    %c0_i32_2 = arith.constant 0 : i32
    return %c0_i32, %c0_i32_0, %c0_i32_1 : i32, i32, i32
  }
  func.func @transform_10(%arg0: i32) -> (i32, i32, i32) {
    %c0_i32 = arith.constant 0 : i32
    %c0_i32_0 = arith.constant 0 : i32
    %c0_i32_1 = arith.constant 0 : i32
    %c0_i32_2 = arith.constant 0 : i32
    return %c0_i32, %c0_i32_0, %c0_i32_1 : i32, i32, i32
  }
  func.func @transform_11(%arg0: i32) -> (i32, i32, i32) {
    %c0_i32 = arith.constant 0 : i32
    %c0_i32_0 = arith.constant 0 : i32
    %c0_i32_1 = arith.constant 0 : i32
    %c0_i32_2 = arith.constant 0 : i32
    return %c0_i32, %c0_i32_0, %c0_i32_1 : i32, i32, i32
  }
  func.func @transform_12(%arg0: i32) -> (i32, i32, i32) {
    %c0_i32 = arith.constant 0 : i32
    %c0_i32_0 = arith.constant 0 : i32
    %c0_i32_1 = arith.constant 0 : i32
    %c0_i32_2 = arith.constant 0 : i32
    return %c0_i32, %c0_i32_0, %c0_i32_1 : i32, i32, i32
  }
  func.func @transform_13(%arg0: i32) -> (i32, i32, i32) {
    %c0_i32 = arith.constant 0 : i32
    %c0_i32_0 = arith.constant 0 : i32
    %c0_i32_1 = arith.constant 0 : i32
    %c0_i32_2 = arith.constant 0 : i32
    return %c0_i32, %c0_i32_0, %c0_i32_1 : i32, i32, i32
  }
  func.func @transform_14(%arg0: i32) -> (i32, i32, i32) {
    %c0_i32 = arith.constant 0 : i32
    %c0_i32_0 = arith.constant 0 : i32
    %c0_i32_1 = arith.constant 0 : i32
    %c0_i32_2 = arith.constant 0 : i32
    return %c0_i32, %c0_i32_0, %c0_i32_1 : i32, i32, i32
  }
  func.func @transform_15(%arg0: i32) -> (i32, i32, i32) {
    %c0_i32 = arith.constant 0 : i32
    %c0_i32_0 = arith.constant 0 : i32
    %c0_i32_1 = arith.constant 0 : i32
    %c0_i32_2 = arith.constant 0 : i32
    return %c0_i32, %c0_i32_0, %c0_i32_1 : i32, i32, i32
  }
  func.func @transform_16(%arg0: i32) -> (i32, i32) {
    %c0_i32 = arith.constant 0 : i32
    %c0_i32_0 = arith.constant 0 : i32
    %c0_i32_1 = arith.constant 0 : i32
    return %c0_i32, %c0_i32_0 : i32, i32
  }
  func.func @transform_17(%arg0: i32) -> (i32, i32, i32) {
    %c0_i32 = arith.constant 0 : i32
    %c0_i32_0 = arith.constant 0 : i32
    %c0_i32_1 = arith.constant 0 : i32
    return %arg0, %c0_i32, %c0_i32_0 : i32, i32, i32
  }
}

</mosaic_0001>

<llo_original>
// kernel: transformer_layer_forward.1
$region0: #{transformer_layer_forward.1}
  #allocation0 [shape = 'u32[]', space=smem, size = 0x4, offset = 0x4, fixed_abs, tag = 'smem constant byte address 0x4 - core index']
  #allocation1 [shape = 'u32[144,128]{1,0:T(1,128)}', space=vmem, size = 0x12000, scoped, tag = 'internal scratch']
  %s0 = inlined_call_operand.hbm [shape: f32[2,96,32], index: 0, kind: input, shape index: {}]
  %s1 = inlined_call_operand.vmem [shape: f32[96,32], index: 1, kind: input, shape index: {}]
  %s2 = inlined_call_operand.vmem [shape: f32[2,96,288], index: 2, kind: input, shape index: {}]
  %s3 = inlined_call_operand.vmem [shape: f32[2,96,1], index: 3, kind: input, shape index: {}]
  %s4 = inlined_call_operand.hbm [shape: f32[2,96,288], index: 4, kind: input, shape index: {}]
  %s5 = inlined_call_operand.vmem [shape: f32[2,96,1], index: 5, kind: input, shape index: {}]
  %s6 = inlined_call_operand.hbm [shape: f32[2,32,32], index: 6, kind: input, shape index: {}]
  %s7 = inlined_call_operand.hbm [shape: f32[2,1,32], index: 7, kind: input, shape index: {}]
  %s8 = inlined_call_operand.hbm [shape: f32[2,1,32], index: 8, kind: input, shape index: {}]
  %s9 = inlined_call_operand.hbm [shape: f32[2,1,32], index: 9, kind: input, shape index: {}]
  %s10 = inlined_call_operand.hbm [shape: f32[2,32,32], index: 10, kind: input, shape index: {}]
  %s11 = inlined_call_operand.hbm [shape: f32[2,1,32], index: 11, kind: input, shape index: {}]
  %s12 = inlined_call_operand.hbm [shape: f32[2,32,32], index: 12, kind: input, shape index: {}]
  %s13 = inlined_call_operand.hbm [shape: f32[2,1,32], index: 13, kind: input, shape index: {}]
  %s14 = inlined_call_operand.hbm [shape: f32[2,1,32], index: 14, kind: input, shape index: {}]
  %s15 = inlined_call_operand.hbm [shape: f32[2,1,32], index: 15, kind: input, shape index: {}]
  %s16 = inlined_call_operand.hbm [shape: f32[96,96], index: 16, kind: input, shape index: {}]
  %s17 = inlined_call_operand.hbm [shape: f32[2,96,32], index: 17, kind: output, shape index: {}]
  %s18 = sld [smem:[#allocation0]]
  $region153: #{transformer_layer_forward.1} parent=0
    _
  %s20 = ssub.s32 1, %s18
  %s21 = scalar_select 0, %s20, %s18
  $region1: #{transformer_layer_forward.1} parent=0
    #allocation2 [shape = 'u8[98304]{0}', space=vmem, size = 0x18000, scoped, tag = 'input window, operand 0']
    #allocation3 [shape = 's32[2]{0}', space=sflag, size = 0x8, scoped, tag = 'scoped memory for transformer_layer_forward.1']
    #allocation4 [shape = 's32[2]{0}', space=sflag, size = 0x8, scoped, tag = 'scoped memory for transformer_layer_forward.1']
    #allocation5 [shape = 'u8[294912]{0}', space=vmem, size = 0x48000, scoped, tag = 'input window, operand 4, single buffered']
    #allocation6 [shape = 's32[1]{0}', space=sflag, size = 0x4, scoped, tag = 'scoped memory for transformer_layer_forward.1']
    #allocation7 [shape = 'u8[32768]{0}', space=vmem, size = 0x8000, scoped, tag = 'input window, operand 6, single buffered']
    #allocation8 [shape = 'u8[1024]{0}', space=vmem, size = 0x400, scoped, tag = 'input window, operand 7, single buffered']
    #allocation9 [shape = 's32[1]{0}', space=sflag, size = 0x4, scoped, tag = 'scoped memory for transformer_layer_forward.1']
    #allocation10 [shape = 'u8[1024]{0}', space=vmem, size = 0x400, scoped, tag = 'input window, operand 8, single buffered']
    #allocation11 [shape = 'u8[1024]{0}', space=vmem, size = 0x400, scoped, tag = 'input window, operand 9, single buffered']
    #allocation12 [shape = 's32[1]{0}', space=sflag, size = 0x4, scoped, tag = 'scoped memory for transformer_layer_forward.1']
    #allocation13 [shape = 'u8[32768]{0}', space=vmem, size = 0x8000, scoped, tag = 'input window, operand 10, single buffered']
    #allocation14 [shape = 'u8[1024]{0}', space=vmem, size = 0x400, scoped, tag = 'input window, operand 11, single buffered']
    #allocation15 [shape = 's32[1]{0}', space=sflag, size = 0x4, scoped, tag = 'scoped memory for transformer_layer_forward.1']
    #allocation16 [shape = 'u8[32768]{0}', space=vmem, size = 0x8000, scoped, tag = 'input window, operand 12, single buffered']
    #allocation17 [shape = 'u8[1024]{0}', space=vmem, size = 0x400, scoped, tag = 'input window, operand 13, single buffered']
    #allocation18 [shape = 's32[1]{0}', space=sflag, size = 0x4, scoped, tag = 'scoped memory for transformer_layer_forward.1']
    #allocation19 [shape = 'u8[1024]{0}', space=vmem, size = 0x400, scoped, tag = 'input window, operand 14, single buffered']
    #allocation20 [shape = 'u8[1024]{0}', space=vmem, size = 0x400, scoped, tag = 'input window, operand 15, single buffered']
    #allocation21 [shape = 's32[1]{0}', space=sflag, size = 0x4, scoped, tag = 'scoped memory for transformer_layer_forward.1']
    #allocation22 [shape = 'u8[49152]{0}', space=vmem, size = 0xc000, scoped, tag = 'input window, operand 16, single buffered']
    #allocation23 [shape = 'u8[98304]{0}', space=vmem, size = 0x18000, scoped, tag = 'output window, operand 0']
    %22 = vsyncpa [#allocation3], 0
    %s23 = scalar_lea.sflag [#allocation3], 1
    %24 = vsyncpa %s23, 0
    %25 = vsyncpa [#allocation6], 0
    %26 = vsyncpa [#allocation9], 0
    %27 = vsyncpa [#allocation12], 0
    %28 = vsyncpa [#allocation15], 0
    %29 = vsyncpa [#allocation18], 0
    %30 = vsyncpa [#allocation21], 0
    %31 = vsyncpa [#allocation4], 0
    %s32 = scalar_lea.sflag [#allocation4], 1
    %33 = vsyncpa %s32, 0
    loop: start=0, step=1, limit=4
    $region2: #{transformer_layer_forward.1} parent=1 // loop_pre_header
      _
    $region3: #{transformer_layer_forward.1} parent=1 // loop_header
      %s35 = sphi 0, %s39
      %p36 = scmp.ge.s32.totalorder %s35, 4
      %s45 = sphi 0, %s47
      %s48 = sphi 0, %s45
      %s49 = sphi 0, %s48
      %s65 = sphi 0, %s49
      %s69 = sphi 0, %s69
      %s71 = sphi 0, %s69
      %s72 = sphi 0, %s71
      %s86 = sphi 0, %s72
      %s90 = sphi 0, %s90
      %s92 = sphi 0, %s90
      %s93 = sphi 0, %s92
      %s107 = sphi 0, %s93
      %s111 = sphi 0, %s111
      %s113 = sphi 0, %s111
      %s114 = sphi 0, %s113
      %s128 = sphi 0, %s114
      %s132 = sphi 0, %s132
      %s134 = sphi 0, %s132
      %s135 = sphi 0, %s134
      %s149 = sphi 0, %s135
      %s153 = sphi 0, %s153
      %s155 = sphi 0, %s153
      %s156 = sphi 0, %s155
      %s170 = sphi 0, %s156
      %s174 = sphi 0, %s174
      %s176 = sphi 0, %s174
      %s177 = sphi 0, %s176
      %s191 = sphi 0, %s177
      %s195 = sphi 0, %s195
      %s197 = sphi 0, %s195
      %s198 = sphi 0, %s197
      %s212 = sphi 0, %s198
      %s216 = sphi 0, %s216
      %s218 = sphi 0, %s216
      %s219 = sphi 0, %s218
      %s233 = sphi 0, %s219
      %s237 = sphi 0, %s237
      %s239 = sphi 0, %s237
      %s240 = sphi 0, %s239
      %s254 = sphi 0, %s240
      %s258 = sphi 0, %s258
      %s260 = sphi 0, %s258
      %s261 = sphi 0, %s260
      %s275 = sphi 0, %s261
      %s279 = sphi 0, %s279
      %s281 = sphi 0, %s279
      %s282 = sphi 0, %s281
      %s296 = sphi 0, %s282
      %s300 = sphi 0, %s300
      %s302 = sphi 0, %s300
      %s303 = sphi 0, %s302
      %s317 = sphi 0, %s303
      %s321 = sphi 0, %s321
      %s323 = sphi 0, %s321
      %s324 = sphi 0, %s323
      %s338 = sphi 0, %s324
      %s342 = sphi 0, %s342
      %s344 = sphi 0, %s342
      %s345 = sphi 0, %s344
      %s359 = sphi 0, %s345
      %s363 = sphi 0, %s363
      %s365 = sphi 0, %s363
      %s366 = sphi 0, %s365
      %s380 = sphi 0, %s366
      %s384 = sphi 0, %s384
      %s386 = sphi 0, %s384
      %s387 = sphi 0, %s386
      %s401 = sphi 0, %s387
      %s407 = sphi 0, %s409
      %s410 = sphi 0, %s407
      %s411 = sphi 0, %s410
      %s427 = sphi 0, %s411
    $region4: #{transformer_layer_forward.1} parent=1 // loop_header_branch
      %38 = sbr.rel (%p36) target = $region8
    $region5: #{transformer_layer_forward.1} parent=1 // loop_body
      %s40 = ssub.s32 %s35, 1
      %s41 = ssub.s32 %s35, 2
      %s42 = sadd.s32 %s35, 1
      %s43 = ssub.s32 %s35, %s42
      %p44 = scmp.eq.s32.totalorder %s43, 0
      %s46 = sadd.s32 %s45, 1
      %s47 = scalar_select %p44, %s45, %s46
      %p50 = pneg %p44
      %p51 = scmp.eq.s32.totalorder %s35, 1
      %p52 = por %p50, %p51
      %p53 = scmp.ne.s32.totalorder %s45, %s48
      %p54 = scmp.eq.s32.totalorder %s35, 0
      %p55 = por %p53, %p54
      %p56 = scmp.ne.s32.totalorder %s45, %s48
      %p57 = scmp.eq.s32.totalorder %s40, 1
      %p58 = por %p56, %p57
      %p59 = scmp.ne.s32.totalorder %s48, %s49
      %p60 = scmp.eq.s32.totalorder %s40, 0
      %p61 = por %p59, %p60
      %p62 = scmp.ne.s32.totalorder %s48, %s49
      %p63 = scmp.eq.s32.totalorder %s41, 1
      %p64 = por %p62, %p63
      %p66 = scmp.ne.s32.totalorder %s49, %s65
      %p67 = scmp.eq.s32.totalorder %s41, 0
      %p68 = por %p66, %p67
      %s70 = sadd.s32 %s69, 1
      %p73 = scmp.eq.s32.totalorder %s35, 1
      %p74 = scmp.ne.s32.totalorder %s69, %s71
      %p75 = scmp.eq.s32.totalorder %s35, 0
      %p76 = por %p74, %p75
      %p77 = scmp.ne.s32.totalorder %s69, %s71
      %p78 = scmp.eq.s32.totalorder %s40, 1
      %p79 = por %p77, %p78
      %p80 = scmp.ne.s32.totalorder %s71, %s72
      %p81 = scmp.eq.s32.totalorder %s40, 0
      %p82 = por %p80, %p81
      %p83 = scmp.ne.s32.totalorder %s71, %s72
      %p84 = scmp.eq.s32.totalorder %s41, 1
      %p85 = por %p83, %p84
      %p87 = scmp.ne.s32.totalorder %s72, %s86
      %p88 = scmp.eq.s32.totalorder %s41, 0
      %p89 = por %p87, %p88
      %s91 = sadd.s32 %s90, 1
      %p94 = scmp.eq.s32.totalorder %s35, 1
      %p95 = scmp.ne.s32.totalorder %s90, %s92
      %p96 = scmp.eq.s32.totalorder %s35, 0
      %p97 = por %p95, %p96
      %p98 = scmp.ne.s32.totalorder %s90, %s92
      %p99 = scmp.eq.s32.totalorder %s40, 1
      %p100 = por %p98, %p99
      %p101 = scmp.ne.s32.totalorder %s92, %s93
      %p102 = scmp.eq.s32.totalorder %s40, 0
      %p103 = por %p101, %p102
      %p104 = scmp.ne.s32.totalorder %s92, %s93
      %p105 = scmp.eq.s32.totalorder %s41, 1
      %p106 = por %p104, %p105
      %p108 = scmp.ne.s32.totalorder %s93, %s107
      %p109 = scmp.eq.s32.totalorder %s41, 0
      %p110 = por %p108, %p109
      %s112 = sadd.s32 %s111, 1
      %p115 = scmp.eq.s32.totalorder %s35, 1
      %p116 = scmp.ne.s32.totalorder %s111, %s113
      %p117 = scmp.eq.s32.totalorder %s35, 0
      %p118 = por %p116, %p117
      %p119 = scmp.ne.s32.totalorder %s111, %s113
      %p120 = scmp.eq.s32.totalorder %s40, 1
      %p121 = por %p119, %p120
      %p122 = scmp.ne.s32.totalorder %s113, %s114
      %p123 = scmp.eq.s32.totalorder %s40, 0
      %p124 = por %p122, %p123
      %p125 = scmp.ne.s32.totalorder %s113, %s114
      %p126 = scmp.eq.s32.totalorder %s41, 1
      %p127 = por %p125, %p126
      %p129 = scmp.ne.s32.totalorder %s114, %s128
      %p130 = scmp.eq.s32.totalorder %s41, 0
      %p131 = por %p129, %p130
      %s133 = sadd.s32 %s132, 1
      %p136 = scmp.eq.s32.totalorder %s35, 1
      %p137 = scmp.ne.s32.totalorder %s132, %s134
      %p138 = scmp.eq.s32.totalorder %s35, 0
      %p139 = por %p137, %p138
      %p140 = scmp.ne.s32.totalorder %s132, %s134
      %p141 = scmp.eq.s32.totalorder %s40, 1
      %p142 = por %p140, %p141
      %p143 = scmp.ne.s32.totalorder %s134, %s135
      %p144 = scmp.eq.s32.totalorder %s40, 0
      %p145 = por %p143, %p144
      %p146 = scmp.ne.s32.totalorder %s134, %s135
      %p147 = scmp.eq.s32.totalorder %s41, 1
      %p148 = por %p146, %p147
      %p150 = scmp.ne.s32.totalorder %s135, %s149
      %p151 = scmp.eq.s32.totalorder %s41, 0
      %p152 = por %p150, %p151
      %s154 = sadd.s32 %s153, 1
      %p157 = scmp.eq.s32.totalorder %s35, 1
      %p158 = scmp.ne.s32.totalorder %s153, %s155
      %p159 = scmp.eq.s32.totalorder %s35, 0
      %p160 = por %p158, %p159
      %p161 = scmp.ne.s32.totalorder %s153, %s155
      %p162 = scmp.eq.s32.totalorder %s40, 1
      %p163 = por %p161, %p162
      %p164 = scmp.ne.s32.totalorder %s155, %s156
      %p165 = scmp.eq.s32.totalorder %s40, 0
      %p166 = por %p164, %p165
      %p167 = scmp.ne.s32.totalorder %s155, %s156
      %p168 = scmp.eq.s32.totalorder %s41, 1
      %p169 = por %p167, %p168
      %p171 = scmp.ne.s32.totalorder %s156, %s170
      %p172 = scmp.eq.s32.totalorder %s41, 0
      %p173 = por %p171, %p172
      %s175 = sadd.s32 %s174, 1
      %p178 = scmp.eq.s32.totalorder %s35, 1
      %p179 = scmp.ne.s32.totalorder %s174, %s176
      %p180 = scmp.eq.s32.totalorder %s35, 0
      %p181 = por %p179, %p180
      %p182 = scmp.ne.s32.totalorder %s174, %s176
      %p183 = scmp.eq.s32.totalorder %s40, 1
      %p184 = por %p182, %p183
      %p185 = scmp.ne.s32.totalorder %s176, %s177
      %p186 = scmp.eq.s32.totalorder %s40, 0
      %p187 = por %p185, %p186
      %p188 = scmp.ne.s32.totalorder %s176, %s177
      %p189 = scmp.eq.s32.totalorder %s41, 1
      %p190 = por %p188, %p189
      %p192 = scmp.ne.s32.totalorder %s177, %s191
      %p193 = scmp.eq.s32.totalorder %s41, 0
      %p194 = por %p192, %p193
      %s196 = sadd.s32 %s195, 1
      %p199 = scmp.eq.s32.totalorder %s35, 1
      %p200 = scmp.ne.s32.totalorder %s195, %s197
      %p201 = scmp.eq.s32.totalorder %s35, 0
      %p202 = por %p200, %p201
      %p203 = scmp.ne.s32.totalorder %s195, %s197
      %p204 = scmp.eq.s32.totalorder %s40, 1
      %p205 = por %p203, %p204
      %p206 = scmp.ne.s32.totalorder %s197, %s198
      %p207 = scmp.eq.s32.totalorder %s40, 0
      %p208 = por %p206, %p207
      %p209 = scmp.ne.s32.totalorder %s197, %s198
      %p210 = scmp.eq.s32.totalorder %s41, 1
      %p211 = por %p209, %p210
      %p213 = scmp.ne.s32.totalorder %s198, %s212
      %p214 = scmp.eq.s32.totalorder %s41, 0
      %p215 = por %p213, %p214
      %s217 = sadd.s32 %s216, 1
      %p220 = scmp.eq.s32.totalorder %s35, 1
      %p221 = scmp.ne.s32.totalorder %s216, %s218
      %p222 = scmp.eq.s32.totalorder %s35, 0
      %p223 = por %p221, %p222
      %p224 = scmp.ne.s32.totalorder %s216, %s218
      %p225 = scmp.eq.s32.totalorder %s40, 1
      %p226 = por %p224, %p225
      %p227 = scmp.ne.s32.totalorder %s218, %s219
      %p228 = scmp.eq.s32.totalorder %s40, 0
      %p229 = por %p227, %p228
      %p230 = scmp.ne.s32.totalorder %s218, %s219
      %p231 = scmp.eq.s32.totalorder %s41, 1
      %p232 = por %p230, %p231
      %p234 = scmp.ne.s32.totalorder %s219, %s233
      %p235 = scmp.eq.s32.totalorder %s41, 0
      %p236 = por %p234, %p235
      %s238 = sadd.s32 %s237, 1
      %p241 = scmp.eq.s32.totalorder %s35, 1
      %p242 = scmp.ne.s32.totalorder %s237, %s239
      %p243 = scmp.eq.s32.totalorder %s35, 0
      %p244 = por %p242, %p243
      %p245 = scmp.ne.s32.totalorder %s237, %s239
      %p246 = scmp.eq.s32.totalorder %s40, 1
      %p247 = por %p245, %p246
      %p248 = scmp.ne.s32.totalorder %s239, %s240
      %p249 = scmp.eq.s32.totalorder %s40, 0
      %p250 = por %p248, %p249
      %p251 = scmp.ne.s32.totalorder %s239, %s240
      %p252 = scmp.eq.s32.totalorder %s41, 1
      %p253 = por %p251, %p252
      %p255 = scmp.ne.s32.totalorder %s240, %s254
      %p256 = scmp.eq.s32.totalorder %s41, 0
      %p257 = por %p255, %p256
      %s259 = sadd.s32 %s258, 1
      %p262 = scmp.eq.s32.totalorder %s35, 1
      %p263 = scmp.ne.s32.totalorder %s258, %s260
      %p264 = scmp.eq.s32.totalorder %s35, 0
      %p265 = por %p263, %p264
      %p266 = scmp.ne.s32.totalorder %s258, %s260
      %p267 = scmp.eq.s32.totalorder %s40, 1
      %p268 = por %p266, %p267
      %p269 = scmp.ne.s32.totalorder %s260, %s261
      %p270 = scmp.eq.s32.totalorder %s40, 0
      %p271 = por %p269, %p270
      %p272 = scmp.ne.s32.totalorder %s260, %s261
      %p273 = scmp.eq.s32.totalorder %s41, 1
      %p274 = por %p272, %p273
      %p276 = scmp.ne.s32.totalorder %s261, %s275
      %p277 = scmp.eq.s32.totalorder %s41, 0
      %p278 = por %p276, %p277
      %s280 = sadd.s32 %s279, 1
      %p283 = scmp.eq.s32.totalorder %s35, 1
      %p284 = scmp.ne.s32.totalorder %s279, %s281
      %p285 = scmp.eq.s32.totalorder %s35, 0
      %p286 = por %p284, %p285
      %p287 = scmp.ne.s32.totalorder %s279, %s281
      %p288 = scmp.eq.s32.totalorder %s40, 1
      %p289 = por %p287, %p288
      %p290 = scmp.ne.s32.totalorder %s281, %s282
      %p291 = scmp.eq.s32.totalorder %s40, 0
      %p292 = por %p290, %p291
      %p293 = scmp.ne.s32.totalorder %s281, %s282
      %p294 = scmp.eq.s32.totalorder %s41, 1
      %p295 = por %p293, %p294
      %p297 = scmp.ne.s32.totalorder %s282, %s296
      %p298 = scmp.eq.s32.totalorder %s41, 0
      %p299 = por %p297, %p298
      %s301 = sadd.s32 %s300, 1
      %p304 = scmp.eq.s32.totalorder %s35, 1
      %p305 = scmp.ne.s32.totalorder %s300, %s302
      %p306 = scmp.eq.s32.totalorder %s35, 0
      %p307 = por %p305, %p306
      %p308 = scmp.ne.s32.totalorder %s300, %s302
      %p309 = scmp.eq.s32.totalorder %s40, 1
      %p310 = por %p308, %p309
      %p311 = scmp.ne.s32.totalorder %s302, %s303
      %p312 = scmp.eq.s32.totalorder %s40, 0
      %p313 = por %p311, %p312
      %p314 = scmp.ne.s32.totalorder %s302, %s303
      %p315 = scmp.eq.s32.totalorder %s41, 1
      %p316 = por %p314, %p315
      %p318 = scmp.ne.s32.totalorder %s303, %s317
      %p319 = scmp.eq.s32.totalorder %s41, 0
      %p320 = por %p318, %p319
      %s322 = sadd.s32 %s321, 1
      %p325 = scmp.eq.s32.totalorder %s35, 1
      %p326 = scmp.ne.s32.totalorder %s321, %s323
      %p327 = scmp.eq.s32.totalorder %s35, 0
      %p328 = por %p326, %p327
      %p329 = scmp.ne.s32.totalorder %s321, %s323
      %p330 = scmp.eq.s32.totalorder %s40, 1
      %p331 = por %p329, %p330
      %p332 = scmp.ne.s32.totalorder %s323, %s324
      %p333 = scmp.eq.s32.totalorder %s40, 0
      %p334 = por %p332, %p333
      %p335 = scmp.ne.s32.totalorder %s323, %s324
      %p336 = scmp.eq.s32.totalorder %s41, 1
      %p337 = por %p335, %p336
      %p339 = scmp.ne.s32.totalorder %s324, %s338
      %p340 = scmp.eq.s32.totalorder %s41, 0
      %p341 = por %p339, %p340
      %s343 = sadd.s32 %s342, 1
      %p346 = scmp.eq.s32.totalorder %s35, 1
      %p347 = scmp.ne.s32.totalorder %s342, %s344
      %p348 = scmp.eq.s32.totalorder %s35, 0
      %p349 = por %p347, %p348
      %p350 = scmp.ne.s32.totalorder %s342, %s344
      %p351 = scmp.eq.s32.totalorder %s40, 1
      %p352 = por %p350, %p351
      %p353 = scmp.ne.s32.totalorder %s344, %s345
      %p354 = scmp.eq.s32.totalorder %s40, 0
      %p355 = por %p353, %p354
      %p356 = scmp.ne.s32.totalorder %s344, %s345
      %p357 = scmp.eq.s32.totalorder %s41, 1
      %p358 = por %p356, %p357
      %p360 = scmp.ne.s32.totalorder %s345, %s359
      %p361 = scmp.eq.s32.totalorder %s41, 0
      %p362 = por %p360, %p361
      %s364 = sadd.s32 %s363, 1
      %p367 = scmp.eq.s32.totalorder %s35, 1
      %p368 = scmp.ne.s32.totalorder %s363, %s365
      %p369 = scmp.eq.s32.totalorder %s35, 0
      %p370 = por %p368, %p369
      %p371 = scmp.ne.s32.totalorder %s363, %s365
      %p372 = scmp.eq.s32.totalorder %s40, 1
      %p373 = por %p371, %p372
      %p374 = scmp.ne.s32.totalorder %s365, %s366
      %p375 = scmp.eq.s32.totalorder %s40, 0
      %p376 = por %p374, %p375
      %p377 = scmp.ne.s32.totalorder %s365, %s366
      %p378 = scmp.eq.s32.totalorder %s41, 1
      %p379 = por %p377, %p378
      %p381 = scmp.ne.s32.totalorder %s366, %s380
      %p382 = scmp.eq.s32.totalorder %s41, 0
      %p383 = por %p381, %p382
      %s385 = sadd.s32 %s384, 1
      %p388 = scmp.eq.s32.totalorder %s35, 1
      %p389 = scmp.ne.s32.totalorder %s384, %s386
      %p390 = scmp.eq.s32.totalorder %s35, 0
      %p391 = por %p389, %p390
      %p392 = scmp.ne.s32.totalorder %s384, %s386
      %p393 = scmp.eq.s32.totalorder %s40, 1
      %p394 = por %p392, %p393
      %p395 = scmp.ne.s32.totalorder %s386, %s387
      %p396 = scmp.eq.s32.totalorder %s40, 0
      %p397 = por %p395, %p396
      %p398 = scmp.ne.s32.totalorder %s386, %s387
      %p399 = scmp.eq.s32.totalorder %s41, 1
      %p400 = por %p398, %p399
      %p402 = scmp.ne.s32.totalorder %s387, %s401
      %p403 = scmp.eq.s32.totalorder %s41, 0
      %p404 = por %p402, %p403
      %s405 = ssub.s32 %s35, %s42
      %p406 = scmp.eq.s32.totalorder %s405, 0
      %s408 = sadd.s32 %s407, 1
      %s409 = scalar_select %p406, %s407, %s408
      %p412 = pneg %p406
      %p413 = scmp.eq.s32.totalorder %s35, 1
      %p414 = por %p412, %p413
      %p415 = scmp.ne.s32.totalorder %s407, %s410
      %p416 = scmp.eq.s32.totalorder %s35, 0
      %p417 = por %p415, %p416
      %p418 = scmp.ne.s32.totalorder %s407, %s410
      %p419 = scmp.eq.s32.totalorder %s40, 1
      %p420 = por %p418, %p419
      %p421 = scmp.ne.s32.totalorder %s410, %s411
      %p422 = scmp.eq.s32.totalorder %s40, 0
      %p423 = por %p421, %p422
      %p424 = scmp.ne.s32.totalorder %s410, %s411
      %p425 = scmp.eq.s32.totalorder %s41, 1
      %p426 = por %p424, %p425
      %p428 = scmp.ne.s32.totalorder %s411, %s427
      %p429 = scmp.eq.s32.totalorder %s41, 0
      %p430 = por %p428, %p429
      %p431 = scmp.le.s32.totalorder 1, %s35
      %p432 = scmp.lt.s32.totalorder %s35, 3
      %p433 = pnand %p431, %p432
      %p434 = pneg %p433
      // Predicated region
      $region9: #{transformer_layer_forward.1} parent=5 // pred_check
        _
      $region10: #{transformer_layer_forward.1} parent=5 // pred_check_branch
        %436 = sbr.rel (%p433) target = $region12
      $region11: #{transformer_layer_forward.1} parent=5 // pred_region
        %s437 = ssub.s32 %s35, 1
        // Predicated region
        $region13: #{transformer_layer_forward.1} parent=11 // pred_check
          %p438 = pneg %p82
        $region14: #{transformer_layer_forward.1} parent=11 // pred_check_branch
          %440 = sbr.rel (%p438) target = $region16
        $region15: #{transformer_layer_forward.1} parent=11 // pred_region
          _
        $region16: #{transformer_layer_forward.1} parent=11 // pred_fallthru
          _
        // Predicated region
        $region17: #{transformer_layer_forward.1} parent=11 // pred_check
          %p441 = pneg %p103
        $region18: #{transformer_layer_forward.1} parent=11 // pred_check_branch
          %443 = sbr.rel (%p441) target = $region20
        $region19: #{transformer_layer_forward.1} parent=11 // pred_region
          _
        $region20: #{transformer_layer_forward.1} parent=11 // pred_fallthru
          _
        // Predicated region
        $region21: #{transformer_layer_forward.1} parent=11 // pred_check
          %p444 = pneg %p124
        $region22: #{transformer_layer_forward.1} parent=11 // pred_check_branch
          %446 = sbr.rel (%p444) target = $region24
        $region23: #{transformer_layer_forward.1} parent=11 // pred_region
          _
        $region24: #{transformer_layer_forward.1} parent=11 // pred_fallthru
          _
        // Predicated region
        $region25: #{transformer_layer_forward.1} parent=11 // pred_check
          %p447 = pneg %p145
        $region26: #{transformer_layer_forward.1} parent=11 // pred_check_branch
          %449 = sbr.rel (%p447) target = $region28
        $region27: #{transformer_layer_forward.1} parent=11 // pred_region
          %s451 = ssub.s32 9216, 9216
          %452 = vsyncadd [#allocation6], %s451
          %s453 = sshll.u32 [#allocation5], 4
          %s454 = int_to_ptr.vmem [resolvable:$true] %s453
          %459 = dma.hbm_to_vmem [thread:$0]  %s4, 9216, %s454, [#allocation6], 384, 384, 24
        $region28: #{transformer_layer_forward.1} parent=11 // pred_fallthru
          _
        // Predicated region
        $region29: #{transformer_layer_forward.1} parent=11 // pred_check
          %p460 = pneg %p166
        $region30: #{transformer_layer_forward.1} parent=11 // pred_check_branch
          %462 = sbr.rel (%p460) target = $region32
        $region31: #{transformer_layer_forward.1} parent=11 // pred_region
          _
        $region32: #{transformer_layer_forward.1} parent=11 // pred_fallthru
          _
        // Predicated region
        $region33: #{transformer_layer_forward.1} parent=11 // pred_check
          %p463 = pneg %p187
        $region34: #{transformer_layer_forward.1} parent=11 // pred_check_branch
          %465 = sbr.rel (%p463) target = $region36
        $region35: #{transformer_layer_forward.1} parent=11 // pred_region
          %s467 = ssub.s32 1024, 1024
          %468 = vsyncadd [#allocation6], %s467
          %s469 = sshll.u32 [#allocation7], 4
          %s470 = int_to_ptr.vmem [resolvable:$true] %s469
          %475 = dma.hbm_to_vmem [thread:$0]  %s6, 1024, %s470, [#allocation6], 128, 128, 8
        $region36: #{transformer_layer_forward.1} parent=11 // pred_fallthru
          _
        // Predicated region
        $region37: #{transformer_layer_forward.1} parent=11 // pred_check
          %p476 = pneg %p208
        $region38: #{transformer_layer_forward.1} parent=11 // pred_check_branch
          %478 = sbr.rel (%p476) target = $region40
        $region39: #{transformer_layer_forward.1} parent=11 // pred_region
          %s480 = ssub.s32 32, 32
          %481 = vsyncadd [#allocation9], %s480
          %s482 = sshll.u32 [#allocation8], 4
          %s483 = int_to_ptr.vmem [resolvable:$true] %s482
          %488 = dma.hbm_to_vmem [thread:$0]  %s7, 32, %s483, [#allocation9], 16, 16, 1
        $region40: #{transformer_layer_forward.1} parent=11 // pred_fallthru
          _
        // Predicated region
        $region41: #{transformer_layer_forward.1} parent=11 // pred_check
          %p489 = pneg %p229
        $region42: #{transformer_layer_forward.1} parent=11 // pred_check_branch
          %491 = sbr.rel (%p489) target = $region44
        $region43: #{transformer_layer_forward.1} parent=11 // pred_region
          %s493 = ssub.s32 32, 32
          %494 = vsyncadd [#allocation9], %s493
          %s495 = sshll.u32 [#allocation10], 4
          %s496 = int_to_ptr.vmem [resolvable:$true] %s495
          %501 = dma.hbm_to_vmem [thread:$0]  %s8, 32, %s496, [#allocation9], 16, 16, 1
        $region44: #{transformer_layer_forward.1} parent=11 // pred_fallthru
          _
        // Predicated region
        $region45: #{transformer_layer_forward.1} parent=11 // pred_check
          %p502 = pneg %p250
        $region46: #{transformer_layer_forward.1} parent=11 // pred_check_branch
          %504 = sbr.rel (%p502) target = $region48
        $region47: #{transformer_layer_forward.1} parent=11 // pred_region
          %s506 = ssub.s32 32, 32
          %507 = vsyncadd [#allocation12], %s506
          %s508 = sshll.u32 [#allocation11], 4
          %s509 = int_to_ptr.vmem [resolvable:$true] %s508
          %514 = dma.hbm_to_vmem [thread:$0]  %s9, 32, %s509, [#allocation12], 16, 16, 1
        $region48: #{transformer_layer_forward.1} parent=11 // pred_fallthru
          _
        // Predicated region
        $region49: #{transformer_layer_forward.1} parent=11 // pred_check
          %p515 = pneg %p271
        $region50: #{transformer_layer_forward.1} parent=11 // pred_check_branch
          %517 = sbr.rel (%p515) target = $region52
        $region51: #{transformer_layer_forward.1} parent=11 // pred_region
          %s519 = ssub.s32 1024, 1024
          %520 = vsyncadd [#allocation12], %s519
          %s521 = sshll.u32 [#allocation13], 4
          %s522 = int_to_ptr.vmem [resolvable:$true] %s521
          %527 = dma.hbm_to_vmem [thread:$0]  %s10, 1024, %s522, [#allocation12], 128, 128, 8
        $region52: #{transformer_layer_forward.1} parent=11 // pred_fallthru
          _
        // Predicated region
        $region53: #{transformer_layer_forward.1} parent=11 // pred_check
          %p528 = pneg %p292
        $region54: #{transformer_layer_forward.1} parent=11 // pred_check_branch
          %530 = sbr.rel (%p528) target = $region56
        $region55: #{transformer_layer_forward.1} parent=11 // pred_region
          %s532 = ssub.s32 32, 32
          %533 = vsyncadd [#allocation15], %s532
          %s534 = sshll.u32 [#allocation14], 4
          %s535 = int_to_ptr.vmem [resolvable:$true] %s534
          %540 = dma.hbm_to_vmem [thread:$0]  %s11, 32, %s535, [#allocation15], 16, 16, 1
        $region56: #{transformer_layer_forward.1} parent=11 // pred_fallthru
          _
        // Predicated region
        $region57: #{transformer_layer_forward.1} parent=11 // pred_check
          %p541 = pneg %p313
        $region58: #{transformer_layer_forward.1} parent=11 // pred_check_branch
          %543 = sbr.rel (%p541) target = $region60
        $region59: #{transformer_layer_forward.1} parent=11 // pred_region
          %s545 = ssub.s32 1024, 1024
          %546 = vsyncadd [#allocation15], %s545
          %s547 = sshll.u32 [#allocation16], 4
          %s548 = int_to_ptr.vmem [resolvable:$true] %s547
          %553 = dma.hbm_to_vmem [thread:$0]  %s12, 1024, %s548, [#allocation15], 128, 128, 8
        $region60: #{transformer_layer_forward.1} parent=11 // pred_fallthru
          _
        // Predicated region
        $region61: #{transformer_layer_forward.1} parent=11 // pred_check
          %p554 = pneg %p334
        $region62: #{transformer_layer_forward.1} parent=11 // pred_check_branch
          %556 = sbr.rel (%p554) target = $region64
        $region63: #{transformer_layer_forward.1} parent=11 // pred_region
          %s558 = ssub.s32 32, 32
          %559 = vsyncadd [#allocation18], %s558
          %s560 = sshll.u32 [#allocation17], 4
          %s561 = int_to_ptr.vmem [resolvable:$true] %s560
          %566 = dma.hbm_to_vmem [thread:$0]  %s13, 32, %s561, [#allocation18], 16, 16, 1
        $region64: #{transformer_layer_forward.1} parent=11 // pred_fallthru
          _
        // Predicated region
        $region65: #{transformer_layer_forward.1} parent=11 // pred_check
          %p567 = pneg %p355
        $region66: #{transformer_layer_forward.1} parent=11 // pred_check_branch
          %569 = sbr.rel (%p567) target = $region68
        $region67: #{transformer_layer_forward.1} parent=11 // pred_region
          %s571 = ssub.s32 32, 32
          %572 = vsyncadd [#allocation18], %s571
          %s573 = sshll.u32 [#allocation19], 4
          %s574 = int_to_ptr.vmem [resolvable:$true] %s573
          %579 = dma.hbm_to_vmem [thread:$0]  %s14, 32, %s574, [#allocation18], 16, 16, 1
        $region68: #{transformer_layer_forward.1} parent=11 // pred_fallthru
          _
        // Predicated region
        $region69: #{transformer_layer_forward.1} parent=11 // pred_check
          %p580 = pneg %p376
        $region70: #{transformer_layer_forward.1} parent=11 // pred_check_branch
          %582 = sbr.rel (%p580) target = $region72
        $region71: #{transformer_layer_forward.1} parent=11 // pred_region
          %s584 = ssub.s32 32, 32
          %585 = vsyncadd [#allocation21], %s584
          %s586 = sshll.u32 [#allocation20], 4
          %s587 = int_to_ptr.vmem [resolvable:$true] %s586
          %592 = dma.hbm_to_vmem [thread:$0]  %s15, 32, %s587, [#allocation21], 16, 16, 1
        $region72: #{transformer_layer_forward.1} parent=11 // pred_fallthru
          _
        // Predicated region
        $region73: #{transformer_layer_forward.1} parent=11 // pred_check
          %p593 = pneg %p397
        $region74: #{transformer_layer_forward.1} parent=11 // pred_check_branch
          %595 = sbr.rel (%p593) target = $region76
        $region75: #{transformer_layer_forward.1} parent=11 // pred_region
          %s597 = ssub.s32 1536, 1536
          %598 = vsyncadd [#allocation21], %s597
          %s599 = sshll.u32 [#allocation22], 4
          %s600 = int_to_ptr.vmem [resolvable:$true] %s599
          %605 = dma.hbm_to_vmem [thread:$0]  %s16, 1536, %s600, [#allocation21], 128, 128, 8
        $region76: #{transformer_layer_forward.1} parent=11 // pred_fallthru
          _
      $region12: #{transformer_layer_forward.1} parent=5 // pred_fallthru
        _
      %p606 = scmp.lt.s32.totalorder %s35, 2
      // Predicated region
      $region77: #{transformer_layer_forward.1} parent=5 // pred_check
        %p607 = pneg %p606
      $region78: #{transformer_layer_forward.1} parent=5 // pred_check_branch
        %609 = sbr.rel (%p607) target = $region80
      $region79: #{transformer_layer_forward.1} parent=5 // pred_region
        // Predicated region
        $region81: #{transformer_layer_forward.1} parent=79 // pred_check
          %p610 = pneg %p55
        $region82: #{transformer_layer_forward.1} parent=79 // pred_check_branch
          %612 = sbr.rel (%p610) target = $region84
        $region83: #{transformer_layer_forward.1} parent=79 // pred_region
          %s613 = sand.u32 %s45, 1
          %s614 = scalar_lea.sflag [#allocation3], %s613
          %s615 = sand.u32 %s45, 1
          %s616 = smul.addr %s615, 96
          %s617 = scalar_lea.vmem [#allocation2], %s616
          %s619 = ssub.s32 1536, 1536
          %620 = vsyncadd %s614, %s619
          %s621 = smul.addr %s35, 12
          %s622 = smul.addr %s621, 128
          %s623 = scalar_lea.hbm %s0, %s622
          %s624 = sshll.u32 %s617, 4
          %s625 = int_to_ptr.vmem [resolvable:$true] %s624
          %630 = dma.hbm_to_vmem [thread:$0]  %s623, 1536, %s625, %s614, 128, 128, 8
        $region84: #{transformer_layer_forward.1} parent=79 // pred_fallthru
          _
      $region80: #{transformer_layer_forward.1} parent=5 // pred_fallthru
        _
      %p631 = scmp.le.s32.totalorder 1, %s35
      %p632 = scmp.lt.s32.totalorder %s35, 3
      %p633 = pnand %p631, %p632
      %p634 = pneg %p633
      // Predicated region
      $region85: #{transformer_layer_forward.1} parent=5 // pred_check
        _
      $region86: #{transformer_layer_forward.1} parent=5 // pred_check_branch
        %636 = sbr.rel (%p633) target = $region88
      $region87: #{transformer_layer_forward.1} parent=5 // pred_region
        %s637 = ssub.s32 %s35, 1
        %s638 = sand.u32 %s48, 1
        %s639 = scalar_lea.sflag [#allocation3], %s638
        %s640 = sand.u32 %s48, 1
        %s641 = smul.addr %s640, 96
        %s642 = scalar_lea.vmem [#allocation2], %s641
        // Predicated region
        $region89: #{transformer_layer_forward.1} parent=87 // pred_check
          %p643 = pneg %p61
        $region90: #{transformer_layer_forward.1} parent=87 // pred_check_branch
          %645 = sbr.rel (%p643) target = $region92
        $region91: #{transformer_layer_forward.1} parent=87 // pred_region
          %646 = dma.done %s639, 1536
        $region92: #{transformer_layer_forward.1} parent=87 // pred_fallthru
          _
        // Predicated region
        $region93: #{transformer_layer_forward.1} parent=87 // pred_check
          %p647 = pneg %p145
        $region94: #{transformer_layer_forward.1} parent=87 // pred_check_branch
          %649 = sbr.rel (%p647) target = $region96
        $region95: #{transformer_layer_forward.1} parent=87 // pred_region
          %650 = dma.done [#allocation6], 9216
        $region96: #{transformer_layer_forward.1} parent=87 // pred_fallthru
          _
        // Predicated region
        $region97: #{transformer_layer_forward.1} parent=87 // pred_check
          %p651 = pneg %p187
        $region98: #{transformer_layer_forward.1} parent=87 // pred_check_branch
          %653 = sbr.rel (%p651) target = $region100
        $region99: #{transformer_layer_forward.1} parent=87 // pred_region
          %654 = dma.done [#allocation6], 1024
        $region100: #{transformer_layer_forward.1} parent=87 // pred_fallthru
          _
        // Predicated region
        $region101: #{transformer_layer_forward.1} parent=87 // pred_check
          %p655 = pneg %p208
        $region102: #{transformer_layer_forward.1} parent=87 // pred_check_branch
          %657 = sbr.rel (%p655) target = $region104
        $region103: #{transformer_layer_forward.1} parent=87 // pred_region
          %658 = dma.done [#allocation9], 32
        $region104: #{transformer_layer_forward.1} parent=87 // pred_fallthru
          _
        // Predicated region
        $region105: #{transformer_layer_forward.1} parent=87 // pred_check
          %p659 = pneg %p229
        $region106: #{transformer_layer_forward.1} parent=87 // pred_check_branch
          %661 = sbr.rel (%p659) target = $region108
        $region107: #{transformer_layer_forward.1} parent=87 // pred_region
          %662 = dma.done [#allocation9], 32
        $region108: #{transformer_layer_forward.1} parent=87 // pred_fallthru
          _
        // Predicated region
        $region109: #{transformer_layer_forward.1} parent=87 // pred_check
          %p663 = pneg %p250
        $region110: #{transformer_layer_forward.1} parent=87 // pred_check_branch
          %665 = sbr.rel (%p663) target = $region112
        $region111: #{transformer_layer_forward.1} parent=87 // pred_region
          %666 = dma.done [#allocation12], 32
        $region112: #{transformer_layer_forward.1} parent=87 // pred_fallthru
          _
        // Predicated region
        $region113: #{transformer_layer_forward.1} parent=87 // pred_check
          %p667 = pneg %p271
        $region114: #{transformer_layer_forward.1} parent=87 // pred_check_branch
          %669 = sbr.rel (%p667) target = $region116
        $region115: #{transformer_layer_forward.1} parent=87 // pred_region
          %670 = dma.done [#allocation12], 1024
        $region116: #{transformer_layer_forward.1} parent=87 // pred_fallthru
          _
        // Predicated region
        $region117: #{transformer_layer_forward.1} parent=87 // pred_check
          %p671 = pneg %p292
        $region118: #{transformer_layer_forward.1} parent=87 // pred_check_branch
          %673 = sbr.rel (%p671) target = $region120
        $region119: #{transformer_layer_forward.1} parent=87 // pred_region
          %674 = dma.done [#allocation15], 32
        $region120: #{transformer_layer_forward.1} parent=87 // pred_fallthru
          _
        // Predicated region
        $region121: #{transformer_layer_forward.1} parent=87 // pred_check
          %p675 = pneg %p313
        $region122: #{transformer_layer_forward.1} parent=87 // pred_check_branch
          %677 = sbr.rel (%p675) target = $region124
        $region123: #{transformer_layer_forward.1} parent=87 // pred_region
          %678 = dma.done [#allocation15], 1024
        $region124: #{transformer_layer_forward.1} parent=87 // pred_fallthru
          _
        // Predicated region
        $region125: #{transformer_layer_forward.1} parent=87 // pred_check
          %p679 = pneg %p334
        $region126: #{transformer_layer_forward.1} parent=87 // pred_check_branch
          %681 = sbr.rel (%p679) target = $region128
        $region127: #{transformer_layer_forward.1} parent=87 // pred_region
          %682 = dma.done [#allocation18], 32
        $region128: #{transformer_layer_forward.1} parent=87 // pred_fallthru
          _
        // Predicated region
        $region129: #{transformer_layer_forward.1} parent=87 // pred_check
          %p683 = pneg %p355
        $region130: #{transformer_layer_forward.1} parent=87 // pred_check_branch
          %685 = sbr.rel (%p683) target = $region132
        $region131: #{transformer_layer_forward.1} parent=87 // pred_region
          %686 = dma.done [#allocation18], 32
        $region132: #{transformer_layer_forward.1} parent=87 // pred_fallthru
          _
        // Predicated region
        $region133: #{transformer_layer_forward.1} parent=87 // pred_check
          %p687 = pneg %p376
        $region134: #{transformer_layer_forward.1} parent=87 // pred_check_branch
          %689 = sbr.rel (%p687) target = $region136
        $region135: #{transformer_layer_forward.1} parent=87 // pred_region
          %690 = dma.done [#allocation21], 32
        $region136: #{transformer_layer_forward.1} parent=87 // pred_fallthru
          _
        // Predicated region
        $region137: #{transformer_layer_forward.1} parent=87 // pred_check
          %p691 = pneg %p397
        $region138: #{transformer_layer_forward.1} parent=87 // pred_check_branch
          %693 = sbr.rel (%p691) target = $region140
        $region139: #{transformer_layer_forward.1} parent=87 // pred_region
          %694 = dma.done [#allocation21], 1536
        $region140: #{transformer_layer_forward.1} parent=87 // pred_fallthru
          _
        %s695 = sand.u32 %s48, 1
        %s696 = scalar_lea.sflag [#allocation3], %s695
        %s697 = sand.u32 %s48, 1
        %s698 = smul.addr %s697, 96
        %s699 = scalar_lea.vmem [#allocation2], %s698
        %p700 = pneg %p61
        %p701 = pneg %p58
        %p702 = pneg %p82
        %p703 = pneg %p79
        %p704 = pneg %p103
        %p705 = pneg %p100
        %p706 = pneg %p124
        %p707 = pneg %p121
        %p708 = pneg %p145
        %p709 = pneg %p142
        %p710 = pneg %p166
        %p711 = pneg %p163
        %p712 = pneg %p187
        %p713 = pneg %p184
        %p714 = pneg %p208
        %p715 = pneg %p205
        %p716 = pneg %p229
        %p717 = pneg %p226
        %p718 = pneg %p250
        %p719 = pneg %p247
        %p720 = pneg %p271
        %p721 = pneg %p268
        %p722 = pneg %p292
        %p723 = pneg %p289
        %p724 = pneg %p313
        %p725 = pneg %p310
        %p726 = pneg %p334
        %p727 = pneg %p331
        %p728 = pneg %p355
        %p729 = pneg %p352
        %p730 = pneg %p376
        %p731 = pneg %p373
        %p732 = pneg %p397
        %p733 = pneg %p394
        %p734 = pneg %p423
        %p735 = pneg %p420
        %s736 = sand.u32 %s410, 1
        %s737 = scalar_lea.sflag [#allocation4], %s736
        %s738 = sand.u32 %s410, 1
        %s739 = smul.addr %s738, 96
        %s740 = scalar_lea.vmem [#allocation23], %s739
        %v741 = vld [vmem:[%s642] sm:$0xff]
        %v742 = vld [vmem:[%s642 + $0x8] sm:$0xff]
        %v743 = vld [vmem:[%s642 + $0x10] sm:$0xff]
        %v744 = vld [vmem:[%s642 + $0x18] sm:$0xff]
        %v745 = vld [vmem:[%s642 + $0x20] sm:$0xff]
        %v746 = vld [vmem:[%s642 + $0x28] sm:$0xff]
        %v747 = vld [vmem:[%s642 + $0x30] sm:$0xff]
        %v748 = vld [vmem:[%s642 + $0x38] sm:$0xff]
        %v749 = vld [vmem:[%s642 + $0x40] sm:$0xff]
        %v750 = vld [vmem:[%s642 + $0x48] sm:$0xff]
        %v751 = vld [vmem:[%s642 + $0x50] sm:$0xff]
        %v752 = vld [vmem:[%s642 + $0x58] sm:$0xff]
        %v753 = vld [vmem:[%s1] sm:$0xff]
        %v754 = vld [vmem:[%s1 + $0x8] sm:$0xff]
        %v755 = vld [vmem:[%s1 + $0x10] sm:$0xff]
        %v756 = vld [vmem:[%s1 + $0x18] sm:$0xff]
        %v757 = vld [vmem:[%s1 + $0x20] sm:$0xff]
        %v758 = vld [vmem:[%s1 + $0x28] sm:$0xff]
        %v759 = vld [vmem:[%s1 + $0x30] sm:$0xff]
        %v760 = vld [vmem:[%s1 + $0x38] sm:$0xff]
        %v761 = vld [vmem:[%s1 + $0x40] sm:$0xff]
        %v762 = vld [vmem:[%s1 + $0x48] sm:$0xff]
        %v763 = vld [vmem:[%s1 + $0x50] sm:$0xff]
        %v764 = vld [vmem:[%s1 + $0x58] sm:$0xff]
        %v765 = vadd.f32 %v741, %v753
        %v766 = vadd.f32 %v742, %v754
        %v767 = vadd.f32 %v743, %v755
        %v768 = vadd.f32 %v744, %v756
        %v769 = vadd.f32 %v745, %v757
        %v770 = vadd.f32 %v746, %v758
        %v771 = vadd.f32 %v747, %v759
        %v772 = vadd.f32 %v748, %v760
        %v773 = vadd.f32 %v749, %v761
        %v774 = vadd.f32 %v750, %v762
        %v775 = vadd.f32 %v751, %v763
        %v776 = vadd.f32 %v752, %v764
        %v777 = vld [vmem:[#allocation22] sm:$0xff]
        %v778 = vld [vmem:[#allocation22 + $0x8] sm:$0xff]
        %v779 = vld [vmem:[#allocation22 + $0x10] sm:$0xff]
        %v780 = vld [vmem:[#allocation22 + $0x18] sm:$0xff]
        %v781 = vld [vmem:[#allocation22 + $0x20] sm:$0xff]
        %v782 = vld [vmem:[#allocation22 + $0x28] sm:$0xff]
        %v783 = vld [vmem:[#allocation22 + $0x30] sm:$0xff]
        %v784 = vld [vmem:[#allocation22 + $0x38] sm:$0xff]
        %v785 = vld [vmem:[#allocation22 + $0x40] sm:$0xff]
        %v786 = vld [vmem:[#allocation22 + $0x48] sm:$0xff]
        %v787 = vld [vmem:[#allocation22 + $0x50] sm:$0xff]
        %v788 = vld [vmem:[#allocation22 + $0x58] sm:$0xff]
        %801 = vrot.lane.b32.xlu0 %v765, 127
        %v802 = vpop.permute.xlu0 %801
        %803 = vrot.lane.b32.xlu0 %v766, 127
        %v804 = vpop.permute.xlu0 %803
        %805 = vrot.lane.b32.xlu0 %v767, 127
        %v806 = vpop.permute.xlu0 %805
        %807 = vrot.lane.b32.xlu0 %v768, 127
        %v808 = vpop.permute.xlu0 %807
        %809 = vrot.lane.b32.xlu0 %v769, 127
        %v810 = vpop.permute.xlu0 %809
        %811 = vrot.lane.b32.xlu0 %v770, 127
        %v812 = vpop.permute.xlu0 %811
        %813 = vrot.lane.b32.xlu0 %v771, 127
        %v814 = vpop.permute.xlu0 %813
        %815 = vrot.lane.b32.xlu0 %v772, 127
        %v816 = vpop.permute.xlu0 %815
        %817 = vrot.lane.b32.xlu0 %v773, 127
        %v818 = vpop.permute.xlu0 %817
        %819 = vrot.lane.b32.xlu0 %v774, 127
        %v820 = vpop.permute.xlu0 %819
        %821 = vrot.lane.b32.xlu0 %v775, 127
        %v822 = vpop.permute.xlu0 %821
        %823 = vrot.lane.b32.xlu0 %v776, 127
        %v824 = vpop.permute.xlu0 %823
        %837 = vrot.lane.b32.xlu0 %v765, 126
        %v838 = vpop.permute.xlu0 %837
        %839 = vrot.lane.b32.xlu0 %v766, 126
        %v840 = vpop.permute.xlu0 %839
        %841 = vrot.lane.b32.xlu0 %v767, 126
        %v842 = vpop.permute.xlu0 %841
        %843 = vrot.lane.b32.xlu0 %v768, 126
        %v844 = vpop.permute.xlu0 %843
        %845 = vrot.lane.b32.xlu0 %v769, 126
        %v846 = vpop.permute.xlu0 %845
        %847 = vrot.lane.b32.xlu0 %v770, 126
        %v848 = vpop.permute.xlu0 %847
        %849 = vrot.lane.b32.xlu0 %v771, 126
        %v850 = vpop.permute.xlu0 %849
        %851 = vrot.lane.b32.xlu0 %v772, 126
        %v852 = vpop.permute.xlu0 %851
        %853 = vrot.lane.b32.xlu0 %v773, 126
        %v854 = vpop.permute.xlu0 %853
        %855 = vrot.lane.b32.xlu0 %v774, 126
        %v856 = vpop.permute.xlu0 %855
        %857 = vrot.lane.b32.xlu0 %v775, 126
        %v858 = vpop.permute.xlu0 %857
        %859 = vrot.lane.b32.xlu0 %v776, 126
        %v860 = vpop.permute.xlu0 %859
        %v873 = vld [vmem:[%s2] sm:$0xff]
        %v874 = vld [vmem:[%s2 + $0x8] sm:$0xff]
        %v875 = vld [vmem:[%s2 + $0x10] sm:$0xff]
        %v876 = vld [vmem:[%s2 + $0x18] sm:$0xff]
        %v877 = vld [vmem:[%s2 + $0x20] sm:$0xff]
        %v878 = vld [vmem:[%s2 + $0x28] sm:$0xff]
        %v879 = vld [vmem:[%s2 + $0x30] sm:$0xff]
        %v880 = vld [vmem:[%s2 + $0x38] sm:$0xff]
        %v881 = vld [vmem:[%s2 + $0x40] sm:$0xff]
        %v882 = vld [vmem:[%s2 + $0x48] sm:$0xff]
        %v883 = vld [vmem:[%s2 + $0x50] sm:$0xff]
        %v884 = vld [vmem:[%s2 + $0x58] sm:$0xff]
        %v885 = vld [vmem:[%s2 + $0x60] sm:$0xff]
        %v886 = vld [vmem:[%s2 + $0x68] sm:$0xff]
        %v887 = vld [vmem:[%s2 + $0x70] sm:$0xff]
        %v888 = vld [vmem:[%s2 + $0x78] sm:$0xff]
        %v889 = vld [vmem:[%s2 + $0x80] sm:$0xff]
        %v890 = vld [vmem:[%s2 + $0x88] sm:$0xff]
        %v891 = vld [vmem:[%s2 + $0x90] sm:$0xff]
        %v892 = vld [vmem:[%s2 + $0x98] sm:$0xff]
        %v893 = vld [vmem:[%s2 + $0xa0] sm:$0xff]
        %v894 = vld [vmem:[%s2 + $0xa8] sm:$0xff]
        %v895 = vld [vmem:[%s2 + $0xb0] sm:$0xff]
        %v896 = vld [vmem:[%s2 + $0xb8] sm:$0xff]
        %v897 = vld [vmem:[%s2 + $0xc0] sm:$0xff]
        %v898 = vld [vmem:[%s2 + $0xc8] sm:$0xff]
        %v899 = vld [vmem:[%s2 + $0xd0] sm:$0xff]
        %v900 = vld [vmem:[%s2 + $0xd8] sm:$0xff]
        %v901 = vld [vmem:[%s2 + $0xe0] sm:$0xff]
        %v902 = vld [vmem:[%s2 + $0xe8] sm:$0xff]
        %v903 = vld [vmem:[%s2 + $0xf0] sm:$0xff]
        %v904 = vld [vmem:[%s2 + $0xf8] sm:$0xff]
        %v905 = vld [vmem:[%s2 + $0x100] sm:$0xff]
        %v906 = vld [vmem:[%s2 + $0x108] sm:$0xff]
        %v907 = vld [vmem:[%s2 + $0x110] sm:$0xff]
        %v908 = vld [vmem:[%s2 + $0x118] sm:$0xff]
        %v909 = vld [vmem:[%s3] sm:$0xff]
        %v910 = vld [vmem:[%s3 + $0x8] sm:$0xff]
        %v911 = vld [vmem:[%s3 + $0x10] sm:$0xff]
        %v912 = vld [vmem:[%s3 + $0x18] sm:$0xff]
        %v913 = vld [vmem:[%s3 + $0x20] sm:$0xff]
        %v914 = vld [vmem:[%s3 + $0x28] sm:$0xff]
        %v915 = vld [vmem:[%s3 + $0x30] sm:$0xff]
        %v916 = vld [vmem:[%s3 + $0x38] sm:$0xff]
        %v917 = vld [vmem:[%s3 + $0x40] sm:$0xff]
        %v918 = vld [vmem:[%s3 + $0x48] sm:$0xff]
        %v919 = vld [vmem:[%s3 + $0x50] sm:$0xff]
        %v920 = vld [vmem:[%s3 + $0x58] sm:$0xff]
        %922 = vset.pattern.permute.xlu0 0
        %923 = vperm.xlu0 %922, %v909
        %v924 = vpop.permute.xlu0 %923
        %927 = vset.pattern.permute.xlu0 0
        %928 = vperm.xlu0 %927, %v910
        %v929 = vpop.permute.xlu0 %928
        %932 = vset.pattern.permute.xlu0 0
        %933 = vperm.xlu0 %932, %v911
        %v934 = vpop.permute.xlu0 %933
        %937 = vset.pattern.permute.xlu0 0
        %938 = vperm.xlu0 %937, %v912
        %v939 = vpop.permute.xlu0 %938
        %942 = vset.pattern.permute.xlu0 0
        %943 = vperm.xlu0 %942, %v913
        %v944 = vpop.permute.xlu0 %943
        %947 = vset.pattern.permute.xlu0 0
        %948 = vperm.xlu0 %947, %v914
        %v949 = vpop.permute.xlu0 %948
        %952 = vset.pattern.permute.xlu0 0
        %953 = vperm.xlu0 %952, %v915
        %v954 = vpop.permute.xlu0 %953
        %957 = vset.pattern.permute.xlu0 0
        %958 = vperm.xlu0 %957, %v916
        %v959 = vpop.permute.xlu0 %958
        %962 = vset.pattern.permute.xlu0 0
        %963 = vperm.xlu0 %962, %v917
        %v964 = vpop.permute.xlu0 %963
        %967 = vset.pattern.permute.xlu0 0
        %968 = vperm.xlu0 %967, %v918
        %v969 = vpop.permute.xlu0 %968
        %972 = vset.pattern.permute.xlu0 0
        %973 = vperm.xlu0 %972, %v919
        %v974 = vpop.permute.xlu0 %973
        %977 = vset.pattern.permute.xlu0 0
        %978 = vperm.xlu0 %977, %v920
        %v979 = vpop.permute.xlu0 %978
        %vm981 = vcmask 261120
        %v983 = vsel %vm981, %v875, 0
        %v986 = vsel %vm981, %v878, 0
        %v989 = vsel %vm981, %v881, 0
        %v992 = vsel %vm981, %v884, 0
        %v995 = vsel %vm981, %v887, 0
        %v998 = vsel %vm981, %v890, 0
        %v1001 = vsel %vm981, %v893, 0
        %v1004 = vsel %vm981, %v896, 0
        %v1007 = vsel %vm981, %v899, 0
        %v1010 = vsel %vm981, %v902, 0
        %v1013 = vsel %vm981, %v905, 0
        %v1016 = vsel %vm981, %v908, 0
        %1018 = vmatprep.subr.mxu0 0.0
        %1019 = vmatpush1.msra.mxu0 %v765
        %1020 = vmatprep.subr.mxu0 0.0
        %1021 = vmatpush1.msra.mxu0 %v766
        %1022 = vmatprep.subr.mxu0 0.0
        %1023 = vmatpush1.msra.mxu0 %v767
        %1024 = vmatprep.subr.mxu0 0.0
        %1025 = vmatpush1.msra.mxu0 %v768
        %1026 = vmatprep.subr.mxu0 0.0
        %1027 = vmatpush1.msra.mxu0 %v769
        %1028 = vmatprep.subr.mxu0 0.0
        %1029 = vmatpush1.msra.mxu0 %v770
        %1030 = vmatprep.subr.mxu0 0.0
        %1031 = vmatpush1.msra.mxu0 %v771
        %1032 = vmatprep.subr.mxu0 0.0
        %1033 = vmatpush1.msra.mxu0 %v772
        %1034 = vmatprep.subr.mxu0 0.0
        %1035 = vmatpush1.msra.mxu0 %v773
        %1036 = vmatprep.subr.mxu0 0.0
        %1037 = vmatpush1.msra.mxu0 %v774
        %1038 = vmatprep.subr.mxu0 0.0
        %1039 = vmatpush1.msra.mxu0 %v775
        %1040 = vmatprep.subr.mxu0 0.0
        %1041 = vmatpush1.msra.mxu0 %v776
        %1042 = vmatprep.subr.mxu0 0.0
        %1043 = vmatpush1.msra.mxu0 %v802
        %1044 = vmatprep.subr.mxu0 0.0
        %1045 = vmatpush1.msra.mxu0 %v804
        %1046 = vmatprep.subr.mxu0 0.0
        %1047 = vmatpush1.msra.mxu0 %v806
        %1048 = vmatprep.subr.mxu0 0.0
        %1049 = vmatpush1.msra.mxu0 %v808
        %1050 = vmatprep.subr.mxu0 0.0
        %1051 = vmatpush1.msra.mxu0 %v810
        %1052 = vmatprep.subr.mxu0 0.0
        %1053 = vmatpush1.msra.mxu0 %v812
        %1054 = vmatprep.subr.mxu0 0.0
        %1055 = vmatpush1.msra.mxu0 %v814
        %1056 = vmatprep.subr.mxu0 0.0
        %1057 = vmatpush1.msra.mxu0 %v816
        %1058 = vmatprep.subr.mxu0 0.0
        %1059 = vmatpush1.msra.mxu0 %v818
        %1060 = vmatprep.subr.mxu0 0.0
        %1061 = vmatpush1.msra.mxu0 %v820
        %1062 = vmatprep.subr.mxu0 0.0
        %1063 = vmatpush1.msra.mxu0 %v822
        %1064 = vmatprep.subr.mxu0 0.0
        %1065 = vmatpush1.msra.mxu0 %v824
        %1066 = vmatprep.subr.mxu0 0.0
        %1067 = vmatpush1.msra.mxu0 %v838
        %1068 = vmatprep.subr.mxu0 0.0
        %1069 = vmatpush1.msra.mxu0 %v840
        %1070 = vmatprep.subr.mxu0 0.0
        %1071 = vmatpush1.msra.mxu0 %v842
        %1072 = vmatprep.subr.mxu0 0.0
        %1073 = vmatpush1.msra.mxu0 %v844
        %1074 = vmatprep.subr.mxu0 0.0
        %1075 = vmatpush1.msra.mxu0 %v846
        %1076 = vmatprep.subr.mxu0 0.0
        %1077 = vmatpush1.msra.mxu0 %v848
        %1078 = vmatprep.subr.mxu0 0.0
        %1079 = vmatpush1.msra.mxu0 %v850
        %1080 = vmatprep.subr.mxu0 0.0
        %1081 = vmatpush1.msra.mxu0 %v852
        %1082 = vmatprep.mubr.f32.mxu0 %v874
        %1083 = vmatmul.mubr.f32.gmra.mrb[0].mxu0 %v873
        %v1084 = vpop.f32.mrb[0].mxu0
        %v1085 = vadd.f32 %v924, %v1084
        %v1086 = vpop.f32.mrb[0].mxu0
        %1087 = vmatprep.mubr.f32.mxu0 %v877
        %1088 = vmatmul.mubr.f32.gmra.mrb[0].mxu0 %v876
        %v1089 = vpop.f32.mrb[0].mxu0
        %v1090 = vadd.f32 %v929, %v1089
        %v1091 = vpop.f32.mrb[0].mxu0
        %1092 = vmatprep.mubr.f32.mxu0 %v880
        %1093 = vmatmul.mubr.f32.gmra.mrb[0].mxu0 %v879
        %v1094 = vpop.f32.mrb[0].mxu0
        %v1095 = vadd.f32 %v934, %v1094
        %v1096 = vpop.f32.mrb[0].mxu0
        %1097 = vmatprep.mubr.f32.mxu0 %v883
        %1098 = vmatmul.mubr.f32.gmra.mrb[0].mxu0 %v882
        %v1099 = vpop.f32.mrb[0].mxu0
        %v1100 = vadd.f32 %v939, %v1099
        %v1101 = vpop.f32.mrb[0].mxu0
        %1102 = vmatprep.mubr.f32.mxu0 %v886
        %1103 = vmatmul.mubr.f32.gmra.mrb[0].mxu0 %v885
        %v1104 = vpop.f32.mrb[0].mxu0
        %v1105 = vadd.f32 %v944, %v1104
        %v1106 = vpop.f32.mrb[0].mxu0
        %1107 = vmatprep.mubr.f32.mxu0 %v889
        %1108 = vmatmul.mubr.f32.gmra.mrb[0].mxu0 %v888
        %v1109 = vpop.f32.mrb[0].mxu0
        %v1110 = vadd.f32 %v949, %v1109
        %v1111 = vpop.f32.mrb[0].mxu0
        %1112 = vmatprep.mubr.f32.mxu0 %v892
        %1113 = vmatmul.mubr.f32.gmra.mrb[0].mxu0 %v891
        %v1114 = vpop.f32.mrb[0].mxu0
        %v1115 = vadd.f32 %v954, %v1114
        %v1116 = vpop.f32.mrb[0].mxu0
        %1117 = vmatprep.mubr.f32.mxu0 %v895
        %1118 = vmatmul.mubr.f32.gmra.mrb[0].mxu0 %v894
        %v1119 = vpop.f32.mrb[0].mxu0
        %v1120 = vadd.f32 %v959, %v1119
        %v1121 = vpop.f32.mrb[0].mxu0
        %1122 = vmatprep.mubr.f32.mxu0 %v898
        %1123 = vmatmul.mubr.f32.gmra.mrb[0].mxu0 %v897
        %v1124 = vpop.f32.mrb[0].mxu0
        %v1125 = vadd.f32 %v964, %v1124
        %v1126 = vpop.f32.mrb[0].mxu0
        %1127 = vmatprep.mubr.f32.mxu0 %v901
        %1128 = vmatmul.mubr.f32.gmra.mrb[0].mxu0 %v900
        %v1129 = vpop.f32.mrb[0].mxu0
        %v1130 = vadd.f32 %v969, %v1129
        %v1131 = vpop.f32.mrb[0].mxu0
        %1132 = vmatprep.mubr.f32.mxu0 %v904
        %1133 = vmatmul.mubr.f32.gmra.mrb[0].mxu0 %v903
        %v1134 = vpop.f32.mrb[0].mxu0
        %v1135 = vadd.f32 %v974, %v1134
        %v1136 = vpop.f32.mrb[0].mxu0
        %1137 = vmatprep.mubr.f32.mxu0 %v907
        %1138 = vmatmul.mubr.f32.gmra.mrb[0].mxu0 %v906
        %v1139 = vpop.f32.mrb[0].mxu0
        %v1140 = vadd.f32 %v979, %v1139
        %v1141 = vpop.f32.mrb[0].mxu0
        %1142 = vdwg.mxu0
        %1143 = vmatprep.subr.mxu0 0.0
        %1144 = vmatpush1.msra.mxu0 %v854
        %1145 = vmatprep.subr.mxu0 0.0
        %1146 = vmatpush1.msra.mxu0 %v856
        %1147 = vmatprep.subr.mxu0 0.0
        %1148 = vmatpush1.msra.mxu0 %v858
        %1149 = vmatprep.subr.mxu0 0.0
        %1150 = vmatpush1.msra.mxu0 %v860
        %1151 = vmatprep.subr.mxu0 0.0
        %1152 = vmatpush1.msra.mxu0 0.0
        %1153 = vmatprep.subr.mxu0 0.0
        %1154 = vmatpush1.msra.mxu0 0.0
        %1155 = vmatprep.subr.mxu0 0.0
        %1156 = vmatpush1.msra.mxu0 0.0
        %1157 = vmatprep.subr.mxu0 0.0
        %1158 = vmatpush1.msra.mxu0 0.0
        %1159 = vmatprep.subr.mxu0 0.0
        %1160 = vmatpush1.msra.mxu0 0.0
        %1161 = vmatprep.subr.mxu0 0.0
        %1162 = vmatpush1.msra.mxu0 0.0
        %1163 = vmatprep.subr.mxu0 0.0
        %1164 = vmatpush1.msra.mxu0 0.0
        %1165 = vmatprep.subr.mxu0 0.0
        %1166 = vmatpush1.msra.mxu0 0.0
        %1167 = vmatprep.subr.mxu0 0.0
        %1168 = vmatpush1.msra.mxu0 0.0
        %1169 = vmatprep.subr.mxu0 0.0
        %1170 = vmatpush1.msra.mxu0 0.0
        %1171 = vmatprep.subr.mxu0 0.0
        %1172 = vmatpush1.msra.mxu0 0.0
        %1173 = vmatprep.subr.mxu0 0.0
        %1174 = vmatpush1.msra.mxu0 0.0
        %1175 = vmatprep.subr.mxu0 0.0
        %1176 = vmatpush1.msra.mxu0 0.0
        %1177 = vmatprep.subr.mxu0 0.0
        %1178 = vmatpush1.msra.mxu0 0.0
        %1179 = vmatprep.subr.mxu0 0.0
        %1180 = vmatpush1.msra.mxu0 0.0
        %1181 = vmatprep.subr.mxu0 0.0
        %1182 = vmatpush1.msra.mxu0 0.0
        %1183 = vmatprep.subr.mxu0 0.0
        %1184 = vmatpush1.msra.mxu0 0.0
        %1185 = vmatprep.subr.mxu0 0.0
        %1186 = vmatpush1.msra.mxu0 0.0
        %1187 = vmatprep.subr.mxu0 0.0
        %1188 = vmatpush1.msra.mxu0 0.0
        %1189 = vmatprep.subr.mxu0 0.0
        %1190 = vmatpush1.msra.mxu0 0.0
        %1191 = vmatprep.subr.mxu0 0.0
        %1192 = vmatpush1.msra.mxu0 0.0
        %1193 = vmatprep.subr.mxu0 0.0
        %1194 = vmatpush1.msra.mxu0 0.0
        %1195 = vmatprep.subr.mxu0 0.0
        %1196 = vmatpush1.msra.mxu0 0.0
        %1197 = vmatprep.subr.mxu0 0.0
        %1198 = vmatpush1.msra.mxu0 0.0
        %1199 = vmatprep.subr.mxu0 0.0
        %1200 = vmatpush1.msra.mxu0 0.0
        %1201 = vmatprep.subr.mxu0 0.0
        %1202 = vmatpush1.msra.mxu0 0.0
        %1203 = vmatprep.subr.mxu0 0.0
        %1204 = vmatpush1.msra.mxu0 0.0
        %1205 = vmatprep.subr.mxu0 0.0
        %1206 = vmatpush1.msra.mxu0 0.0
        %1207 = vmatprep.mubr.f32.mxu0 0.0
        %1208 = vmatmul.mubr.f32.gmra.mrb[0].mxu0 %v983
        %v1209 = vpop.f32.mrb[0].mxu0
        %v1210 = vadd.f32 %v1085, %v1209
        %v1211 = vpop.f32.mrb[0].mxu0
        %1212 = vmatprep.mubr.f32.mxu0 0.0
        %1213 = vmatmul.mubr.f32.gmra.mrb[0].mxu0 %v986
        %v1214 = vpop.f32.mrb[0].mxu0
        %v1215 = vadd.f32 %v1090, %v1214
        %v1216 = vpop.f32.mrb[0].mxu0
        %1217 = vmatprep.mubr.f32.mxu0 0.0
        %1218 = vmatmul.mubr.f32.gmra.mrb[0].mxu0 %v989
        %v1219 = vpop.f32.mrb[0].mxu0
        %v1220 = vadd.f32 %v1095, %v1219
        %v1221 = vpop.f32.mrb[0].mxu0
        %1222 = vmatprep.mubr.f32.mxu0 0.0
        %1223 = vmatmul.mubr.f32.gmra.mrb[0].mxu0 %v992
        %v1224 = vpop.f32.mrb[0].mxu0
        %v1225 = vadd.f32 %v1100, %v1224
        %v1226 = vpop.f32.mrb[0].mxu0
        %1227 = vmatprep.mubr.f32.mxu0 0.0
        %1228 = vmatmul.mubr.f32.gmra.mrb[0].mxu0 %v995
        %v1229 = vpop.f32.mrb[0].mxu0
        %v1230 = vadd.f32 %v1105, %v1229
        %v1231 = vpop.f32.mrb[0].mxu0
        %1232 = vmatprep.mubr.f32.mxu0 0.0
        %1233 = vmatmul.mubr.f32.gmra.mrb[0].mxu0 %v998
        %v1234 = vpop.f32.mrb[0].mxu0
        %v1235 = vadd.f32 %v1110, %v1234
        %v1236 = vpop.f32.mrb[0].mxu0
        %1237 = vmatprep.mubr.f32.mxu0 0.0
        %1238 = vmatmul.mubr.f32.gmra.mrb[0].mxu0 %v1001
        %v1239 = vpop.f32.mrb[0].mxu0
        %v1240 = vadd.f32 %v1115, %v1239
        %v1241 = vpop.f32.mrb[0].mxu0
        %1242 = vmatprep.mubr.f32.mxu0 0.0
        %1243 = vmatmul.mubr.f32.gmra.mrb[0].mxu0 %v1004
        %v1244 = vpop.f32.mrb[0].mxu0
        %v1245 = vadd.f32 %v1120, %v1244
        %v1246 = vpop.f32.mrb[0].mxu0
        %1247 = vmatprep.mubr.f32.mxu0 0.0
        %1248 = vmatmul.mubr.f32.gmra.mrb[0].mxu0 %v1007
        %v1249 = vpop.f32.mrb[0].mxu0
        %v1250 = vadd.f32 %v1125, %v1249
        %v1251 = vpop.f32.mrb[0].mxu0
        %1252 = vmatprep.mubr.f32.mxu0 0.0
        %1253 = vmatmul.mubr.f32.gmra.mrb[0].mxu0 %v1010
        %v1254 = vpop.f32.mrb[0].mxu0
        %v1255 = vadd.f32 %v1130, %v1254
        %v1256 = vpop.f32.mrb[0].mxu0
        %1257 = vmatprep.mubr.f32.mxu0 0.0
        %1258 = vmatmul.mubr.f32.gmra.mrb[0].mxu0 %v1013
        %v1259 = vpop.f32.mrb[0].mxu0
        %v1260 = vadd.f32 %v1135, %v1259
        %v1261 = vpop.f32.mrb[0].mxu0
        %1262 = vmatprep.mubr.f32.mxu0 0.0
        %1263 = vmatmul.mubr.f32.gmra.mrb[0].mxu0 %v1016
        %v1264 = vpop.f32.mrb[0].mxu0
        %v1265 = vadd.f32 %v1140, %v1264
        %v1266 = vpop.f32.mrb[0].mxu0
        %1267 = vdwg.mxu0
        %v1268 = vmul.f32 %v1210, 0.17677669
        %v1269 = vmul.f32 %v1215, 0.17677669
        %v1270 = vmul.f32 %v1220, 0.17677669
        %v1271 = vmul.f32 %v1225, 0.17677669
        %v1272 = vmul.f32 %v1230, 0.17677669
        %v1273 = vmul.f32 %v1235, 0.17677669
        %v1274 = vmul.f32 %v1240, 0.17677669
        %v1275 = vmul.f32 %v1245, 0.17677669
        %v1276 = vmul.f32 %v1250, 0.17677669
        %v1277 = vmul.f32 %v1255, 0.17677669
        %v1278 = vmul.f32 %v1260, 0.17677669
        %v1279 = vmul.f32 %v1265, 0.17677669
        %v1280 = vld [vmem:[#allocation5] sm:$0xff]
        %v1281 = vld [vmem:[#allocation5 + $0x8] sm:$0xff]
        %v1282 = vld [vmem:[#allocation5 + $0x10] sm:$0xff]
        %v1283 = vld [vmem:[#allocation5 + $0x18] sm:$0xff]
        %v1284 = vld [vmem:[#allocation5 + $0x20] sm:$0xff]
        %v1285 = vld [vmem:[#allocation5 + $0x28] sm:$0xff]
        %v1286 = vld [vmem:[#allocation5 + $0x30] sm:$0xff]
        %v1287 = vld [vmem:[#allocation5 + $0x38] sm:$0xff]
        %v1288 = vld [vmem:[#allocation5 + $0x40] sm:$0xff]
        %v1289 = vld [vmem:[#allocation5 + $0x48] sm:$0xff]
        %v1290 = vld [vmem:[#allocation5 + $0x50] sm:$0xff]
        %v1291 = vld [vmem:[#allocation5 + $0x58] sm:$0xff]
        %v1292 = vld [vmem:[#allocation5 + $0x60] sm:$0xff]
        %v1293 = vld [vmem:[#allocation5 + $0x68] sm:$0xff]
        %v1294 = vld [vmem:[#allocation5 + $0x70] sm:$0xff]
        %v1295 = vld [vmem:[#allocation5 + $0x78] sm:$0xff]
        %v1296 = vld [vmem:[#allocation5 + $0x80] sm:$0xff]
        %v1297 = vld [vmem:[#allocation5 + $0x88] sm:$0xff]
        %v1298 = vld [vmem:[#allocation5 + $0x90] sm:$0xff]
        %v1299 = vld [vmem:[#allocation5 + $0x98] sm:$0xff]
        %v1300 = vld [vmem:[#allocation5 + $0xa0] sm:$0xff]
        %v1301 = vld [vmem:[#allocation5 + $0xa8] sm:$0xff]
        %v1302 = vld [vmem:[#allocation5 + $0xb0] sm:$0xff]
        %v1303 = vld [vmem:[#allocation5 + $0xb8] sm:$0xff]
        %v1304 = vld [vmem:[#allocation5 + $0xc0] sm:$0xff]
        %v1305 = vld [vmem:[#allocation5 + $0xc8] sm:$0xff]
        %v1306 = vld [vmem:[#allocation5 + $0xd0] sm:$0xff]
        %v1307 = vld [vmem:[#allocation5 + $0xd8] sm:$0xff]
        %v1308 = vld [vmem:[#allocation5 + $0xe0] sm:$0xff]
        %v1309 = vld [vmem:[#allocation5 + $0xe8] sm:$0xff]
        %v1310 = vld [vmem:[#allocation5 + $0xf0] sm:$0xff]
        %v1311 = vld [vmem:[#allocation5 + $0xf8] sm:$0xff]
        %v1312 = vld [vmem:[#allocation5 + $0x100] sm:$0xff]
        %v1313 = vld [vmem:[#allocation5 + $0x108] sm:$0xff]
        %v1314 = vld [vmem:[#allocation5 + $0x110] sm:$0xff]
        %v1315 = vld [vmem:[#allocation5 + $0x118] sm:$0xff]
        %v1316 = vld [vmem:[%s5] sm:$0xff]
        %v1317 = vld [vmem:[%s5 + $0x8] sm:$0xff]
        %v1318 = vld [vmem:[%s5 + $0x10] sm:$0xff]
        %v1319 = vld [vmem:[%s5 + $0x18] sm:$0xff]
        %v1320 = vld [vmem:[%s5 + $0x20] sm:$0xff]
        %v1321 = vld [vmem:[%s5 + $0x28] sm:$0xff]
        %v1322 = vld [vmem:[%s5 + $0x30] sm:$0xff]
        %v1323 = vld [vmem:[%s5 + $0x38] sm:$0xff]
        %v1324 = vld [vmem:[%s5 + $0x40] sm:$0xff]
        %v1325 = vld [vmem:[%s5 + $0x48] sm:$0xff]
        %v1326 = vld [vmem:[%s5 + $0x50] sm:$0xff]
        %v1327 = vld [vmem:[%s5 + $0x58] sm:$0xff]
        %1329 = vset.pattern.permute.xlu0 0
        %1330 = vperm.xlu0 %1329, %v1316
        %v1331 = vpop.permute.xlu0 %1330
        %1334 = vset.pattern.permute.xlu0 0
        %1335 = vperm.xlu0 %1334, %v1317
        %v1336 = vpop.permute.xlu0 %1335
        %1339 = vset.pattern.permute.xlu0 0
        %1340 = vperm.xlu0 %1339, %v1318
        %v1341 = vpop.permute.xlu0 %1340
        %1344 = vset.pattern.permute.xlu0 0
        %1345 = vperm.xlu0 %1344, %v1319
        %v1346 = vpop.permute.xlu0 %1345
        %1349 = vset.pattern.permute.xlu0 0
        %1350 = vperm.xlu0 %1349, %v1320
        %v1351 = vpop.permute.xlu0 %1350
        %1354 = vset.pattern.permute.xlu0 0
        %1355 = vperm.xlu0 %1354, %v1321
        %v1356 = vpop.permute.xlu0 %1355
        %1359 = vset.pattern.permute.xlu0 0
        %1360 = vperm.xlu0 %1359, %v1322
        %v1361 = vpop.permute.xlu0 %1360
        %1364 = vset.pattern.permute.xlu0 0
        %1365 = vperm.xlu0 %1364, %v1323
        %v1366 = vpop.permute.xlu0 %1365
        %1369 = vset.pattern.permute.xlu0 0
        %1370 = vperm.xlu0 %1369, %v1324
        %v1371 = vpop.permute.xlu0 %1370
        %1374 = vset.pattern.permute.xlu0 0
        %1375 = vperm.xlu0 %1374, %v1325
        %v1376 = vpop.permute.xlu0 %1375
        %1379 = vset.pattern.permute.xlu0 0
        %1380 = vperm.xlu0 %1379, %v1326
        %v1381 = vpop.permute.xlu0 %1380
        %1384 = vset.pattern.permute.xlu0 0
        %1385 = vperm.xlu0 %1384, %v1327
        %v1386 = vpop.permute.xlu0 %1385
        %v1389 = vsel %vm981, %v1282, 0
        %v1392 = vsel %vm981, %v1285, 0
        %v1395 = vsel %vm981, %v1288, 0
        %v1398 = vsel %vm981, %v1291, 0
        %v1401 = vsel %vm981, %v1294, 0
        %v1404 = vsel %vm981, %v1297, 0
        %v1407 = vsel %vm981, %v1300, 0
        %v1410 = vsel %vm981, %v1303, 0
        %v1413 = vsel %vm981, %v1306, 0
        %v1416 = vsel %vm981, %v1309, 0
        %v1419 = vsel %vm981, %v1312, 0
        %v1422 = vsel %vm981, %v1315, 0
        %1424 = vmatprep.subr.mxu0 0.0
        %1425 = vmatpush1.msra.mxu0 %v765
        %1426 = vmatprep.subr.mxu0 0.0
        %1427 = vmatpush1.msra.mxu0 %v766
        %1428 = vmatprep.subr.mxu0 0.0
        %1429 = vmatpush1.msra.mxu0 %v767
        %1430 = vmatprep.subr.mxu0 0.0
        %1431 = vmatpush1.msra.mxu0 %v768
        %1432 = vmatprep.subr.mxu0 0.0
        %1433 = vmatpush1.msra.mxu0 %v769
        %1434 = vmatprep.subr.mxu0 0.0
        %1435 = vmatpush1.msra.mxu0 %v770
        %1436 = vmatprep.subr.mxu0 0.0
        %1437 = vmatpush1.msra.mxu0 %v771
        %1438 = vmatprep.subr.mxu0 0.0
        %1439 = vmatpush1.msra.mxu0 %v772
        %1440 = vmatprep.subr.mxu0 0.0
        %1441 = vmatpush1.msra.mxu0 %v773
        %1442 = vmatprep.subr.mxu0 0.0
        %1443 = vmatpush1.msra.mxu0 %v774
        %1444 = vmatprep.subr.mxu0 0.0
        %1445 = vmatpush1.msra.mxu0 %v775
        %1446 = vmatprep.subr.mxu0 0.0
        %1447 = vmatpush1.msra.mxu0 %v776
        %1448 = vmatprep.subr.mxu0 0.0
        %1449 = vmatpush1.msra.mxu0 %v802
        %1450 = vmatprep.subr.mxu0 0.0
        %1451 = vmatpush1.msra.mxu0 %v804
        %1452 = vmatprep.subr.mxu0 0.0
        %1453 = vmatpush1.msra.mxu0 %v806
        %1454 = vmatprep.subr.mxu0 0.0
        %1455 = vmatpush1.msra.mxu0 %v808
        %1456 = vmatprep.subr.mxu0 0.0
        %1457 = vmatpush1.msra.mxu0 %v810
        %1458 = vmatprep.subr.mxu0 0.0
        %1459 = vmatpush1.msra.mxu0 %v812
        %1460 = vmatprep.subr.mxu0 0.0
        %1461 = vmatpush1.msra.mxu0 %v814
        %1462 = vmatprep.subr.mxu0 0.0
        %1463 = vmatpush1.msra.mxu0 %v816
        %1464 = vmatprep.subr.mxu0 0.0
        %1465 = vmatpush1.msra.mxu0 %v818
        %1466 = vmatprep.subr.mxu0 0.0
        %1467 = vmatpush1.msra.mxu0 %v820
        %1468 = vmatprep.subr.mxu0 0.0
        %1469 = vmatpush1.msra.mxu0 %v822
        %1470 = vmatprep.subr.mxu0 0.0
        %1471 = vmatpush1.msra.mxu0 %v824
        %1472 = vmatprep.subr.mxu0 0.0
        %1473 = vmatpush1.msra.mxu0 %v838
        %1474 = vmatprep.subr.mxu0 0.0
        %1475 = vmatpush1.msra.mxu0 %v840
        %1476 = vmatprep.subr.mxu0 0.0
        %1477 = vmatpush1.msra.mxu0 %v842
        %1478 = vmatprep.subr.mxu0 0.0
        %1479 = vmatpush1.msra.mxu0 %v844
        %1480 = vmatprep.subr.mxu0 0.0
        %1481 = vmatpush1.msra.mxu0 %v846
        %1482 = vmatprep.subr.mxu0 0.0
        %1483 = vmatpush1.msra.mxu0 %v848
        %1484 = vmatprep.subr.mxu0 0.0
        %1485 = vmatpush1.msra.mxu0 %v850
        %1486 = vmatprep.subr.mxu0 0.0
        %1487 = vmatpush1.msra.mxu0 %v852
        %1488 = vmatprep.mubr.f32.mxu0 %v1281
        %1489 = vmatmul.mubr.f32.gmra.mrb[0].mxu0 %v1280
        %v1490 = vpop.f32.mrb[0].mxu0
        %v1491 = vadd.f32 %v1331, %v1490
        %v1492 = vpop.f32.mrb[0].mxu0
        %1493 = vmatprep.mubr.f32.mxu0 %v1284
        %1494 = vmatmul.mubr.f32.gmra.mrb[0].mxu0 %v1283
        %v1495 = vpop.f32.mrb[0].mxu0
        %v1496 = vadd.f32 %v1336, %v1495
        %v1497 = vpop.f32.mrb[0].mxu0
        %1498 = vmatprep.mubr.f32.mxu0 %v1287
        %1499 = vmatmul.mubr.f32.gmra.mrb[0].mxu0 %v1286
        %v1500 = vpop.f32.mrb[0].mxu0
        %v1501 = vadd.f32 %v1341, %v1500
        %v1502 = vpop.f32.mrb[0].mxu0
        %1503 = vmatprep.mubr.f32.mxu0 %v1290
        %1504 = vmatmul.mubr.f32.gmra.mrb[0].mxu0 %v1289
        %v1505 = vpop.f32.mrb[0].mxu0
        %v1506 = vadd.f32 %v1346, %v1505
        %v1507 = vpop.f32.mrb[0].mxu0
        %1508 = vmatprep.mubr.f32.mxu0 %v1293
        %1509 = vmatmul.mubr.f32.gmra.mrb[0].mxu0 %v1292
        %v1510 = vpop.f32.mrb[0].mxu0
        %v1511 = vadd.f32 %v1351, %v1510
        %v1512 = vpop.f32.mrb[0].mxu0
        %1513 = vmatprep.mubr.f32.mxu0 %v1296
        %1514 = vmatmul.mubr.f32.gmra.mrb[0].mxu0 %v1295
        %v1515 = vpop.f32.mrb[0].mxu0
        %v1516 = vadd.f32 %v1356, %v1515
        %v1517 = vpop.f32.mrb[0].mxu0
        %1518 = vmatprep.mubr.f32.mxu0 %v1299
        %1519 = vmatmul.mubr.f32.gmra.mrb[0].mxu0 %v1298
        %v1520 = vpop.f32.mrb[0].mxu0
        %v1521 = vadd.f32 %v1361, %v1520
        %v1522 = vpop.f32.mrb[0].mxu0
        %1523 = vmatprep.mubr.f32.mxu0 %v1302
        %1524 = vmatmul.mubr.f32.gmra.mrb[0].mxu0 %v1301
        %v1525 = vpop.f32.mrb[0].mxu0
        %v1526 = vadd.f32 %v1366, %v1525
        %v1527 = vpop.f32.mrb[0].mxu0
        %1528 = vmatprep.mubr.f32.mxu0 %v1305
        %1529 = vmatmul.mubr.f32.gmra.mrb[0].mxu0 %v1304
        %v1530 = vpop.f32.mrb[0].mxu0
        %v1531 = vadd.f32 %v1371, %v1530
        %v1532 = vpop.f32.mrb[0].mxu0
        %1533 = vmatprep.mubr.f32.mxu0 %v1308
        %1534 = vmatmul.mubr.f32.gmra.mrb[0].mxu0 %v1307
        %v1535 = vpop.f32.mrb[0].mxu0
        %v1536 = vadd.f32 %v1376, %v1535
        %v1537 = vpop.f32.mrb[0].mxu0
        %1538 = vmatprep.mubr.f32.mxu0 %v1311
        %1539 = vmatmul.mubr.f32.gmra.mrb[0].mxu0 %v1310
        %v1540 = vpop.f32.mrb[0].mxu0
        %v1541 = vadd.f32 %v1381, %v1540
        %v1542 = vpop.f32.mrb[0].mxu0
        %1543 = vmatprep.mubr.f32.mxu0 %v1314
        %1544 = vmatmul.mubr.f32.gmra.mrb[0].mxu0 %v1313
        %v1545 = vpop.f32.mrb[0].mxu0
        %v1546 = vadd.f32 %v1386, %v1545
        %v1547 = vpop.f32.mrb[0].mxu0
        %1548 = vdwg.mxu0
        %1549 = vmatprep.subr.mxu0 0.0
        %1550 = vmatpush1.msra.mxu0 %v854
        %1551 = vmatprep.subr.mxu0 0.0
        %1552 = vmatpush1.msra.mxu0 %v856
        %1553 = vmatprep.subr.mxu0 0.0
        %1554 = vmatpush1.msra.mxu0 %v858
        %1555 = vmatprep.subr.mxu0 0.0
        %1556 = vmatpush1.msra.mxu0 %v860
        %1557 = vmatprep.subr.mxu0 0.0
        %1558 = vmatpush1.msra.mxu0 0.0
        %1559 = vmatprep.subr.mxu0 0.0
        %1560 = vmatpush1.msra.mxu0 0.0
        %1561 = vmatprep.subr.mxu0 0.0
        %1562 = vmatpush1.msra.mxu0 0.0
        %1563 = vmatprep.subr.mxu0 0.0
        %1564 = vmatpush1.msra.mxu0 0.0
        %1565 = vmatprep.subr.mxu0 0.0
        %1566 = vmatpush1.msra.mxu0 0.0
        %1567 = vmatprep.subr.mxu0 0.0
        %1568 = vmatpush1.msra.mxu0 0.0
        %1569 = vmatprep.subr.mxu0 0.0
        %1570 = vmatpush1.msra.mxu0 0.0
        %1571 = vmatprep.subr.mxu0 0.0
        %1572 = vmatpush1.msra.mxu0 0.0
        %1573 = vmatprep.subr.mxu0 0.0
        %1574 = vmatpush1.msra.mxu0 0.0
        %1575 = vmatprep.subr.mxu0 0.0
        %1576 = vmatpush1.msra.mxu0 0.0
        %1577 = vmatprep.subr.mxu0 0.0
        %1578 = vmatpush1.msra.mxu0 0.0
        %1579 = vmatprep.subr.mxu0 0.0
        %1580 = vmatpush1.msra.mxu0 0.0
        %1581 = vmatprep.subr.mxu0 0.0
        %1582 = vmatpush1.msra.mxu0 0.0
        %1583 = vmatprep.subr.mxu0 0.0
        %1584 = vmatpush1.msra.mxu0 0.0
        %1585 = vmatprep.subr.mxu0 0.0
        %1586 = vmatpush1.msra.mxu0 0.0
        %1587 = vmatprep.subr.mxu0 0.0
        %1588 = vmatpush1.msra.mxu0 0.0
        %1589 = vmatprep.subr.mxu0 0.0
        %1590 = vmatpush1.msra.mxu0 0.0
        %1591 = vmatprep.subr.mxu0 0.0
        %1592 = vmatpush1.msra.mxu0 0.0
        %1593 = vmatprep.subr.mxu0 0.0
        %1594 = vmatpush1.msra.mxu0 0.0
        %1595 = vmatprep.subr.mxu0 0.0
        %1596 = vmatpush1.msra.mxu0 0.0
        %1597 = vmatprep.subr.mxu0 0.0
        %1598 = vmatpush1.msra.mxu0 0.0
        %1599 = vmatprep.subr.mxu0 0.0
        %1600 = vmatpush1.msra.mxu0 0.0
        %1601 = vmatprep.subr.mxu0 0.0
        %1602 = vmatpush1.msra.mxu0 0.0
        %1603 = vmatprep.subr.mxu0 0.0
        %1604 = vmatpush1.msra.mxu0 0.0
        %1605 = vmatprep.subr.mxu0 0.0
        %1606 = vmatpush1.msra.mxu0 0.0
        %1607 = vmatprep.subr.mxu0 0.0
        %1608 = vmatpush1.msra.mxu0 0.0
        %1609 = vmatprep.subr.mxu0 0.0
        %1610 = vmatpush1.msra.mxu0 0.0
        %1611 = vmatprep.subr.mxu0 0.0
        %1612 = vmatpush1.msra.mxu0 0.0
        %1613 = vmatprep.mubr.f32.mxu0 0.0
        %1614 = vmatmul.mubr.f32.gmra.mrb[0].mxu0 %v1389
        %v1615 = vpop.f32.mrb[0].mxu0
        %v1616 = vadd.f32 %v1491, %v1615
        %v1617 = vpop.f32.mrb[0].mxu0
        %1618 = vmatprep.mubr.f32.mxu0 0.0
        %1619 = vmatmul.mubr.f32.gmra.mrb[0].mxu0 %v1392
        %v1620 = vpop.f32.mrb[0].mxu0
        %v1621 = vadd.f32 %v1496, %v1620
        %v1622 = vpop.f32.mrb[0].mxu0
        %1623 = vmatprep.mubr.f32.mxu0 0.0
        %1624 = vmatmul.mubr.f32.gmra.mrb[0].mxu0 %v1395
        %v1625 = vpop.f32.mrb[0].mxu0
        %v1626 = vadd.f32 %v1501, %v1625
        %v1627 = vpop.f32.mrb[0].mxu0
        %1628 = vmatprep.mubr.f32.mxu0 0.0
        %1629 = vmatmul.mubr.f32.gmra.mrb[0].mxu0 %v1398
        %v1630 = vpop.f32.mrb[0].mxu0
        %v1631 = vadd.f32 %v1506, %v1630
        %v1632 = vpop.f32.mrb[0].mxu0
        %1633 = vmatprep.mubr.f32.mxu0 0.0
        %1634 = vmatmul.mubr.f32.gmra.mrb[0].mxu0 %v1401
        %v1635 = vpop.f32.mrb[0].mxu0
        %v1636 = vadd.f32 %v1511, %v1635
        %v1637 = vpop.f32.mrb[0].mxu0
        %1638 = vmatprep.mubr.f32.mxu0 0.0
        %1639 = vmatmul.mubr.f32.gmra.mrb[0].mxu0 %v1404
        %v1640 = vpop.f32.mrb[0].mxu0
        %v1641 = vadd.f32 %v1516, %v1640
        %v1642 = vpop.f32.mrb[0].mxu0
        %1643 = vmatprep.mubr.f32.mxu0 0.0
        %1644 = vmatmul.mubr.f32.gmra.mrb[0].mxu0 %v1407
        %v1645 = vpop.f32.mrb[0].mxu0
        %v1646 = vadd.f32 %v1521, %v1645
        %v1647 = vpop.f32.mrb[0].mxu0
        %1648 = vmatprep.mubr.f32.mxu0 0.0
        %1649 = vmatmul.mubr.f32.gmra.mrb[0].mxu0 %v1410
        %v1650 = vpop.f32.mrb[0].mxu0
        %v1651 = vadd.f32 %v1526, %v1650
        %v1652 = vpop.f32.mrb[0].mxu0
        %1653 = vmatprep.mubr.f32.mxu0 0.0
        %1654 = vmatmul.mubr.f32.gmra.mrb[0].mxu0 %v1413
        %v1655 = vpop.f32.mrb[0].mxu0
        %v1656 = vadd.f32 %v1531, %v1655
        %v1657 = vpop.f32.mrb[0].mxu0
        %1658 = vmatprep.mubr.f32.mxu0 0.0
        %1659 = vmatmul.mubr.f32.gmra.mrb[0].mxu0 %v1416
        %v1660 = vpop.f32.mrb[0].mxu0
        %v1661 = vadd.f32 %v1536, %v1660
        %v1662 = vpop.f32.mrb[0].mxu0
        %1663 = vmatprep.mubr.f32.mxu0 0.0
        %1664 = vmatmul.mubr.f32.gmra.mrb[0].mxu0 %v1419
        %v1665 = vpop.f32.mrb[0].mxu0
        %v1666 = vadd.f32 %v1541, %v1665
        %v1667 = vpop.f32.mrb[0].mxu0
        %1668 = vmatprep.mubr.f32.mxu0 0.0
        %1669 = vmatmul.mubr.f32.gmra.mrb[0].mxu0 %v1422
        %v1670 = vpop.f32.mrb[0].mxu0
        %v1671 = vadd.f32 %v1546, %v1670
        %v1672 = vpop.f32.mrb[0].mxu0
        %1673 = vdwg.mxu0
        %v1674 = vld [vmem:[#allocation7] sm:$0xff]
        %v1675 = vld [vmem:[#allocation7 + $0x8] sm:$0xff]
        %v1676 = vld [vmem:[#allocation7 + $0x10] sm:$0xff]
        %v1677 = vld [vmem:[#allocation7 + $0x18] sm:$0xff]
        %v1678 = vld [vmem:[#allocation8] sm:$0x1]
        %v1680 = vlaneseq
        %v1681 = vshrl.u32 %v1680, 7
        %v1682 = vsub.s32 0, %v1681
        %v1683 = vrot.slane %v1678, %v1682
        %v1685 = vsel %vm981, %v765, 0
        %v1687 = vsel %vm981, %v766, 0
        %v1689 = vsel %vm981, %v767, 0
        %v1691 = vsel %vm981, %v768, 0
        %v1693 = vsel %vm981, %v769, 0
        %v1695 = vsel %vm981, %v770, 0
        %v1697 = vsel %vm981, %v771, 0
        %v1699 = vsel %vm981, %v772, 0
        %v1701 = vsel %vm981, %v773, 0
        %v1703 = vsel %vm981, %v774, 0
        %v1705 = vsel %vm981, %v775, 0
        %v1707 = vsel %vm981, %v776, 0
        %1709 = vmatprep.subr.mxu0 0.0
        %1710 = vmatpush1.msra.mxu0 %v1674
        %1711 = vmatprep.subr.mxu0 0.0
        %1712 = vmatpush1.msra.mxu0 %v1675
        %1713 = vmatprep.subr.mxu0 0.0
        %1714 = vmatpush1.msra.mxu0 %v1676
        %1715 = vmatprep.subr.mxu0 0.0
        %1716 = vmatpush1.msra.mxu0 %v1677
        %1717 = vmatprep.subr.mxu0 0.0
        %1718 = vmatpush1.msra.mxu0 0.0
        %1719 = vmatprep.subr.mxu0 0.0
        %1720 = vmatpush1.msra.mxu0 0.0
        %1721 = vmatprep.subr.mxu0 0.0
        %1722 = vmatpush1.msra.mxu0 0.0
        %1723 = vmatprep.subr.mxu0 0.0
        %1724 = vmatpush1.msra.mxu0 0.0
        %1725 = vmatprep.subr.mxu0 0.0
        %1726 = vmatpush1.msra.mxu0 0.0
        %1727 = vmatprep.subr.mxu0 0.0
        %1728 = vmatpush1.msra.mxu0 0.0
        %1729 = vmatprep.subr.mxu0 0.0
        %1730 = vmatpush1.msra.mxu0 0.0
        %1731 = vmatprep.subr.mxu0 0.0
        %1732 = vmatpush1.msra.mxu0 0.0
        %1733 = vmatprep.subr.mxu0 0.0
        %1734 = vmatpush1.msra.mxu0 0.0
        %1735 = vmatprep.subr.mxu0 0.0
        %1736 = vmatpush1.msra.mxu0 0.0
        %1737 = vmatprep.subr.mxu0 0.0
        %1738 = vmatpush1.msra.mxu0 0.0
        %1739 = vmatprep.subr.mxu0 0.0
        %1740 = vmatpush1.msra.mxu0 0.0
        %1741 = vmatprep.subr.mxu0 0.0
        %1742 = vmatpush1.msra.mxu0 0.0
        %1743 = vmatprep.subr.mxu0 0.0
        %1744 = vmatpush1.msra.mxu0 0.0
        %1745 = vmatprep.subr.mxu0 0.0
        %1746 = vmatpush1.msra.mxu0 0.0
        %1747 = vmatprep.subr.mxu0 0.0
        %1748 = vmatpush1.msra.mxu0 0.0
        %1749 = vmatprep.subr.mxu0 0.0
        %1750 = vmatpush1.msra.mxu0 0.0
        %1751 = vmatprep.subr.mxu0 0.0
        %1752 = vmatpush1.msra.mxu0 0.0
        %1753 = vmatprep.subr.mxu0 0.0
        %1754 = vmatpush1.msra.mxu0 0.0
        %1755 = vmatprep.subr.mxu0 0.0
        %1756 = vmatpush1.msra.mxu0 0.0
        %1757 = vmatprep.subr.mxu0 0.0
        %1758 = vmatpush1.msra.mxu0 0.0
        %1759 = vmatprep.subr.mxu0 0.0
        %1760 = vmatpush1.msra.mxu0 0.0
        %1761 = vmatprep.subr.mxu0 0.0
        %1762 = vmatpush1.msra.mxu0 0.0
        %1763 = vmatprep.subr.mxu0 0.0
        %1764 = vmatpush1.msra.mxu0 0.0
        %1765 = vmatprep.subr.mxu0 0.0
        %1766 = vmatpush1.msra.mxu0 0.0
        %1767 = vmatprep.subr.mxu0 0.0
        %1768 = vmatpush1.msra.mxu0 0.0
        %1769 = vmatprep.subr.mxu0 0.0
        %1770 = vmatpush1.msra.mxu0 0.0
        %1771 = vmatprep.subr.mxu0 0.0
        %1772 = vmatpush1.msra.mxu0 0.0
        %1773 = vmatprep.mubr.f32.mxu0 0.0
        %1774 = vmatmul.mubr.f32.gmra.mrb[0].mxu0 %v1685
        %v1775 = vpop.f32.mrb[0].mxu0
        %v1776 = vadd.f32 %v1683, %v1775
        %v1777 = vpop.f32.mrb[0].mxu0
        %1778 = vmatprep.mubr.f32.mxu0 0.0
        %1779 = vmatmul.mubr.f32.gmra.mrb[0].mxu0 %v1687
        %v1780 = vpop.f32.mrb[0].mxu0
        %v1781 = vadd.f32 %v1683, %v1780
        %v1782 = vpop.f32.mrb[0].mxu0
        %1783 = vmatprep.mubr.f32.mxu0 0.0
        %1784 = vmatmul.mubr.f32.gmra.mrb[0].mxu0 %v1689
        %v1785 = vpop.f32.mrb[0].mxu0
        %v1786 = vadd.f32 %v1683, %v1785
        %v1787 = vpop.f32.mrb[0].mxu0
        %1788 = vmatprep.mubr.f32.mxu0 0.0
        %1789 = vmatmul.mubr.f32.gmra.mrb[0].mxu0 %v1691
        %v1790 = vpop.f32.mrb[0].mxu0
        %v1791 = vadd.f32 %v1683, %v1790
        %v1792 = vpop.f32.mrb[0].mxu0
        %1793 = vmatprep.mubr.f32.mxu0 0.0
        %1794 = vmatmul.mubr.f32.gmra.mrb[0].mxu0 %v1693
        %v1795 = vpop.f32.mrb[0].mxu0
        %v1796 = vadd.f32 %v1683, %v1795
        %v1797 = vpop.f32.mrb[0].mxu0
        %1798 = vmatprep.mubr.f32.mxu0 0.0
        %1799 = vmatmul.mubr.f32.gmra.mrb[0].mxu0 %v1695
        %v1800 = vpop.f32.mrb[0].mxu0
        %v1801 = vadd.f32 %v1683, %v1800
        %v1802 = vpop.f32.mrb[0].mxu0
        %1803 = vmatprep.mubr.f32.mxu0 0.0
        %1804 = vmatmul.mubr.f32.gmra.mrb[0].mxu0 %v1697
        %v1805 = vpop.f32.mrb[0].mxu0
        %v1806 = vadd.f32 %v1683, %v1805
        %v1807 = vpop.f32.mrb[0].mxu0
        %1808 = vmatprep.mubr.f32.mxu0 0.0
        %1809 = vmatmul.mubr.f32.gmra.mrb[0].mxu0 %v1699
        %v1810 = vpop.f32.mrb[0].mxu0
        %v1811 = vadd.f32 %v1683, %v1810
        %v1812 = vpop.f32.mrb[0].mxu0
        %1813 = vmatprep.mubr.f32.mxu0 0.0
        %1814 = vmatmul.mubr.f32.gmra.mrb[0].mxu0 %v1701
        %v1815 = vpop.f32.mrb[0].mxu0
        %v1816 = vadd.f32 %v1683, %v1815
        %v1817 = vpop.f32.mrb[0].mxu0
        %1818 = vmatprep.mubr.f32.mxu0 0.0
        %1819 = vmatmul.mubr.f32.gmra.mrb[0].mxu0 %v1703
        %v1820 = vpop.f32.mrb[0].mxu0
        %v1821 = vadd.f32 %v1683, %v1820
        %v1822 = vpop.f32.mrb[0].mxu0
        %1823 = vmatprep.mubr.f32.mxu0 0.0
        %1824 = vmatmul.mubr.f32.gmra.mrb[0].mxu0 %v1705
        %v1825 = vpop.f32.mrb[0].mxu0
        %v1826 = vadd.f32 %v1683, %v1825
        %v1827 = vpop.f32.mrb[0].mxu0
        %1828 = vmatprep.mubr.f32.mxu0 0.0
        %1829 = vmatmul.mubr.f32.gmra.mrb[0].mxu0 %v1707
        %v1830 = vpop.f32.mrb[0].mxu0
        %v1831 = vadd.f32 %v1683, %v1830
        %v1832 = vpop.f32.mrb[0].mxu0
        %1833 = vdwg.mxu0
        %vm1834 = vcmask 244736
        %v1836 = vsel %vm1834, %v1268, 0
        %v1839 = vsel %vm1834, %v1269, 0
        %v1842 = vsel %vm1834, %v1270, 0
        %v1845 = vsel %vm1834, %v1271, 0
        %v1848 = vsel %vm1834, %v1272, 0
        %v1851 = vsel %vm1834, %v1273, 0
        %v1854 = vsel %vm1834, %v1274, 0
        %v1857 = vsel %vm1834, %v1275, 0
        %v1860 = vsel %vm1834, %v1276, 0
        %v1863 = vsel %vm1834, %v1277, 0
        %v1866 = vsel %vm1834, %v1278, 0
        %v1869 = vsel %vm1834, %v1279, 0
        %v1872 = vsel %vm1834, %v1616, 0
        %v1875 = vsel %vm1834, %v1621, 0
        %v1878 = vsel %vm1834, %v1626, 0
        %v1881 = vsel %vm1834, %v1631, 0
        %v1884 = vsel %vm1834, %v1636, 0
        %v1887 = vsel %vm1834, %v1641, 0
        %v1890 = vsel %vm1834, %v1646, 0
        %v1893 = vsel %vm1834, %v1651, 0
        %v1896 = vsel %vm1834, %v1656, 0
        %v1899 = vsel %vm1834, %v1661, 0
        %v1902 = vsel %vm1834, %v1666, 0
        %v1905 = vsel %vm1834, %v1671, 0
        %1907 = vmatprep.subr.mxu0 0.0
        %1908 = vmatpush1.xpose.msra.mxu0 %v1872
        %1909 = vmatprep.subr.mxu0 0.0
        %1910 = vmatpush1.xpose.msra.mxu0 %v1875
        %1911 = vmatprep.subr.mxu0 0.0
        %1912 = vmatpush1.xpose.msra.mxu0 %v1878
        %1913 = vmatprep.subr.mxu0 0.0
        %1914 = vmatpush1.xpose.msra.mxu0 %v1881
        %1915 = vmatprep.subr.mxu0 0.0
        %1916 = vmatpush1.xpose.msra.mxu0 %v1884
        %1917 = vmatprep.subr.mxu0 0.0
        %1918 = vmatpush1.xpose.msra.mxu0 %v1887
        %1919 = vmatprep.subr.mxu0 0.0
        %1920 = vmatpush1.xpose.msra.mxu0 %v1890
        %1921 = vmatprep.subr.mxu0 0.0
        %1922 = vmatpush1.xpose.msra.mxu0 %v1893
        %1923 = vmatprep.subr.mxu0 0.0
        %1924 = vmatpush1.xpose.msra.mxu0 %v1896
        %1925 = vmatprep.subr.mxu0 0.0
        %1926 = vmatpush1.xpose.msra.mxu0 %v1899
        %1927 = vmatprep.subr.mxu0 0.0
        %1928 = vmatpush1.xpose.msra.mxu0 %v1902
        %1929 = vmatprep.subr.mxu0 0.0
        %1930 = vmatpush1.xpose.msra.mxu0 %v1905
        %1931 = vmatprep.subr.mxu0 0.0
        %1932 = vmatpush1.xpose.msra.mxu0 0.0
        %1933 = vmatprep.subr.mxu0 0.0
        %1934 = vmatpush1.xpose.msra.mxu0 0.0
        %1935 = vmatprep.subr.mxu0 0.0
        %1936 = vmatpush1.xpose.msra.mxu0 0.0
        %1937 = vmatprep.subr.mxu0 0.0
        %1938 = vmatpush1.xpose.msra.mxu0 0.0
        %1939 = vmatprep.subr.mxu0 0.0
        %1940 = vmatpush1.xpose.msra.mxu0 0.0
        %1941 = vmatprep.subr.mxu0 0.0
        %1942 = vmatpush1.xpose.msra.mxu0 0.0
        %1943 = vmatprep.subr.mxu0 0.0
        %1944 = vmatpush1.xpose.msra.mxu0 0.0
        %1945 = vmatprep.subr.mxu0 0.0
        %1946 = vmatpush1.xpose.msra.mxu0 0.0
        %1947 = vmatprep.subr.mxu0 0.0
        %1948 = vmatpush1.xpose.msra.mxu0 0.0
        %1949 = vmatprep.subr.mxu0 0.0
        %1950 = vmatpush1.xpose.msra.mxu0 0.0
        %1951 = vmatprep.subr.mxu0 0.0
        %1952 = vmatpush1.xpose.msra.mxu0 0.0
        %1953 = vmatprep.subr.mxu0 0.0
        %1954 = vmatpush1.xpose.msra.mxu0 0.0
        %1955 = vmatprep.subr.mxu0 0.0
        %1956 = vmatpush1.xpose.msra.mxu0 0.0
        %1957 = vmatprep.subr.mxu0 0.0
        %1958 = vmatpush1.xpose.msra.mxu0 0.0
        %1959 = vmatprep.subr.mxu0 0.0
        %1960 = vmatpush1.xpose.msra.mxu0 0.0
        %1961 = vmatprep.subr.mxu0 0.0
        %1962 = vmatpush1.xpose.msra.mxu0 0.0
        %1963 = vmatprep.subr.mxu0 0.0
        %1964 = vmatpush1.xpose.msra.mxu0 0.0
        %1965 = vmatprep.subr.mxu0 0.0
        %1966 = vmatpush1.xpose.msra.mxu0 0.0
        %1967 = vmatprep.subr.mxu0 0.0
        %1968 = vmatpush1.xpose.msra.mxu0 0.0
        %1969 = vmatprep.subr.mxu0 0.0
        %1970 = vmatpush1.xpose.msra.mxu0 0.0
        %1971 = vmatprep.mubr.f32.mxu0 0.0
        %1972 = vmatmul.mubr.f32.gmra.mrb[0].mxu0 %v1836
        %v1973 = vpop.f32.mrb[0].mxu0
        %v1974 = vadd.f32 %v777, %v1973
        %v1975 = vpop.f32.mrb[0].mxu0
        %1976 = vmatprep.mubr.f32.mxu0 0.0
        %1977 = vmatmul.mubr.f32.gmra.mrb[0].mxu0 %v1839
        %v1978 = vpop.f32.mrb[0].mxu0
        %v1979 = vadd.f32 %v778, %v1978
        %v1980 = vpop.f32.mrb[0].mxu0
        %1981 = vmatprep.mubr.f32.mxu0 0.0
        %1982 = vmatmul.mubr.f32.gmra.mrb[0].mxu0 %v1842
        %v1983 = vpop.f32.mrb[0].mxu0
        %v1984 = vadd.f32 %v779, %v1983
        %v1985 = vpop.f32.mrb[0].mxu0
        %1986 = vmatprep.mubr.f32.mxu0 0.0
        %1987 = vmatmul.mubr.f32.gmra.mrb[0].mxu0 %v1845
        %v1988 = vpop.f32.mrb[0].mxu0
        %v1989 = vadd.f32 %v780, %v1988
        %v1990 = vpop.f32.mrb[0].mxu0
        %1991 = vmatprep.mubr.f32.mxu0 0.0
        %1992 = vmatmul.mubr.f32.gmra.mrb[0].mxu0 %v1848
        %v1993 = vpop.f32.mrb[0].mxu0
        %v1994 = vadd.f32 %v781, %v1993
        %v1995 = vpop.f32.mrb[0].mxu0
        %1996 = vmatprep.mubr.f32.mxu0 0.0
        %1997 = vmatmul.mubr.f32.gmra.mrb[0].mxu0 %v1851
        %v1998 = vpop.f32.mrb[0].mxu0
        %v1999 = vadd.f32 %v782, %v1998
        %v2000 = vpop.f32.mrb[0].mxu0
        %2001 = vmatprep.mubr.f32.mxu0 0.0
        %2002 = vmatmul.mubr.f32.gmra.mrb[0].mxu0 %v1854
        %v2003 = vpop.f32.mrb[0].mxu0
        %v2004 = vadd.f32 %v783, %v2003
        %v2005 = vpop.f32.mrb[0].mxu0
        %2006 = vmatprep.mubr.f32.mxu0 0.0
        %2007 = vmatmul.mubr.f32.gmra.mrb[0].mxu0 %v1857
        %v2008 = vpop.f32.mrb[0].mxu0
        %v2009 = vadd.f32 %v784, %v2008
        %v2010 = vpop.f32.mrb[0].mxu0
        %2011 = vmatprep.mubr.f32.mxu0 0.0
        %2012 = vmatmul.mubr.f32.gmra.mrb[0].mxu0 %v1860
        %v2013 = vpop.f32.mrb[0].mxu0
        %v2014 = vadd.f32 %v785, %v2013
        %v2015 = vpop.f32.mrb[0].mxu0
        %2016 = vmatprep.mubr.f32.mxu0 0.0
        %2017 = vmatmul.mubr.f32.gmra.mrb[0].mxu0 %v1863
        %v2018 = vpop.f32.mrb[0].mxu0
        %v2019 = vadd.f32 %v786, %v2018
        %v2020 = vpop.f32.mrb[0].mxu0
        %2021 = vmatprep.mubr.f32.mxu0 0.0
        %2022 = vmatmul.mubr.f32.gmra.mrb[0].mxu0 %v1866
        %v2023 = vpop.f32.mrb[0].mxu0
        %v2024 = vadd.f32 %v787, %v2023
        %v2025 = vpop.f32.mrb[0].mxu0
        %2026 = vmatprep.mubr.f32.mxu0 0.0
        %2027 = vmatmul.mubr.f32.gmra.mrb[0].mxu0 %v1869
        %v2028 = vpop.f32.mrb[0].mxu0
        %v2029 = vadd.f32 %v788, %v2028
        %v2030 = vpop.f32.mrb[0].mxu0
        %2031 = vdwg.mxu0
        %vm2032 = vcmask 785408
        %v2033 = vsel %vm2032, %v1974, -inf
        %2034 = vmax.xlane.f32.xlu0 %v2033
        %v2035 = vpop.xlane.xlu0 %2034
        %v2036 = vsel %vm2032, %v1979, -inf
        %2037 = vmax.xlane.f32.xlu0 %v2036
        %v2038 = vpop.xlane.xlu0 %2037
        %v2039 = vsel %vm2032, %v1984, -inf
        %2040 = vmax.xlane.f32.xlu0 %v2039
        %v2041 = vpop.xlane.xlu0 %2040
        %v2042 = vsel %vm2032, %v1989, -inf
        %2043 = vmax.xlane.f32.xlu0 %v2042
        %v2044 = vpop.xlane.xlu0 %2043
        %v2045 = vsel %vm2032, %v1994, -inf
        %2046 = vmax.xlane.f32.xlu0 %v2045
        %v2047 = vpop.xlane.xlu0 %2046
        %v2048 = vsel %vm2032, %v1999, -inf
        %2049 = vmax.xlane.f32.xlu0 %v2048
        %v2050 = vpop.xlane.xlu0 %2049
        %v2051 = vsel %vm2032, %v2004, -inf
        %2052 = vmax.xlane.f32.xlu0 %v2051
        %v2053 = vpop.xlane.xlu0 %2052
        %v2054 = vsel %vm2032, %v2009, -inf
        %2055 = vmax.xlane.f32.xlu0 %v2054
        %v2056 = vpop.xlane.xlu0 %2055
        %v2057 = vsel %vm2032, %v2014, -inf
        %2058 = vmax.xlane.f32.xlu0 %v2057
        %v2059 = vpop.xlane.xlu0 %2058
        %v2060 = vsel %vm2032, %v2019, -inf
        %2061 = vmax.xlane.f32.xlu0 %v2060
        %v2062 = vpop.xlane.xlu0 %2061
        %v2063 = vsel %vm2032, %v2024, -inf
        %2064 = vmax.xlane.f32.xlu0 %v2063
        %v2065 = vpop.xlane.xlu0 %2064
        %v2066 = vsel %vm2032, %v2029, -inf
        %2067 = vmax.xlane.f32.xlu0 %v2066
        %v2068 = vpop.xlane.xlu0 %2067
        %v2069 = vsub.f32 %v1974, %v2035
        %v2070 = vsub.f32 %v1979, %v2038
        %v2071 = vsub.f32 %v1984, %v2041
        %v2072 = vsub.f32 %v1989, %v2044
        %v2073 = vsub.f32 %v1994, %v2047
        %v2074 = vsub.f32 %v1999, %v2050
        %v2075 = vsub.f32 %v2004, %v2053
        %v2076 = vsub.f32 %v2009, %v2056
        %v2077 = vsub.f32 %v2014, %v2059
        %v2078 = vsub.f32 %v2019, %v2062
        %v2079 = vsub.f32 %v2024, %v2065
        %v2080 = vsub.f32 %v2029, %v2068
        %v2081 = vmul.f32 %v2069, 1.442695
        %v2082 = vpow.pop %v2081
        %v2083 = vmul.f32 %v2070, 1.442695
        %v2084 = vpow.pop %v2083
        %v2085 = vmul.f32 %v2071, 1.442695
        %v2086 = vpow.pop %v2085
        %v2087 = vmul.f32 %v2072, 1.442695
        %v2088 = vpow.pop %v2087
        %v2089 = vmul.f32 %v2073, 1.442695
        %v2090 = vpow.pop %v2089
        %v2091 = vmul.f32 %v2074, 1.442695
        %v2092 = vpow.pop %v2091
        %v2093 = vmul.f32 %v2075, 1.442695
        %v2094 = vpow.pop %v2093
        %v2095 = vmul.f32 %v2076, 1.442695
        %v2096 = vpow.pop %v2095
        %v2097 = vmul.f32 %v2077, 1.442695
        %v2098 = vpow.pop %v2097
        %v2099 = vmul.f32 %v2078, 1.442695
        %v2100 = vpow.pop %v2099
        %v2101 = vmul.f32 %v2079, 1.442695
        %v2102 = vpow.pop %v2101
        %v2103 = vmul.f32 %v2080, 1.442695
        %v2104 = vpow.pop %v2103
        %v2105 = vsel %vm2032, %v2082, 0.0
        %2106 = vadd.xlane.f32.xlu0 %v2105
        %v2107 = vpop.xlane.xlu0 %2106
        %v2108 = vsel %vm2032, %v2084, 0.0
        %2109 = vadd.xlane.f32.xlu0 %v2108
        %v2110 = vpop.xlane.xlu0 %2109
        %v2111 = vsel %vm2032, %v2086, 0.0
        %2112 = vadd.xlane.f32.xlu0 %v2111
        %v2113 = vpop.xlane.xlu0 %2112
        %v2114 = vsel %vm2032, %v2088, 0.0
        %2115 = vadd.xlane.f32.xlu0 %v2114
        %v2116 = vpop.xlane.xlu0 %2115
        %v2117 = vsel %vm2032, %v2090, 0.0
        %2118 = vadd.xlane.f32.xlu0 %v2117
        %v2119 = vpop.xlane.xlu0 %2118
        %v2120 = vsel %vm2032, %v2092, 0.0
        %2121 = vadd.xlane.f32.xlu0 %v2120
        %v2122 = vpop.xlane.xlu0 %2121
        %v2123 = vsel %vm2032, %v2094, 0.0
        %2124 = vadd.xlane.f32.xlu0 %v2123
        %v2125 = vpop.xlane.xlu0 %2124
        %v2126 = vsel %vm2032, %v2096, 0.0
        %2127 = vadd.xlane.f32.xlu0 %v2126
        %v2128 = vpop.xlane.xlu0 %2127
        %v2129 = vsel %vm2032, %v2098, 0.0
        %2130 = vadd.xlane.f32.xlu0 %v2129
        %v2131 = vpop.xlane.xlu0 %2130
        %v2132 = vsel %vm2032, %v2100, 0.0
        %2133 = vadd.xlane.f32.xlu0 %v2132
        %v2134 = vpop.xlane.xlu0 %2133
        %v2135 = vsel %vm2032, %v2102, 0.0
        %2136 = vadd.xlane.f32.xlu0 %v2135
        %v2137 = vpop.xlane.xlu0 %2136
        %v2138 = vsel %vm2032, %v2104, 0.0
        %2139 = vadd.xlane.f32.xlu0 %v2138
        %v2140 = vpop.xlane.xlu0 %2139
        %v2141 = vrcp.pop %v2107
        %v2142 = vrcp.pop %v2110
        %v2143 = vrcp.pop %v2113
        %v2144 = vrcp.pop %v2116
        %v2145 = vrcp.pop %v2119
        %v2146 = vrcp.pop %v2122
        %v2147 = vrcp.pop %v2125
        %v2148 = vrcp.pop %v2128
        %v2149 = vrcp.pop %v2131
        %v2150 = vrcp.pop %v2134
        %v2151 = vrcp.pop %v2137
        %v2152 = vrcp.pop %v2140
        %v2153 = vmul.f32 %v2082, %v2141
        %v2154 = vmul.f32 %v2084, %v2142
        %v2155 = vmul.f32 %v2086, %v2143
        %v2156 = vmul.f32 %v2088, %v2144
        %v2157 = vmul.f32 %v2090, %v2145
        %v2158 = vmul.f32 %v2092, %v2146
        %v2159 = vmul.f32 %v2094, %v2147
        %v2160 = vmul.f32 %v2096, %v2148
        %v2161 = vmul.f32 %v2098, %v2149
        %v2162 = vmul.f32 %v2100, %v2150
        %v2163 = vmul.f32 %v2102, %v2151
        %v2164 = vmul.f32 %v2104, %v2152
        %v2166 = vsel %vm2032, %v2153, 0
        %v2169 = vsel %vm2032, %v2154, 0
        %v2172 = vsel %vm2032, %v2155, 0
        %v2175 = vsel %vm2032, %v2156, 0
        %v2178 = vsel %vm2032, %v2157, 0
        %v2181 = vsel %vm2032, %v2158, 0
        %v2184 = vsel %vm2032, %v2159, 0
        %v2187 = vsel %vm2032, %v2160, 0
        %v2190 = vsel %vm2032, %v2161, 0
        %v2193 = vsel %vm2032, %v2162, 0
        %v2196 = vsel %vm2032, %v2163, 0
        %v2199 = vsel %vm2032, %v2164, 0
        %2201 = vmatprep.subr.mxu0 0.0
        %2202 = vmatpush1.msra.mxu0 %v1776
        %2203 = vmatprep.subr.mxu0 0.0
        %2204 = vmatpush1.msra.mxu0 %v1781
        %2205 = vmatprep.subr.mxu0 0.0
        %2206 = vmatpush1.msra.mxu0 %v1786
        %2207 = vmatprep.subr.mxu0 0.0
        %2208 = vmatpush1.msra.mxu0 %v1791
        %2209 = vmatprep.subr.mxu0 0.0
        %2210 = vmatpush1.msra.mxu0 %v1796
        %2211 = vmatprep.subr.mxu0 0.0
        %2212 = vmatpush1.msra.mxu0 %v1801
        %2213 = vmatprep.subr.mxu0 0.0
        %2214 = vmatpush1.msra.mxu0 %v1806
        %2215 = vmatprep.subr.mxu0 0.0
        %2216 = vmatpush1.msra.mxu0 %v1811
        %2217 = vmatprep.subr.mxu0 0.0
        %2218 = vmatpush1.msra.mxu0 %v1816
        %2219 = vmatprep.subr.mxu0 0.0
        %2220 = vmatpush1.msra.mxu0 %v1821
        %2221 = vmatprep.subr.mxu0 0.0
        %2222 = vmatpush1.msra.mxu0 %v1826
        %2223 = vmatprep.subr.mxu0 0.0
        %2224 = vmatpush1.msra.mxu0 %v1831
        %2225 = vmatprep.subr.mxu0 0.0
        %2226 = vmatpush1.msra.mxu0 0.0
        %2227 = vmatprep.subr.mxu0 0.0
        %2228 = vmatpush1.msra.mxu0 0.0
        %2229 = vmatprep.subr.mxu0 0.0
        %2230 = vmatpush1.msra.mxu0 0.0
        %2231 = vmatprep.subr.mxu0 0.0
        %2232 = vmatpush1.msra.mxu0 0.0
        %2233 = vmatprep.subr.mxu0 0.0
        %2234 = vmatpush1.msra.mxu0 0.0
        %2235 = vmatprep.subr.mxu0 0.0
        %2236 = vmatpush1.msra.mxu0 0.0
        %2237 = vmatprep.subr.mxu0 0.0
        %2238 = vmatpush1.msra.mxu0 0.0
        %2239 = vmatprep.subr.mxu0 0.0
        %2240 = vmatpush1.msra.mxu0 0.0
        %2241 = vmatprep.subr.mxu0 0.0
        %2242 = vmatpush1.msra.mxu0 0.0
        %2243 = vmatprep.subr.mxu0 0.0
        %2244 = vmatpush1.msra.mxu0 0.0
        %2245 = vmatprep.subr.mxu0 0.0
        %2246 = vmatpush1.msra.mxu0 0.0
        %2247 = vmatprep.subr.mxu0 0.0
        %2248 = vmatpush1.msra.mxu0 0.0
        %2249 = vmatprep.subr.mxu0 0.0
        %2250 = vmatpush1.msra.mxu0 0.0
        %2251 = vmatprep.subr.mxu0 0.0
        %2252 = vmatpush1.msra.mxu0 0.0
        %2253 = vmatprep.subr.mxu0 0.0
        %2254 = vmatpush1.msra.mxu0 0.0
        %2255 = vmatprep.subr.mxu0 0.0
        %2256 = vmatpush1.msra.mxu0 0.0
        %2257 = vmatprep.subr.mxu0 0.0
        %2258 = vmatpush1.msra.mxu0 0.0
        %2259 = vmatprep.subr.mxu0 0.0
        %2260 = vmatpush1.msra.mxu0 0.0
        %2261 = vmatprep.subr.mxu0 0.0
        %2262 = vmatpush1.msra.mxu0 0.0
        %2263 = vmatprep.subr.mxu0 0.0
        %2264 = vmatpush1.msra.mxu0 0.0
        %2265 = vmatprep.mubr.f32.mxu0 0.0
        %2266 = vmatmul.mubr.f32.gmra.mrb[0].mxu0 %v2166
        %v2267 = vpop.f32.mrb[0].mxu0
        %v2268 = vadd.f32 %v765, %v2267
        %v2269 = vpop.f32.mrb[0].mxu0
        %2270 = vmatprep.mubr.f32.mxu0 0.0
        %2271 = vmatmul.mubr.f32.gmra.mrb[0].mxu0 %v2169
        %v2272 = vpop.f32.mrb[0].mxu0
        %v2273 = vadd.f32 %v766, %v2272
        %v2274 = vpop.f32.mrb[0].mxu0
        %2275 = vmatprep.mubr.f32.mxu0 0.0
        %2276 = vmatmul.mubr.f32.gmra.mrb[0].mxu0 %v2172
        %v2277 = vpop.f32.mrb[0].mxu0
        %v2278 = vadd.f32 %v767, %v2277
        %v2279 = vpop.f32.mrb[0].mxu0
        %2280 = vmatprep.mubr.f32.mxu0 0.0
        %2281 = vmatmul.mubr.f32.gmra.mrb[0].mxu0 %v2175
        %v2282 = vpop.f32.mrb[0].mxu0
        %v2283 = vadd.f32 %v768, %v2282
        %v2284 = vpop.f32.mrb[0].mxu0
        %2285 = vmatprep.mubr.f32.mxu0 0.0
        %2286 = vmatmul.mubr.f32.gmra.mrb[0].mxu0 %v2178
        %v2287 = vpop.f32.mrb[0].mxu0
        %v2288 = vadd.f32 %v769, %v2287
        %v2289 = vpop.f32.mrb[0].mxu0
        %2290 = vmatprep.mubr.f32.mxu0 0.0
        %2291 = vmatmul.mubr.f32.gmra.mrb[0].mxu0 %v2181
        %v2292 = vpop.f32.mrb[0].mxu0
        %v2293 = vadd.f32 %v770, %v2292
        %v2294 = vpop.f32.mrb[0].mxu0
        %2295 = vmatprep.mubr.f32.mxu0 0.0
        %2296 = vmatmul.mubr.f32.gmra.mrb[0].mxu0 %v2184
        %v2297 = vpop.f32.mrb[0].mxu0
        %v2298 = vadd.f32 %v771, %v2297
        %v2299 = vpop.f32.mrb[0].mxu0
        %2300 = vmatprep.mubr.f32.mxu0 0.0
        %2301 = vmatmul.mubr.f32.gmra.mrb[0].mxu0 %v2187
        %v2302 = vpop.f32.mrb[0].mxu0
        %v2303 = vadd.f32 %v772, %v2302
        %v2304 = vpop.f32.mrb[0].mxu0
        %2305 = vmatprep.mubr.f32.mxu0 0.0
        %2306 = vmatmul.mubr.f32.gmra.mrb[0].mxu0 %v2190
        %v2307 = vpop.f32.mrb[0].mxu0
        %v2308 = vadd.f32 %v773, %v2307
        %v2309 = vpop.f32.mrb[0].mxu0
        %2310 = vmatprep.mubr.f32.mxu0 0.0
        %2311 = vmatmul.mubr.f32.gmra.mrb[0].mxu0 %v2193
        %v2312 = vpop.f32.mrb[0].mxu0
        %v2313 = vadd.f32 %v774, %v2312
        %v2314 = vpop.f32.mrb[0].mxu0
        %2315 = vmatprep.mubr.f32.mxu0 0.0
        %2316 = vmatmul.mubr.f32.gmra.mrb[0].mxu0 %v2196
        %v2317 = vpop.f32.mrb[0].mxu0
        %v2318 = vadd.f32 %v775, %v2317
        %v2319 = vpop.f32.mrb[0].mxu0
        %2320 = vmatprep.mubr.f32.mxu0 0.0
        %2321 = vmatmul.mubr.f32.gmra.mrb[0].mxu0 %v2199
        %v2322 = vpop.f32.mrb[0].mxu0
        %v2323 = vadd.f32 %v776, %v2322
        %v2324 = vpop.f32.mrb[0].mxu0
        %2325 = vdwg.mxu0
        %v2326 = vld [vmem:[#allocation10] sm:$0x1]
        %v2327 = vld [vmem:[#allocation11] sm:$0x1]
        %v2328 = vsel %vm981, %v2268, 0.0
        %2329 = vadd.xlane.f32.xlu0 %v2328
        %v2330 = vpop.xlane.xlu0 %2329
        %v2331 = vsel %vm981, %v2273, 0.0
        %2332 = vadd.xlane.f32.xlu0 %v2331
        %v2333 = vpop.xlane.xlu0 %2332
        %v2334 = vsel %vm981, %v2278, 0.0
        %2335 = vadd.xlane.f32.xlu0 %v2334
        %v2336 = vpop.xlane.xlu0 %2335
        %v2337 = vsel %vm981, %v2283, 0.0
        %2338 = vadd.xlane.f32.xlu0 %v2337
        %v2339 = vpop.xlane.xlu0 %2338
        %v2340 = vsel %vm981, %v2288, 0.0
        %2341 = vadd.xlane.f32.xlu0 %v2340
        %v2342 = vpop.xlane.xlu0 %2341
        %v2343 = vsel %vm981, %v2293, 0.0
        %2344 = vadd.xlane.f32.xlu0 %v2343
        %v2345 = vpop.xlane.xlu0 %2344
        %v2346 = vsel %vm981, %v2298, 0.0
        %2347 = vadd.xlane.f32.xlu0 %v2346
        %v2348 = vpop.xlane.xlu0 %2347
        %v2349 = vsel %vm981, %v2303, 0.0
        %2350 = vadd.xlane.f32.xlu0 %v2349
        %v2351 = vpop.xlane.xlu0 %2350
        %v2352 = vsel %vm981, %v2308, 0.0
        %2353 = vadd.xlane.f32.xlu0 %v2352
        %v2354 = vpop.xlane.xlu0 %2353
        %v2355 = vsel %vm981, %v2313, 0.0
        %2356 = vadd.xlane.f32.xlu0 %v2355
        %v2357 = vpop.xlane.xlu0 %2356
        %v2358 = vsel %vm981, %v2318, 0.0
        %2359 = vadd.xlane.f32.xlu0 %v2358
        %v2360 = vpop.xlane.xlu0 %2359
        %v2361 = vsel %vm981, %v2323, 0.0
        %2362 = vadd.xlane.f32.xlu0 %v2361
        %v2363 = vpop.xlane.xlu0 %2362
        %v2364 = vrcp.pop 32.0
        %v2365 = vmul.f32 %v2330, %v2364
        %v2366 = vmul.f32 %v2333, %v2364
        %v2367 = vmul.f32 %v2336, %v2364
        %v2368 = vmul.f32 %v2339, %v2364
        %v2369 = vmul.f32 %v2342, %v2364
        %v2370 = vmul.f32 %v2345, %v2364
        %v2371 = vmul.f32 %v2348, %v2364
        %v2372 = vmul.f32 %v2351, %v2364
        %v2373 = vmul.f32 %v2354, %v2364
        %v2374 = vmul.f32 %v2357, %v2364
        %v2375 = vmul.f32 %v2360, %v2364
        %v2376 = vmul.f32 %v2363, %v2364
        %v2377 = vsub.f32 %v2268, %v2365
        %v2378 = vsub.f32 %v2273, %v2366
        %v2379 = vsub.f32 %v2278, %v2367
        %v2380 = vsub.f32 %v2283, %v2368
        %v2381 = vsub.f32 %v2288, %v2369
        %v2382 = vsub.f32 %v2293, %v2370
        %v2383 = vsub.f32 %v2298, %v2371
        %v2384 = vsub.f32 %v2303, %v2372
        %v2385 = vsub.f32 %v2308, %v2373
        %v2386 = vsub.f32 %v2313, %v2374
        %v2387 = vsub.f32 %v2318, %v2375
        %v2388 = vsub.f32 %v2323, %v2376
        %v2389 = vmul.f32 %v2377, %v2377
        %v2390 = vmul.f32 %v2378, %v2378
        %v2391 = vmul.f32 %v2379, %v2379
        %v2392 = vmul.f32 %v2380, %v2380
        %v2393 = vmul.f32 %v2381, %v2381
        %v2394 = vmul.f32 %v2382, %v2382
        %v2395 = vmul.f32 %v2383, %v2383
        %v2396 = vmul.f32 %v2384, %v2384
        %v2397 = vmul.f32 %v2385, %v2385
        %v2398 = vmul.f32 %v2386, %v2386
        %v2399 = vmul.f32 %v2387, %v2387
        %v2400 = vmul.f32 %v2388, %v2388
        %v2401 = vsel %vm981, %v2389, 0.0
        %2402 = vadd.xlane.f32.xlu0 %v2401
        %v2403 = vpop.xlane.xlu0 %2402
        %v2404 = vsel %vm981, %v2390, 0.0
        %2405 = vadd.xlane.f32.xlu0 %v2404
        %v2406 = vpop.xlane.xlu0 %2405
        %v2407 = vsel %vm981, %v2391, 0.0
        %2408 = vadd.xlane.f32.xlu0 %v2407
        %v2409 = vpop.xlane.xlu0 %2408
        %v2410 = vsel %vm981, %v2392, 0.0
        %2411 = vadd.xlane.f32.xlu0 %v2410
        %v2412 = vpop.xlane.xlu0 %2411
        %v2413 = vsel %vm981, %v2393, 0.0
        %2414 = vadd.xlane.f32.xlu0 %v2413
        %v2415 = vpop.xlane.xlu0 %2414
        %v2416 = vsel %vm981, %v2394, 0.0
        %2417 = vadd.xlane.f32.xlu0 %v2416
        %v2418 = vpop.xlane.xlu0 %2417
        %v2419 = vsel %vm981, %v2395, 0.0
        %2420 = vadd.xlane.f32.xlu0 %v2419
        %v2421 = vpop.xlane.xlu0 %2420
        %v2422 = vsel %vm981, %v2396, 0.0
        %2423 = vadd.xlane.f32.xlu0 %v2422
        %v2424 = vpop.xlane.xlu0 %2423
        %v2425 = vsel %vm981, %v2397, 0.0
        %2426 = vadd.xlane.f32.xlu0 %v2425
        %v2427 = vpop.xlane.xlu0 %2426
        %v2428 = vsel %vm981, %v2398, 0.0
        %2429 = vadd.xlane.f32.xlu0 %v2428
        %v2430 = vpop.xlane.xlu0 %2429
        %v2431 = vsel %vm981, %v2399, 0.0
        %2432 = vadd.xlane.f32.xlu0 %v2431
        %v2433 = vpop.xlane.xlu0 %2432
        %v2434 = vsel %vm981, %v2400, 0.0
        %2435 = vadd.xlane.f32.xlu0 %v2434
        %v2436 = vpop.xlane.xlu0 %2435
        %v2437 = vmul.f32 %v2403, %v2364
        %v2438 = vmul.f32 %v2406, %v2364
        %v2439 = vmul.f32 %v2409, %v2364
        %v2440 = vmul.f32 %v2412, %v2364
        %v2441 = vmul.f32 %v2415, %v2364
        %v2442 = vmul.f32 %v2418, %v2364
        %v2443 = vmul.f32 %v2421, %v2364
        %v2444 = vmul.f32 %v2424, %v2364
        %v2445 = vmul.f32 %v2427, %v2364
        %v2446 = vmul.f32 %v2430, %v2364
        %v2447 = vmul.f32 %v2433, %v2364
        %v2448 = vmul.f32 %v2436, %v2364
        %v2449 = vadd.f32 %v2437, 1e-05
        %v2450 = vadd.f32 %v2438, 1e-05
        %v2451 = vadd.f32 %v2439, 1e-05
        %v2452 = vadd.f32 %v2440, 1e-05
        %v2453 = vadd.f32 %v2441, 1e-05
        %v2454 = vadd.f32 %v2442, 1e-05
        %v2455 = vadd.f32 %v2443, 1e-05
        %v2456 = vadd.f32 %v2444, 1e-05
        %v2457 = vadd.f32 %v2445, 1e-05
        %v2458 = vadd.f32 %v2446, 1e-05
        %v2459 = vadd.f32 %v2447, 1e-05
        %v2460 = vadd.f32 %v2448, 1e-05
        %v2461 = vrsqrt.pop %v2449
        %v2462 = vrsqrt.pop %v2450
        %v2463 = vrsqrt.pop %v2451
        %v2464 = vrsqrt.pop %v2452
        %v2465 = vrsqrt.pop %v2453
        %v2466 = vrsqrt.pop %v2454
        %v2467 = vrsqrt.pop %v2455
        %v2468 = vrsqrt.pop %v2456
        %v2469 = vrsqrt.pop %v2457
        %v2470 = vrsqrt.pop %v2458
        %v2471 = vrsqrt.pop %v2459
        %v2472 = vrsqrt.pop %v2460
        %v2473 = vmul.f32 %v2377, %v2461
        %v2474 = vmul.f32 %v2378, %v2462
        %v2475 = vmul.f32 %v2379, %v2463
        %v2476 = vmul.f32 %v2380, %v2464
        %v2477 = vmul.f32 %v2381, %v2465
        %v2478 = vmul.f32 %v2382, %v2466
        %v2479 = vmul.f32 %v2383, %v2467
        %v2480 = vmul.f32 %v2384, %v2468
        %v2481 = vmul.f32 %v2385, %v2469
        %v2482 = vmul.f32 %v2386, %v2470
        %v2483 = vmul.f32 %v2387, %v2471
        %v2484 = vmul.f32 %v2388, %v2472
        %v2486 = vlaneseq
        %v2487 = vshrl.u32 %v2486, 7
        %v2488 = vsub.s32 0, %v2487
        %v2489 = vrot.slane %v2326, %v2488
        %v2491 = vmul.f32 %v2473, %v2489
        %v2492 = vmul.f32 %v2474, %v2489
        %v2493 = vmul.f32 %v2475, %v2489
        %v2494 = vmul.f32 %v2476, %v2489
        %v2495 = vmul.f32 %v2477, %v2489
        %v2496 = vmul.f32 %v2478, %v2489
        %v2497 = vmul.f32 %v2479, %v2489
        %v2498 = vmul.f32 %v2480, %v2489
        %v2499 = vmul.f32 %v2481, %v2489
        %v2500 = vmul.f32 %v2482, %v2489
        %v2501 = vmul.f32 %v2483, %v2489
        %v2502 = vmul.f32 %v2484, %v2489
        %v2504 = vlaneseq
        %v2505 = vshrl.u32 %v2504, 7
        %v2506 = vsub.s32 0, %v2505
        %v2507 = vrot.slane %v2327, %v2506
        %v2509 = vadd.f32 %v2491, %v2507
        %v2510 = vadd.f32 %v2492, %v2507
        %v2511 = vadd.f32 %v2493, %v2507
        %v2512 = vadd.f32 %v2494, %v2507
        %v2513 = vadd.f32 %v2495, %v2507
        %v2514 = vadd.f32 %v2496, %v2507
        %v2515 = vadd.f32 %v2497, %v2507
        %v2516 = vadd.f32 %v2498, %v2507
        %v2517 = vadd.f32 %v2499, %v2507
        %v2518 = vadd.f32 %v2500, %v2507
        %v2519 = vadd.f32 %v2501, %v2507
        %v2520 = vadd.f32 %v2502, %v2507
        %v2521 = vld [vmem:[#allocation13] sm:$0xff]
        %v2522 = vld [vmem:[#allocation13 + $0x8] sm:$0xff]
        %v2523 = vld [vmem:[#allocation13 + $0x10] sm:$0xff]
        %v2524 = vld [vmem:[#allocation13 + $0x18] sm:$0xff]
        %v2525 = vld [vmem:[#allocation14] sm:$0x1]
        %v2527 = vlaneseq
        %v2528 = vshrl.u32 %v2527, 7
        %v2529 = vsub.s32 0, %v2528
        %v2530 = vrot.slane %v2525, %v2529
        %v2533 = vsel %vm981, %v2509, 0
        %v2536 = vsel %vm981, %v2510, 0
        %v2539 = vsel %vm981, %v2511, 0
        %v2542 = vsel %vm981, %v2512, 0
        %v2545 = vsel %vm981, %v2513, 0
        %v2548 = vsel %vm981, %v2514, 0
        %v2551 = vsel %vm981, %v2515, 0
        %v2554 = vsel %vm981, %v2516, 0
        %v2557 = vsel %vm981, %v2517, 0
        %v2560 = vsel %vm981, %v2518, 0
        %v2563 = vsel %vm981, %v2519, 0
        %v2566 = vsel %vm981, %v2520, 0
        %2568 = vmatprep.subr.mxu0 0.0
        %2569 = vmatpush1.msra.mxu0 %v2521
        %2570 = vmatprep.subr.mxu0 0.0
        %2571 = vmatpush1.msra.mxu0 %v2522
        %2572 = vmatprep.subr.mxu0 0.0
        %2573 = vmatpush1.msra.mxu0 %v2523
        %2574 = vmatprep.subr.mxu0 0.0
        %2575 = vmatpush1.msra.mxu0 %v2524
        %2576 = vmatprep.subr.mxu0 0.0
        %2577 = vmatpush1.msra.mxu0 0.0
        %2578 = vmatprep.subr.mxu0 0.0
        %2579 = vmatpush1.msra.mxu0 0.0
        %2580 = vmatprep.subr.mxu0 0.0
        %2581 = vmatpush1.msra.mxu0 0.0
        %2582 = vmatprep.subr.mxu0 0.0
        %2583 = vmatpush1.msra.mxu0 0.0
        %2584 = vmatprep.subr.mxu0 0.0
        %2585 = vmatpush1.msra.mxu0 0.0
        %2586 = vmatprep.subr.mxu0 0.0
        %2587 = vmatpush1.msra.mxu0 0.0
        %2588 = vmatprep.subr.mxu0 0.0
        %2589 = vmatpush1.msra.mxu0 0.0
        %2590 = vmatprep.subr.mxu0 0.0
        %2591 = vmatpush1.msra.mxu0 0.0
        %2592 = vmatprep.subr.mxu0 0.0
        %2593 = vmatpush1.msra.mxu0 0.0
        %2594 = vmatprep.subr.mxu0 0.0
        %2595 = vmatpush1.msra.mxu0 0.0
        %2596 = vmatprep.subr.mxu0 0.0
        %2597 = vmatpush1.msra.mxu0 0.0
        %2598 = vmatprep.subr.mxu0 0.0
        %2599 = vmatpush1.msra.mxu0 0.0
        %2600 = vmatprep.subr.mxu0 0.0
        %2601 = vmatpush1.msra.mxu0 0.0
        %2602 = vmatprep.subr.mxu0 0.0
        %2603 = vmatpush1.msra.mxu0 0.0
        %2604 = vmatprep.subr.mxu0 0.0
        %2605 = vmatpush1.msra.mxu0 0.0
        %2606 = vmatprep.subr.mxu0 0.0
        %2607 = vmatpush1.msra.mxu0 0.0
        %2608 = vmatprep.subr.mxu0 0.0
        %2609 = vmatpush1.msra.mxu0 0.0
        %2610 = vmatprep.subr.mxu0 0.0
        %2611 = vmatpush1.msra.mxu0 0.0
        %2612 = vmatprep.subr.mxu0 0.0
        %2613 = vmatpush1.msra.mxu0 0.0
        %2614 = vmatprep.subr.mxu0 0.0
        %2615 = vmatpush1.msra.mxu0 0.0
        %2616 = vmatprep.subr.mxu0 0.0
        %2617 = vmatpush1.msra.mxu0 0.0
        %2618 = vmatprep.subr.mxu0 0.0
        %2619 = vmatpush1.msra.mxu0 0.0
        %2620 = vmatprep.subr.mxu0 0.0
        %2621 = vmatpush1.msra.mxu0 0.0
        %2622 = vmatprep.subr.mxu0 0.0
        %2623 = vmatpush1.msra.mxu0 0.0
        %2624 = vmatprep.subr.mxu0 0.0
        %2625 = vmatpush1.msra.mxu0 0.0
        %2626 = vmatprep.subr.mxu0 0.0
        %2627 = vmatpush1.msra.mxu0 0.0
        %2628 = vmatprep.subr.mxu0 0.0
        %2629 = vmatpush1.msra.mxu0 0.0
        %2630 = vmatprep.subr.mxu0 0.0
        %2631 = vmatpush1.msra.mxu0 0.0
        %2632 = vmatprep.mubr.f32.mxu0 0.0
        %2633 = vmatmul.mubr.f32.gmra.mrb[0].mxu0 %v2533
        %v2634 = vpop.f32.mrb[0].mxu0
        %v2635 = vadd.f32 %v2530, %v2634
        %v2636 = vpop.f32.mrb[0].mxu0
        %2637 = vmatprep.mubr.f32.mxu0 0.0
        %2638 = vmatmul.mubr.f32.gmra.mrb[0].mxu0 %v2536
        %v2639 = vpop.f32.mrb[0].mxu0
        %v2640 = vadd.f32 %v2530, %v2639
        %v2641 = vpop.f32.mrb[0].mxu0
        %2642 = vmatprep.mubr.f32.mxu0 0.0
        %2643 = vmatmul.mubr.f32.gmra.mrb[0].mxu0 %v2539
        %v2644 = vpop.f32.mrb[0].mxu0
        %v2645 = vadd.f32 %v2530, %v2644
        %v2646 = vpop.f32.mrb[0].mxu0
        %2647 = vmatprep.mubr.f32.mxu0 0.0
        %2648 = vmatmul.mubr.f32.gmra.mrb[0].mxu0 %v2542
        %v2649 = vpop.f32.mrb[0].mxu0
        %v2650 = vadd.f32 %v2530, %v2649
        %v2651 = vpop.f32.mrb[0].mxu0
        %2652 = vmatprep.mubr.f32.mxu0 0.0
        %2653 = vmatmul.mubr.f32.gmra.mrb[0].mxu0 %v2545
        %v2654 = vpop.f32.mrb[0].mxu0
        %v2655 = vadd.f32 %v2530, %v2654
        %v2656 = vpop.f32.mrb[0].mxu0
        %2657 = vmatprep.mubr.f32.mxu0 0.0
        %2658 = vmatmul.mubr.f32.gmra.mrb[0].mxu0 %v2548
        %v2659 = vpop.f32.mrb[0].mxu0
        %v2660 = vadd.f32 %v2530, %v2659
        %v2661 = vpop.f32.mrb[0].mxu0
        %2662 = vmatprep.mubr.f32.mxu0 0.0
        %2663 = vmatmul.mubr.f32.gmra.mrb[0].mxu0 %v2551
        %v2664 = vpop.f32.mrb[0].mxu0
        %v2665 = vadd.f32 %v2530, %v2664
        %v2666 = vpop.f32.mrb[0].mxu0
        %2667 = vmatprep.mubr.f32.mxu0 0.0
        %2668 = vmatmul.mubr.f32.gmra.mrb[0].mxu0 %v2554
        %v2669 = vpop.f32.mrb[0].mxu0
        %v2670 = vadd.f32 %v2530, %v2669
        %v2671 = vpop.f32.mrb[0].mxu0
        %2672 = vmatprep.mubr.f32.mxu0 0.0
        %2673 = vmatmul.mubr.f32.gmra.mrb[0].mxu0 %v2557
        %v2674 = vpop.f32.mrb[0].mxu0
        %v2675 = vadd.f32 %v2530, %v2674
        %v2676 = vpop.f32.mrb[0].mxu0
        %2677 = vmatprep.mubr.f32.mxu0 0.0
        %2678 = vmatmul.mubr.f32.gmra.mrb[0].mxu0 %v2560
        %v2679 = vpop.f32.mrb[0].mxu0
        %v2680 = vadd.f32 %v2530, %v2679
        %v2681 = vpop.f32.mrb[0].mxu0
        %2682 = vmatprep.mubr.f32.mxu0 0.0
        %2683 = vmatmul.mubr.f32.gmra.mrb[0].mxu0 %v2563
        %v2684 = vpop.f32.mrb[0].mxu0
        %v2685 = vadd.f32 %v2530, %v2684
        %v2686 = vpop.f32.mrb[0].mxu0
        %2687 = vmatprep.mubr.f32.mxu0 0.0
        %2688 = vmatmul.mubr.f32.gmra.mrb[0].mxu0 %v2566
        %v2689 = vpop.f32.mrb[0].mxu0
        %v2690 = vadd.f32 %v2530, %v2689
        %v2691 = vpop.f32.mrb[0].mxu0
        %2692 = vdwg.mxu0
        %v2693 = vmax.f32 %v2635, 0.0
        %v2694 = vmax.f32 %v2640, 0.0
        %v2695 = vmax.f32 %v2645, 0.0
        %v2696 = vmax.f32 %v2650, 0.0
        %v2697 = vmax.f32 %v2655, 0.0
        %v2698 = vmax.f32 %v2660, 0.0
        %v2699 = vmax.f32 %v2665, 0.0
        %v2700 = vmax.f32 %v2670, 0.0
        %v2701 = vmax.f32 %v2675, 0.0
        %v2702 = vmax.f32 %v2680, 0.0
        %v2703 = vmax.f32 %v2685, 0.0
        %v2704 = vmax.f32 %v2690, 0.0
        %v2705 = vld [vmem:[#allocation16] sm:$0xff]
        %v2706 = vld [vmem:[#allocation16 + $0x8] sm:$0xff]
        %v2707 = vld [vmem:[#allocation16 + $0x10] sm:$0xff]
        %v2708 = vld [vmem:[#allocation16 + $0x18] sm:$0xff]
        %v2709 = vld [vmem:[#allocation17] sm:$0x1]
        %v2711 = vlaneseq
        %v2712 = vshrl.u32 %v2711, 7
        %v2713 = vsub.s32 0, %v2712
        %v2714 = vrot.slane %v2709, %v2713
        %v2717 = vsel %vm981, %v2693, 0
        %v2720 = vsel %vm981, %v2694, 0
        %v2723 = vsel %vm981, %v2695, 0
        %v2726 = vsel %vm981, %v2696, 0
        %v2729 = vsel %vm981, %v2697, 0
        %v2732 = vsel %vm981, %v2698, 0
        %v2735 = vsel %vm981, %v2699, 0
        %v2738 = vsel %vm981, %v2700, 0
        %v2741 = vsel %vm981, %v2701, 0
        %v2744 = vsel %vm981, %v2702, 0
        %v2747 = vsel %vm981, %v2703, 0
        %v2750 = vsel %vm981, %v2704, 0
        %2752 = vmatprep.subr.mxu0 0.0
        %2753 = vmatpush1.msra.mxu0 %v2705
        %2754 = vmatprep.subr.mxu0 0.0
        %2755 = vmatpush1.msra.mxu0 %v2706
        %2756 = vmatprep.subr.mxu0 0.0
        %2757 = vmatpush1.msra.mxu0 %v2707
        %2758 = vmatprep.subr.mxu0 0.0
        %2759 = vmatpush1.msra.mxu0 %v2708
        %2760 = vmatprep.subr.mxu0 0.0
        %2761 = vmatpush1.msra.mxu0 0.0
        %2762 = vmatprep.subr.mxu0 0.0
        %2763 = vmatpush1.msra.mxu0 0.0
        %2764 = vmatprep.subr.mxu0 0.0
        %2765 = vmatpush1.msra.mxu0 0.0
        %2766 = vmatprep.subr.mxu0 0.0
        %2767 = vmatpush1.msra.mxu0 0.0
        %2768 = vmatprep.subr.mxu0 0.0
        %2769 = vmatpush1.msra.mxu0 0.0
        %2770 = vmatprep.subr.mxu0 0.0
        %2771 = vmatpush1.msra.mxu0 0.0
        %2772 = vmatprep.subr.mxu0 0.0
        %2773 = vmatpush1.msra.mxu0 0.0
        %2774 = vmatprep.subr.mxu0 0.0
        %2775 = vmatpush1.msra.mxu0 0.0
        %2776 = vmatprep.subr.mxu0 0.0
        %2777 = vmatpush1.msra.mxu0 0.0
        %2778 = vmatprep.subr.mxu0 0.0
        %2779 = vmatpush1.msra.mxu0 0.0
        %2780 = vmatprep.subr.mxu0 0.0
        %2781 = vmatpush1.msra.mxu0 0.0
        %2782 = vmatprep.subr.mxu0 0.0
        %2783 = vmatpush1.msra.mxu0 0.0
        %2784 = vmatprep.subr.mxu0 0.0
        %2785 = vmatpush1.msra.mxu0 0.0
        %2786 = vmatprep.subr.mxu0 0.0
        %2787 = vmatpush1.msra.mxu0 0.0
        %2788 = vmatprep.subr.mxu0 0.0
        %2789 = vmatpush1.msra.mxu0 0.0
        %2790 = vmatprep.subr.mxu0 0.0
        %2791 = vmatpush1.msra.mxu0 0.0
        %2792 = vmatprep.subr.mxu0 0.0
        %2793 = vmatpush1.msra.mxu0 0.0
        %2794 = vmatprep.subr.mxu0 0.0
        %2795 = vmatpush1.msra.mxu0 0.0
        %2796 = vmatprep.subr.mxu0 0.0
        %2797 = vmatpush1.msra.mxu0 0.0
        %2798 = vmatprep.subr.mxu0 0.0
        %2799 = vmatpush1.msra.mxu0 0.0
        %2800 = vmatprep.subr.mxu0 0.0
        %2801 = vmatpush1.msra.mxu0 0.0
        %2802 = vmatprep.subr.mxu0 0.0
        %2803 = vmatpush1.msra.mxu0 0.0
        %2804 = vmatprep.subr.mxu0 0.0
        %2805 = vmatpush1.msra.mxu0 0.0
        %2806 = vmatprep.subr.mxu0 0.0
        %2807 = vmatpush1.msra.mxu0 0.0
        %2808 = vmatprep.subr.mxu0 0.0
        %2809 = vmatpush1.msra.mxu0 0.0
        %2810 = vmatprep.subr.mxu0 0.0
        %2811 = vmatpush1.msra.mxu0 0.0
        %2812 = vmatprep.subr.mxu0 0.0
        %2813 = vmatpush1.msra.mxu0 0.0
        %2814 = vmatprep.subr.mxu0 0.0
        %2815 = vmatpush1.msra.mxu0 0.0
        %2816 = vmatprep.mubr.f32.mxu0 0.0
        %2817 = vmatmul.mubr.f32.gmra.mrb[0].mxu0 %v2717
        %v2818 = vpop.f32.mrb[0].mxu0
        %v2819 = vadd.f32 %v2714, %v2818
        %v2820 = vpop.f32.mrb[0].mxu0
        %2821 = vmatprep.mubr.f32.mxu0 0.0
        %2822 = vmatmul.mubr.f32.gmra.mrb[0].mxu0 %v2720
        %v2823 = vpop.f32.mrb[0].mxu0
        %v2824 = vadd.f32 %v2714, %v2823
        %v2825 = vpop.f32.mrb[0].mxu0
        %2826 = vmatprep.mubr.f32.mxu0 0.0
        %2827 = vmatmul.mubr.f32.gmra.mrb[0].mxu0 %v2723
        %v2828 = vpop.f32.mrb[0].mxu0
        %v2829 = vadd.f32 %v2714, %v2828
        %v2830 = vpop.f32.mrb[0].mxu0
        %2831 = vmatprep.mubr.f32.mxu0 0.0
        %2832 = vmatmul.mubr.f32.gmra.mrb[0].mxu0 %v2726
        %v2833 = vpop.f32.mrb[0].mxu0
        %v2834 = vadd.f32 %v2714, %v2833
        %v2835 = vpop.f32.mrb[0].mxu0
        %2836 = vmatprep.mubr.f32.mxu0 0.0
        %2837 = vmatmul.mubr.f32.gmra.mrb[0].mxu0 %v2729
        %v2838 = vpop.f32.mrb[0].mxu0
        %v2839 = vadd.f32 %v2714, %v2838
        %v2840 = vpop.f32.mrb[0].mxu0
        %2841 = vmatprep.mubr.f32.mxu0 0.0
        %2842 = vmatmul.mubr.f32.gmra.mrb[0].mxu0 %v2732
        %v2843 = vpop.f32.mrb[0].mxu0
        %v2844 = vadd.f32 %v2714, %v2843
        %v2845 = vpop.f32.mrb[0].mxu0
        %2846 = vmatprep.mubr.f32.mxu0 0.0
        %2847 = vmatmul.mubr.f32.gmra.mrb[0].mxu0 %v2735
        %v2848 = vpop.f32.mrb[0].mxu0
        %v2849 = vadd.f32 %v2714, %v2848
        %v2850 = vpop.f32.mrb[0].mxu0
        %2851 = vmatprep.mubr.f32.mxu0 0.0
        %2852 = vmatmul.mubr.f32.gmra.mrb[0].mxu0 %v2738
        %v2853 = vpop.f32.mrb[0].mxu0
        %v2854 = vadd.f32 %v2714, %v2853
        %v2855 = vpop.f32.mrb[0].mxu0
        %2856 = vmatprep.mubr.f32.mxu0 0.0
        %2857 = vmatmul.mubr.f32.gmra.mrb[0].mxu0 %v2741
        %v2858 = vpop.f32.mrb[0].mxu0
        %v2859 = vadd.f32 %v2714, %v2858
        %v2860 = vpop.f32.mrb[0].mxu0
        %2861 = vmatprep.mubr.f32.mxu0 0.0
        %2862 = vmatmul.mubr.f32.gmra.mrb[0].mxu0 %v2744
        %v2863 = vpop.f32.mrb[0].mxu0
        %v2864 = vadd.f32 %v2714, %v2863
        %v2865 = vpop.f32.mrb[0].mxu0
        %2866 = vmatprep.mubr.f32.mxu0 0.0
        %2867 = vmatmul.mubr.f32.gmra.mrb[0].mxu0 %v2747
        %v2868 = vpop.f32.mrb[0].mxu0
        %v2869 = vadd.f32 %v2714, %v2868
        %v2870 = vpop.f32.mrb[0].mxu0
        %2871 = vmatprep.mubr.f32.mxu0 0.0
        %2872 = vmatmul.mubr.f32.gmra.mrb[0].mxu0 %v2750
        %v2873 = vpop.f32.mrb[0].mxu0
        %v2874 = vadd.f32 %v2714, %v2873
        %v2875 = vpop.f32.mrb[0].mxu0
        %2876 = vdwg.mxu0
        %v2877 = vadd.f32 %v2819, %v2509
        %v2878 = vadd.f32 %v2824, %v2510
        %v2879 = vadd.f32 %v2829, %v2511
        %v2880 = vadd.f32 %v2834, %v2512
        %v2881 = vadd.f32 %v2839, %v2513
        %v2882 = vadd.f32 %v2844, %v2514
        %v2883 = vadd.f32 %v2849, %v2515
        %v2884 = vadd.f32 %v2854, %v2516
        %v2885 = vadd.f32 %v2859, %v2517
        %v2886 = vadd.f32 %v2864, %v2518
        %v2887 = vadd.f32 %v2869, %v2519
        %v2888 = vadd.f32 %v2874, %v2520
        %v2889 = vld [vmem:[#allocation19] sm:$0x1]
        %v2890 = vld [vmem:[#allocation20] sm:$0x1]
        %v2891 = vsel %vm981, %v2877, 0.0
        %2892 = vadd.xlane.f32.xlu0 %v2891
        %v2893 = vpop.xlane.xlu0 %2892
        %v2894 = vsel %vm981, %v2878, 0.0
        %2895 = vadd.xlane.f32.xlu0 %v2894
        %v2896 = vpop.xlane.xlu0 %2895
        %v2897 = vsel %vm981, %v2879, 0.0
        %2898 = vadd.xlane.f32.xlu0 %v2897
        %v2899 = vpop.xlane.xlu0 %2898
        %v2900 = vsel %vm981, %v2880, 0.0
        %2901 = vadd.xlane.f32.xlu0 %v2900
        %v2902 = vpop.xlane.xlu0 %2901
        %v2903 = vsel %vm981, %v2881, 0.0
        %2904 = vadd.xlane.f32.xlu0 %v2903
        %v2905 = vpop.xlane.xlu0 %2904
        %v2906 = vsel %vm981, %v2882, 0.0
        %2907 = vadd.xlane.f32.xlu0 %v2906
        %v2908 = vpop.xlane.xlu0 %2907
        %v2909 = vsel %vm981, %v2883, 0.0
        %2910 = vadd.xlane.f32.xlu0 %v2909
        %v2911 = vpop.xlane.xlu0 %2910
        %v2912 = vsel %vm981, %v2884, 0.0
        %2913 = vadd.xlane.f32.xlu0 %v2912
        %v2914 = vpop.xlane.xlu0 %2913
        %v2915 = vsel %vm981, %v2885, 0.0
        %2916 = vadd.xlane.f32.xlu0 %v2915
        %v2917 = vpop.xlane.xlu0 %2916
        %v2918 = vsel %vm981, %v2886, 0.0
        %2919 = vadd.xlane.f32.xlu0 %v2918
        %v2920 = vpop.xlane.xlu0 %2919
        %v2921 = vsel %vm981, %v2887, 0.0
        %2922 = vadd.xlane.f32.xlu0 %v2921
        %v2923 = vpop.xlane.xlu0 %2922
        %v2924 = vsel %vm981, %v2888, 0.0
        %2925 = vadd.xlane.f32.xlu0 %v2924
        %v2926 = vpop.xlane.xlu0 %2925
        %v2927 = vmul.f32 %v2893, %v2364
        %v2928 = vmul.f32 %v2896, %v2364
        %v2929 = vmul.f32 %v2899, %v2364
        %v2930 = vmul.f32 %v2902, %v2364
        %v2931 = vmul.f32 %v2905, %v2364
        %v2932 = vmul.f32 %v2908, %v2364
        %v2933 = vmul.f32 %v2911, %v2364
        %v2934 = vmul.f32 %v2914, %v2364
        %v2935 = vmul.f32 %v2917, %v2364
        %v2936 = vmul.f32 %v2920, %v2364
        %v2937 = vmul.f32 %v2923, %v2364
        %v2938 = vmul.f32 %v2926, %v2364
        %v2939 = vsub.f32 %v2877, %v2927
        %v2940 = vsub.f32 %v2878, %v2928
        %v2941 = vsub.f32 %v2879, %v2929
        %v2942 = vsub.f32 %v2880, %v2930
        %v2943 = vsub.f32 %v2881, %v2931
        %v2944 = vsub.f32 %v2882, %v2932
        %v2945 = vsub.f32 %v2883, %v2933
        %v2946 = vsub.f32 %v2884, %v2934
        %v2947 = vsub.f32 %v2885, %v2935
        %v2948 = vsub.f32 %v2886, %v2936
        %v2949 = vsub.f32 %v2887, %v2937
        %v2950 = vsub.f32 %v2888, %v2938
        %v2951 = vmul.f32 %v2939, %v2939
        %v2952 = vmul.f32 %v2940, %v2940
        %v2953 = vmul.f32 %v2941, %v2941
        %v2954 = vmul.f32 %v2942, %v2942
        %v2955 = vmul.f32 %v2943, %v2943
        %v2956 = vmul.f32 %v2944, %v2944
        %v2957 = vmul.f32 %v2945, %v2945
        %v2958 = vmul.f32 %v2946, %v2946
        %v2959 = vmul.f32 %v2947, %v2947
        %v2960 = vmul.f32 %v2948, %v2948
        %v2961 = vmul.f32 %v2949, %v2949
        %v2962 = vmul.f32 %v2950, %v2950
        %v2963 = vsel %vm981, %v2951, 0.0
        %2964 = vadd.xlane.f32.xlu0 %v2963
        %v2965 = vpop.xlane.xlu0 %2964
        %v2966 = vsel %vm981, %v2952, 0.0
        %2967 = vadd.xlane.f32.xlu0 %v2966
        %v2968 = vpop.xlane.xlu0 %2967
        %v2969 = vsel %vm981, %v2953, 0.0
        %2970 = vadd.xlane.f32.xlu0 %v2969
        %v2971 = vpop.xlane.xlu0 %2970
        %v2972 = vsel %vm981, %v2954, 0.0
        %2973 = vadd.xlane.f32.xlu0 %v2972
        %v2974 = vpop.xlane.xlu0 %2973
        %v2975 = vsel %vm981, %v2955, 0.0
        %2976 = vadd.xlane.f32.xlu0 %v2975
        %v2977 = vpop.xlane.xlu0 %2976
        %v2978 = vsel %vm981, %v2956, 0.0
        %2979 = vadd.xlane.f32.xlu0 %v2978
        %v2980 = vpop.xlane.xlu0 %2979
        %v2981 = vsel %vm981, %v2957, 0.0
        %2982 = vadd.xlane.f32.xlu0 %v2981
        %v2983 = vpop.xlane.xlu0 %2982
        %v2984 = vsel %vm981, %v2958, 0.0
        %2985 = vadd.xlane.f32.xlu0 %v2984
        %v2986 = vpop.xlane.xlu0 %2985
        %v2987 = vsel %vm981, %v2959, 0.0
        %2988 = vadd.xlane.f32.xlu0 %v2987
        %v2989 = vpop.xlane.xlu0 %2988
        %v2990 = vsel %vm981, %v2960, 0.0
        %2991 = vadd.xlane.f32.xlu0 %v2990
        %v2992 = vpop.xlane.xlu0 %2991
        %v2993 = vsel %vm981, %v2961, 0.0
        %2994 = vadd.xlane.f32.xlu0 %v2993
        %v2995 = vpop.xlane.xlu0 %2994
        %v2996 = vsel %vm981, %v2962, 0.0
        %2997 = vadd.xlane.f32.xlu0 %v2996
        %v2998 = vpop.xlane.xlu0 %2997
        %v2999 = vmul.f32 %v2965, %v2364
        %v3000 = vmul.f32 %v2968, %v2364
        %v3001 = vmul.f32 %v2971, %v2364
        %v3002 = vmul.f32 %v2974, %v2364
        %v3003 = vmul.f32 %v2977, %v2364
        %v3004 = vmul.f32 %v2980, %v2364
        %v3005 = vmul.f32 %v2983, %v2364
        %v3006 = vmul.f32 %v2986, %v2364
        %v3007 = vmul.f32 %v2989, %v2364
        %v3008 = vmul.f32 %v2992, %v2364
        %v3009 = vmul.f32 %v2995, %v2364
        %v3010 = vmul.f32 %v2998, %v2364
        %v3011 = vadd.f32 %v2999, 1e-05
        %v3012 = vadd.f32 %v3000, 1e-05
        %v3013 = vadd.f32 %v3001, 1e-05
        %v3014 = vadd.f32 %v3002, 1e-05
        %v3015 = vadd.f32 %v3003, 1e-05
        %v3016 = vadd.f32 %v3004, 1e-05
        %v3017 = vadd.f32 %v3005, 1e-05
        %v3018 = vadd.f32 %v3006, 1e-05
        %v3019 = vadd.f32 %v3007, 1e-05
        %v3020 = vadd.f32 %v3008, 1e-05
        %v3021 = vadd.f32 %v3009, 1e-05
        %v3022 = vadd.f32 %v3010, 1e-05
        %v3023 = vrsqrt.pop %v3011
        %v3024 = vrsqrt.pop %v3012
        %v3025 = vrsqrt.pop %v3013
        %v3026 = vrsqrt.pop %v3014
        %v3027 = vrsqrt.pop %v3015
        %v3028 = vrsqrt.pop %v3016
        %v3029 = vrsqrt.pop %v3017
        %v3030 = vrsqrt.pop %v3018
        %v3031 = vrsqrt.pop %v3019
        %v3032 = vrsqrt.pop %v3020
        %v3033 = vrsqrt.pop %v3021
        %v3034 = vrsqrt.pop %v3022
        %v3035 = vmul.f32 %v2939, %v3023
        %v3036 = vmul.f32 %v2940, %v3024
        %v3037 = vmul.f32 %v2941, %v3025
        %v3038 = vmul.f32 %v2942, %v3026
        %v3039 = vmul.f32 %v2943, %v3027
        %v3040 = vmul.f32 %v2944, %v3028
        %v3041 = vmul.f32 %v2945, %v3029
        %v3042 = vmul.f32 %v2946, %v3030
        %v3043 = vmul.f32 %v2947, %v3031
        %v3044 = vmul.f32 %v2948, %v3032
        %v3045 = vmul.f32 %v2949, %v3033
        %v3046 = vmul.f32 %v2950, %v3034
        %v3048 = vlaneseq
        %v3049 = vshrl.u32 %v3048, 7
        %v3050 = vsub.s32 0, %v3049
        %v3051 = vrot.slane %v2889, %v3050
        %v3053 = vmul.f32 %v3035, %v3051
        %v3054 = vmul.f32 %v3036, %v3051
        %v3055 = vmul.f32 %v3037, %v3051
        %v3056 = vmul.f32 %v3038, %v3051
        %v3057 = vmul.f32 %v3039, %v3051
        %v3058 = vmul.f32 %v3040, %v3051
        %v3059 = vmul.f32 %v3041, %v3051
        %v3060 = vmul.f32 %v3042, %v3051
        %v3061 = vmul.f32 %v3043, %v3051
        %v3062 = vmul.f32 %v3044, %v3051
        %v3063 = vmul.f32 %v3045, %v3051
        %v3064 = vmul.f32 %v3046, %v3051
        %v3066 = vlaneseq
        %v3067 = vshrl.u32 %v3066, 7
        %v3068 = vsub.s32 0, %v3067
        %v3069 = vrot.slane %v2890, %v3068
        %v3071 = vadd.f32 %v3053, %v3069
        %v3072 = vadd.f32 %v3054, %v3069
        %v3073 = vadd.f32 %v3055, %v3069
        %v3074 = vadd.f32 %v3056, %v3069
        %v3075 = vadd.f32 %v3057, %v3069
        %v3076 = vadd.f32 %v3058, %v3069
        %v3077 = vadd.f32 %v3059, %v3069
        %v3078 = vadd.f32 %v3060, %v3069
        %v3079 = vadd.f32 %v3061, %v3069
        %v3080 = vadd.f32 %v3062, %v3069
        %v3081 = vadd.f32 %v3063, %v3069
        %v3082 = vadd.f32 %v3064, %v3069
        %3095 = vrot.lane.b32.xlu0 %v3071, 127
        %v3096 = vpop.permute.xlu0 %3095
        %3097 = vrot.lane.b32.xlu0 %v3072, 127
        %v3098 = vpop.permute.xlu0 %3097
        %3099 = vrot.lane.b32.xlu0 %v3073, 127
        %v3100 = vpop.permute.xlu0 %3099
        %3101 = vrot.lane.b32.xlu0 %v3074, 127
        %v3102 = vpop.permute.xlu0 %3101
        %3103 = vrot.lane.b32.xlu0 %v3075, 127
        %v3104 = vpop.permute.xlu0 %3103
        %3105 = vrot.lane.b32.xlu0 %v3076, 127
        %v3106 = vpop.permute.xlu0 %3105
        %3107 = vrot.lane.b32.xlu0 %v3077, 127
        %v3108 = vpop.permute.xlu0 %3107
        %3109 = vrot.lane.b32.xlu0 %v3078, 127
        %v3110 = vpop.permute.xlu0 %3109
        %3111 = vrot.lane.b32.xlu0 %v3079, 127
        %v3112 = vpop.permute.xlu0 %3111
        %3113 = vrot.lane.b32.xlu0 %v3080, 127
        %v3114 = vpop.permute.xlu0 %3113
        %3115 = vrot.lane.b32.xlu0 %v3081, 127
        %v3116 = vpop.permute.xlu0 %3115
        %3117 = vrot.lane.b32.xlu0 %v3082, 127
        %v3118 = vpop.permute.xlu0 %3117
        %3131 = vrot.lane.b32.xlu0 %v3071, 126
        %v3132 = vpop.permute.xlu0 %3131
        %3133 = vrot.lane.b32.xlu0 %v3072, 126
        %v3134 = vpop.permute.xlu0 %3133
        %3135 = vrot.lane.b32.xlu0 %v3073, 126
        %v3136 = vpop.permute.xlu0 %3135
        %3137 = vrot.lane.b32.xlu0 %v3074, 126
        %v3138 = vpop.permute.xlu0 %3137
        %3139 = vrot.lane.b32.xlu0 %v3075, 126
        %v3140 = vpop.permute.xlu0 %3139
        %3141 = vrot.lane.b32.xlu0 %v3076, 126
        %v3142 = vpop.permute.xlu0 %3141
        %3143 = vrot.lane.b32.xlu0 %v3077, 126
        %v3144 = vpop.permute.xlu0 %3143
        %3145 = vrot.lane.b32.xlu0 %v3078, 126
        %v3146 = vpop.permute.xlu0 %3145
        %3147 = vrot.lane.b32.xlu0 %v3079, 126
        %v3148 = vpop.permute.xlu0 %3147
        %3149 = vrot.lane.b32.xlu0 %v3080, 126
        %v3150 = vpop.permute.xlu0 %3149
        %3151 = vrot.lane.b32.xlu0 %v3081, 126
        %v3152 = vpop.permute.xlu0 %3151
        %3153 = vrot.lane.b32.xlu0 %v3082, 126
        %v3154 = vpop.permute.xlu0 %3153
        %s3167 = scalar_lea.vmem %s2, 288
        %v3168 = vld [vmem:[%s3167] sm:$0xff]
        %v3169 = vld [vmem:[%s3167 + $0x8] sm:$0xff]
        %v3170 = vld [vmem:[%s3167 + $0x10] sm:$0xff]
        %v3171 = vld [vmem:[%s3167 + $0x18] sm:$0xff]
        %v3172 = vld [vmem:[%s3167 + $0x20] sm:$0xff]
        %v3173 = vld [vmem:[%s3167 + $0x28] sm:$0xff]
        %v3174 = vld [vmem:[%s3167 + $0x30] sm:$0xff]
        %v3175 = vld [vmem:[%s3167 + $0x38] sm:$0xff]
        %v3176 = vld [vmem:[%s3167 + $0x40] sm:$0xff]
        %v3177 = vld [vmem:[%s3167 + $0x48] sm:$0xff]
        %v3178 = vld [vmem:[%s3167 + $0x50] sm:$0xff]
        %v3179 = vld [vmem:[%s3167 + $0x58] sm:$0xff]
        %v3180 = vld [vmem:[%s3167 + $0x60] sm:$0xff]
        %v3181 = vld [vmem:[%s3167 + $0x68] sm:$0xff]
        %v3182 = vld [vmem:[%s3167 + $0x70] sm:$0xff]
        %v3183 = vld [vmem:[%s3167 + $0x78] sm:$0xff]
        %v3184 = vld [vmem:[%s3167 + $0x80] sm:$0xff]
        %v3185 = vld [vmem:[%s3167 + $0x88] sm:$0xff]
        %v3186 = vld [vmem:[%s3167 + $0x90] sm:$0xff]
        %v3187 = vld [vmem:[%s3167 + $0x98] sm:$0xff]
        %v3188 = vld [vmem:[%s3167 + $0xa0] sm:$0xff]
        %v3189 = vld [vmem:[%s3167 + $0xa8] sm:$0xff]
        %v3190 = vld [vmem:[%s3167 + $0xb0] sm:$0xff]
        %v3191 = vld [vmem:[%s3167 + $0xb8] sm:$0xff]
        %v3192 = vld [vmem:[%s3167 + $0xc0] sm:$0xff]
        %v3193 = vld [vmem:[%s3167 + $0xc8] sm:$0xff]
        %v3194 = vld [vmem:[%s3167 + $0xd0] sm:$0xff]
        %v3195 = vld [vmem:[%s3167 + $0xd8] sm:$0xff]
        %v3196 = vld [vmem:[%s3167 + $0xe0] sm:$0xff]
        %v3197 = vld [vmem:[%s3167 + $0xe8] sm:$0xff]
        %v3198 = vld [vmem:[%s3167 + $0xf0] sm:$0xff]
        %v3199 = vld [vmem:[%s3167 + $0xf8] sm:$0xff]
        %v3200 = vld [vmem:[%s3167 + $0x100] sm:$0xff]
        %v3201 = vld [vmem:[%s3167 + $0x108] sm:$0xff]
        %v3202 = vld [vmem:[%s3167 + $0x110] sm:$0xff]
        %v3203 = vld [vmem:[%s3167 + $0x118] sm:$0xff]
        %s3204 = scalar_lea.vmem %s3, 96
        %v3205 = vld [vmem:[%s3204] sm:$0xff]
        %v3206 = vld [vmem:[%s3204 + $0x8] sm:$0xff]
        %v3207 = vld [vmem:[%s3204 + $0x10] sm:$0xff]
        %v3208 = vld [vmem:[%s3204 + $0x18] sm:$0xff]
        %v3209 = vld [vmem:[%s3204 + $0x20] sm:$0xff]
        %v3210 = vld [vmem:[%s3204 + $0x28] sm:$0xff]
        %v3211 = vld [vmem:[%s3204 + $0x30] sm:$0xff]
        %v3212 = vld [vmem:[%s3204 + $0x38] sm:$0xff]
        %v3213 = vld [vmem:[%s3204 + $0x40] sm:$0xff]
        %v3214 = vld [vmem:[%s3204 + $0x48] sm:$0xff]
        %v3215 = vld [vmem:[%s3204 + $0x50] sm:$0xff]
        %v3216 = vld [vmem:[%s3204 + $0x58] sm:$0xff]
        %3218 = vset.pattern.permute.xlu0 0
        %3219 = vperm.xlu0 %3218, %v3205
        %v3220 = vpop.permute.xlu0 %3219
        %3223 = vset.pattern.permute.xlu0 0
        %3224 = vperm.xlu0 %3223, %v3206
        %v3225 = vpop.permute.xlu0 %3224
        %3228 = vset.pattern.permute.xlu0 0
        %3229 = vperm.xlu0 %3228, %v3207
        %v3230 = vpop.permute.xlu0 %3229
        %3233 = vset.pattern.permute.xlu0 0
        %3234 = vperm.xlu0 %3233, %v3208
        %v3235 = vpop.permute.xlu0 %3234
        %3238 = vset.pattern.permute.xlu0 0
        %3239 = vperm.xlu0 %3238, %v3209
        %v3240 = vpop.permute.xlu0 %3239
        %3243 = vset.pattern.permute.xlu0 0
        %3244 = vperm.xlu0 %3243, %v3210
        %v3245 = vpop.permute.xlu0 %3244
        %3248 = vset.pattern.permute.xlu0 0
        %3249 = vperm.xlu0 %3248, %v3211
        %v3250 = vpop.permute.xlu0 %3249
        %3253 = vset.pattern.permute.xlu0 0
        %3254 = vperm.xlu0 %3253, %v3212
        %v3255 = vpop.permute.xlu0 %3254
        %3258 = vset.pattern.permute.xlu0 0
        %3259 = vperm.xlu0 %3258, %v3213
        %v3260 = vpop.permute.xlu0 %3259
        %3263 = vset.pattern.permute.xlu0 0
        %3264 = vperm.xlu0 %3263, %v3214
        %v3265 = vpop.permute.xlu0 %3264
        %3268 = vset.pattern.permute.xlu0 0
        %3269 = vperm.xlu0 %3268, %v3215
        %v3270 = vpop.permute.xlu0 %3269
        %3273 = vset.pattern.permute.xlu0 0
        %3274 = vperm.xlu0 %3273, %v3216
        %v3275 = vpop.permute.xlu0 %3274
        %v3278 = vsel %vm981, %v3170, 0
        %v3281 = vsel %vm981, %v3173, 0
        %v3284 = vsel %vm981, %v3176, 0
        %v3287 = vsel %vm981, %v3179, 0
        %v3290 = vsel %vm981, %v3182, 0
        %v3293 = vsel %vm981, %v3185, 0
        %v3296 = vsel %vm981, %v3188, 0
        %v3299 = vsel %vm981, %v3191, 0
        %v3302 = vsel %vm981, %v3194, 0
        %v3305 = vsel %vm981, %v3197, 0
        %v3308 = vsel %vm981, %v3200, 0
        %v3311 = vsel %vm981, %v3203, 0
        %3313 = vmatprep.subr.mxu0 0.0
        %3314 = vmatpush1.msra.mxu0 %v3071
        %3315 = vmatprep.subr.mxu0 0.0
        %3316 = vmatpush1.msra.mxu0 %v3072
        %3317 = vmatprep.subr.mxu0 0.0
        %3318 = vmatpush1.msra.mxu0 %v3073
        %3319 = vmatprep.subr.mxu0 0.0
        %3320 = vmatpush1.msra.mxu0 %v3074
        %3321 = vmatprep.subr.mxu0 0.0
        %3322 = vmatpush1.msra.mxu0 %v3075
        %3323 = vmatprep.subr.mxu0 0.0
        %3324 = vmatpush1.msra.mxu0 %v3076
        %3325 = vmatprep.subr.mxu0 0.0
        %3326 = vmatpush1.msra.mxu0 %v3077
        %3327 = vmatprep.subr.mxu0 0.0
        %3328 = vmatpush1.msra.mxu0 %v3078
        %3329 = vmatprep.subr.mxu0 0.0
        %3330 = vmatpush1.msra.mxu0 %v3079
        %3331 = vmatprep.subr.mxu0 0.0
        %3332 = vmatpush1.msra.mxu0 %v3080
        %3333 = vmatprep.subr.mxu0 0.0
        %3334 = vmatpush1.msra.mxu0 %v3081
        %3335 = vmatprep.subr.mxu0 0.0
        %3336 = vmatpush1.msra.mxu0 %v3082
        %3337 = vmatprep.subr.mxu0 0.0
        %3338 = vmatpush1.msra.mxu0 %v3096
        %3339 = vmatprep.subr.mxu0 0.0
        %3340 = vmatpush1.msra.mxu0 %v3098
        %3341 = vmatprep.subr.mxu0 0.0
        %3342 = vmatpush1.msra.mxu0 %v3100
        %3343 = vmatprep.subr.mxu0 0.0
        %3344 = vmatpush1.msra.mxu0 %v3102
        %3345 = vmatprep.subr.mxu0 0.0
        %3346 = vmatpush1.msra.mxu0 %v3104
        %3347 = vmatprep.subr.mxu0 0.0
        %3348 = vmatpush1.msra.mxu0 %v3106
        %3349 = vmatprep.subr.mxu0 0.0
        %3350 = vmatpush1.msra.mxu0 %v3108
        %3351 = vmatprep.subr.mxu0 0.0
        %3352 = vmatpush1.msra.mxu0 %v3110
        %3353 = vmatprep.subr.mxu0 0.0
        %3354 = vmatpush1.msra.mxu0 %v3112
        %3355 = vmatprep.subr.mxu0 0.0
        %3356 = vmatpush1.msra.mxu0 %v3114
        %3357 = vmatprep.subr.mxu0 0.0
        %3358 = vmatpush1.msra.mxu0 %v3116
        %3359 = vmatprep.subr.mxu0 0.0
        %3360 = vmatpush1.msra.mxu0 %v3118
        %3361 = vmatprep.subr.mxu0 0.0
        %3362 = vmatpush1.msra.mxu0 %v3132
        %3363 = vmatprep.subr.mxu0 0.0
        %3364 = vmatpush1.msra.mxu0 %v3134
        %3365 = vmatprep.subr.mxu0 0.0
        %3366 = vmatpush1.msra.mxu0 %v3136
        %3367 = vmatprep.subr.mxu0 0.0
        %3368 = vmatpush1.msra.mxu0 %v3138
        %3369 = vmatprep.subr.mxu0 0.0
        %3370 = vmatpush1.msra.mxu0 %v3140
        %3371 = vmatprep.subr.mxu0 0.0
        %3372 = vmatpush1.msra.mxu0 %v3142
        %3373 = vmatprep.subr.mxu0 0.0
        %3374 = vmatpush1.msra.mxu0 %v3144
        %3375 = vmatprep.subr.mxu0 0.0
        %3376 = vmatpush1.msra.mxu0 %v3146
        %3377 = vmatprep.mubr.f32.mxu0 %v3169
        %3378 = vmatmul.mubr.f32.gmra.mrb[0].mxu0 %v3168
        %v3379 = vpop.f32.mrb[0].mxu0
        %v3380 = vadd.f32 %v3220, %v3379
        %v3381 = vpop.f32.mrb[0].mxu0
        %3382 = vmatprep.mubr.f32.mxu0 %v3172
        %3383 = vmatmul.mubr.f32.gmra.mrb[0].mxu0 %v3171
        %v3384 = vpop.f32.mrb[0].mxu0
        %v3385 = vadd.f32 %v3225, %v3384
        %v3386 = vpop.f32.mrb[0].mxu0
        %3387 = vmatprep.mubr.f32.mxu0 %v3175
        %3388 = vmatmul.mubr.f32.gmra.mrb[0].mxu0 %v3174
        %v3389 = vpop.f32.mrb[0].mxu0
        %v3390 = vadd.f32 %v3230, %v3389
        %v3391 = vpop.f32.mrb[0].mxu0
        %3392 = vmatprep.mubr.f32.mxu0 %v3178
        %3393 = vmatmul.mubr.f32.gmra.mrb[0].mxu0 %v3177
        %v3394 = vpop.f32.mrb[0].mxu0
        %v3395 = vadd.f32 %v3235, %v3394
        %v3396 = vpop.f32.mrb[0].mxu0
        %3397 = vmatprep.mubr.f32.mxu0 %v3181
        %3398 = vmatmul.mubr.f32.gmra.mrb[0].mxu0 %v3180
        %v3399 = vpop.f32.mrb[0].mxu0
        %v3400 = vadd.f32 %v3240, %v3399
        %v3401 = vpop.f32.mrb[0].mxu0
        %3402 = vmatprep.mubr.f32.mxu0 %v3184
        %3403 = vmatmul.mubr.f32.gmra.mrb[0].mxu0 %v3183
        %v3404 = vpop.f32.mrb[0].mxu0
        %v3405 = vadd.f32 %v3245, %v3404
        %v3406 = vpop.f32.mrb[0].mxu0
        %3407 = vmatprep.mubr.f32.mxu0 %v3187
        %3408 = vmatmul.mubr.f32.gmra.mrb[0].mxu0 %v3186
        %v3409 = vpop.f32.mrb[0].mxu0
        %v3410 = vadd.f32 %v3250, %v3409
        %v3411 = vpop.f32.mrb[0].mxu0
        %3412 = vmatprep.mubr.f32.mxu0 %v3190
        %3413 = vmatmul.mubr.f32.gmra.mrb[0].mxu0 %v3189
        %v3414 = vpop.f32.mrb[0].mxu0
        %v3415 = vadd.f32 %v3255, %v3414
        %v3416 = vpop.f32.mrb[0].mxu0
        %3417 = vmatprep.mubr.f32.mxu0 %v3193
        %3418 = vmatmul.mubr.f32.gmra.mrb[0].mxu0 %v3192
        %v3419 = vpop.f32.mrb[0].mxu0
        %v3420 = vadd.f32 %v3260, %v3419
        %v3421 = vpop.f32.mrb[0].mxu0
        %3422 = vmatprep.mubr.f32.mxu0 %v3196
        %3423 = vmatmul.mubr.f32.gmra.mrb[0].mxu0 %v3195
        %v3424 = vpop.f32.mrb[0].mxu0
        %v3425 = vadd.f32 %v3265, %v3424
        %v3426 = vpop.f32.mrb[0].mxu0
        %3427 = vmatprep.mubr.f32.mxu0 %v3199
        %3428 = vmatmul.mubr.f32.gmra.mrb[0].mxu0 %v3198
        %v3429 = vpop.f32.mrb[0].mxu0
        %v3430 = vadd.f32 %v3270, %v3429
        %v3431 = vpop.f32.mrb[0].mxu0
        %3432 = vmatprep.mubr.f32.mxu0 %v3202
        %3433 = vmatmul.mubr.f32.gmra.mrb[0].mxu0 %v3201
        %v3434 = vpop.f32.mrb[0].mxu0
        %v3435 = vadd.f32 %v3275, %v3434
        %v3436 = vpop.f32.mrb[0].mxu0
        %3437 = vdwg.mxu0
        %3438 = vmatprep.subr.mxu0 0.0
        %3439 = vmatpush1.msra.mxu0 %v3148
        %3440 = vmatprep.subr.mxu0 0.0
        %3441 = vmatpush1.msra.mxu0 %v3150
        %3442 = vmatprep.subr.mxu0 0.0
        %3443 = vmatpush1.msra.mxu0 %v3152
        %3444 = vmatprep.subr.mxu0 0.0
        %3445 = vmatpush1.msra.mxu0 %v3154
        %3446 = vmatprep.subr.mxu0 0.0
        %3447 = vmatpush1.msra.mxu0 0.0
        %3448 = vmatprep.subr.mxu0 0.0
        %3449 = vmatpush1.msra.mxu0 0.0
        %3450 = vmatprep.subr.mxu0 0.0
        %3451 = vmatpush1.msra.mxu0 0.0
        %3452 = vmatprep.subr.mxu0 0.0
        %3453 = vmatpush1.msra.mxu0 0.0
        %3454 = vmatprep.subr.mxu0 0.0
        %3455 = vmatpush1.msra.mxu0 0.0
        %3456 = vmatprep.subr.mxu0 0.0
        %3457 = vmatpush1.msra.mxu0 0.0
        %3458 = vmatprep.subr.mxu0 0.0
        %3459 = vmatpush1.msra.mxu0 0.0
        %3460 = vmatprep.subr.mxu0 0.0
        %3461 = vmatpush1.msra.mxu0 0.0
        %3462 = vmatprep.subr.mxu0 0.0
        %3463 = vmatpush1.msra.mxu0 0.0
        %3464 = vmatprep.subr.mxu0 0.0
        %3465 = vmatpush1.msra.mxu0 0.0
        %3466 = vmatprep.subr.mxu0 0.0
        %3467 = vmatpush1.msra.mxu0 0.0
        %3468 = vmatprep.subr.mxu0 0.0
        %3469 = vmatpush1.msra.mxu0 0.0
        %3470 = vmatprep.subr.mxu0 0.0
        %3471 = vmatpush1.msra.mxu0 0.0
        %3472 = vmatprep.subr.mxu0 0.0
        %3473 = vmatpush1.msra.mxu0 0.0
        %3474 = vmatprep.subr.mxu0 0.0
        %3475 = vmatpush1.msra.mxu0 0.0
        %3476 = vmatprep.subr.mxu0 0.0
        %3477 = vmatpush1.msra.mxu0 0.0
        %3478 = vmatprep.subr.mxu0 0.0
        %3479 = vmatpush1.msra.mxu0 0.0
        %3480 = vmatprep.subr.mxu0 0.0
        %3481 = vmatpush1.msra.mxu0 0.0
        %3482 = vmatprep.subr.mxu0 0.0
        %3483 = vmatpush1.msra.mxu0 0.0
        %3484 = vmatprep.subr.mxu0 0.0
        %3485 = vmatpush1.msra.mxu0 0.0
        %3486 = vmatprep.subr.mxu0 0.0
        %3487 = vmatpush1.msra.mxu0 0.0
        %3488 = vmatprep.subr.mxu0 0.0
        %3489 = vmatpush1.msra.mxu0 0.0
        %3490 = vmatprep.subr.mxu0 0.0
        %3491 = vmatpush1.msra.mxu0 0.0
        %3492 = vmatprep.subr.mxu0 0.0
        %3493 = vmatpush1.msra.mxu0 0.0
        %3494 = vmatprep.subr.mxu0 0.0
        %3495 = vmatpush1.msra.mxu0 0.0
        %3496 = vmatprep.subr.mxu0 0.0
        %3497 = vmatpush1.msra.mxu0 0.0
        %3498 = vmatprep.subr.mxu0 0.0
        %3499 = vmatpush1.msra.mxu0 0.0
        %3500 = vmatprep.subr.mxu0 0.0
        %3501 = vmatpush1.msra.mxu0 0.0
        %3502 = vmatprep.mubr.f32.mxu0 0.0
        %3503 = vmatmul.mubr.f32.gmra.mrb[0].mxu0 %v3278
        %v3504 = vpop.f32.mrb[0].mxu0
        %v3505 = vadd.f32 %v3380, %v3504
        %v3506 = vpop.f32.mrb[0].mxu0
        %3507 = vmatprep.mubr.f32.mxu0 0.0
        %3508 = vmatmul.mubr.f32.gmra.mrb[0].mxu0 %v3281
        %v3509 = vpop.f32.mrb[0].mxu0
        %v3510 = vadd.f32 %v3385, %v3509
        %v3511 = vpop.f32.mrb[0].mxu0
        %3512 = vmatprep.mubr.f32.mxu0 0.0
        %3513 = vmatmul.mubr.f32.gmra.mrb[0].mxu0 %v3284
        %v3514 = vpop.f32.mrb[0].mxu0
        %v3515 = vadd.f32 %v3390, %v3514
        %v3516 = vpop.f32.mrb[0].mxu0
        %3517 = vmatprep.mubr.f32.mxu0 0.0
        %3518 = vmatmul.mubr.f32.gmra.mrb[0].mxu0 %v3287
        %v3519 = vpop.f32.mrb[0].mxu0
        %v3520 = vadd.f32 %v3395, %v3519
        %v3521 = vpop.f32.mrb[0].mxu0
        %3522 = vmatprep.mubr.f32.mxu0 0.0
        %3523 = vmatmul.mubr.f32.gmra.mrb[0].mxu0 %v3290
        %v3524 = vpop.f32.mrb[0].mxu0
        %v3525 = vadd.f32 %v3400, %v3524
        %v3526 = vpop.f32.mrb[0].mxu0
        %3527 = vmatprep.mubr.f32.mxu0 0.0
        %3528 = vmatmul.mubr.f32.gmra.mrb[0].mxu0 %v3293
        %v3529 = vpop.f32.mrb[0].mxu0
        %v3530 = vadd.f32 %v3405, %v3529
        %v3531 = vpop.f32.mrb[0].mxu0
        %3532 = vmatprep.mubr.f32.mxu0 0.0
        %3533 = vmatmul.mubr.f32.gmra.mrb[0].mxu0 %v3296
        %v3534 = vpop.f32.mrb[0].mxu0
        %v3535 = vadd.f32 %v3410, %v3534
        %v3536 = vpop.f32.mrb[0].mxu0
        %3537 = vmatprep.mubr.f32.mxu0 0.0
        %3538 = vmatmul.mubr.f32.gmra.mrb[0].mxu0 %v3299
        %v3539 = vpop.f32.mrb[0].mxu0
        %v3540 = vadd.f32 %v3415, %v3539
        %v3541 = vpop.f32.mrb[0].mxu0
        %3542 = vmatprep.mubr.f32.mxu0 0.0
        %3543 = vmatmul.mubr.f32.gmra.mrb[0].mxu0 %v3302
        %v3544 = vpop.f32.mrb[0].mxu0
        %v3545 = vadd.f32 %v3420, %v3544
        %v3546 = vpop.f32.mrb[0].mxu0
        %3547 = vmatprep.mubr.f32.mxu0 0.0
        %3548 = vmatmul.mubr.f32.gmra.mrb[0].mxu0 %v3305
        %v3549 = vpop.f32.mrb[0].mxu0
        %v3550 = vadd.f32 %v3425, %v3549
        %v3551 = vpop.f32.mrb[0].mxu0
        %3552 = vmatprep.mubr.f32.mxu0 0.0
        %3553 = vmatmul.mubr.f32.gmra.mrb[0].mxu0 %v3308
        %v3554 = vpop.f32.mrb[0].mxu0
        %v3555 = vadd.f32 %v3430, %v3554
        %v3556 = vpop.f32.mrb[0].mxu0
        %3557 = vmatprep.mubr.f32.mxu0 0.0
        %3558 = vmatmul.mubr.f32.gmra.mrb[0].mxu0 %v3311
        %v3559 = vpop.f32.mrb[0].mxu0
        %v3560 = vadd.f32 %v3435, %v3559
        %v3561 = vpop.f32.mrb[0].mxu0
        %3562 = vdwg.mxu0
        %v3563 = vmul.f32 %v3505, 0.17677669
        %v3564 = vmul.f32 %v3510, 0.17677669
        %v3565 = vmul.f32 %v3515, 0.17677669
        %v3566 = vmul.f32 %v3520, 0.17677669
        %v3567 = vmul.f32 %v3525, 0.17677669
        %v3568 = vmul.f32 %v3530, 0.17677669
        %v3569 = vmul.f32 %v3535, 0.17677669
        %v3570 = vmul.f32 %v3540, 0.17677669
        %v3571 = vmul.f32 %v3545, 0.17677669
        %v3572 = vmul.f32 %v3550, 0.17677669
        %v3573 = vmul.f32 %v3555, 0.17677669
        %v3574 = vmul.f32 %v3560, 0.17677669
        %s3575 = scalar_lea.vmem [#allocation5], 288
        %v3576 = vld [vmem:[%s3575] sm:$0xff]
        %v3577 = vld [vmem:[%s3575 + $0x8] sm:$0xff]
        %v3578 = vld [vmem:[%s3575 + $0x10] sm:$0xff]
        %v3579 = vld [vmem:[%s3575 + $0x18] sm:$0xff]
        %v3580 = vld [vmem:[%s3575 + $0x20] sm:$0xff]
        %v3581 = vld [vmem:[%s3575 + $0x28] sm:$0xff]
        %v3582 = vld [vmem:[%s3575 + $0x30] sm:$0xff]
        %v3583 = vld [vmem:[%s3575 + $0x38] sm:$0xff]
        %v3584 = vld [vmem:[%s3575 + $0x40] sm:$0xff]
        %v3585 = vld [vmem:[%s3575 + $0x48] sm:$0xff]
        %v3586 = vld [vmem:[%s3575 + $0x50] sm:$0xff]
        %v3587 = vld [vmem:[%s3575 + $0x58] sm:$0xff]
        %v3588 = vld [vmem:[%s3575 + $0x60] sm:$0xff]
        %v3589 = vld [vmem:[%s3575 + $0x68] sm:$0xff]
        %v3590 = vld [vmem:[%s3575 + $0x70] sm:$0xff]
        %v3591 = vld [vmem:[%s3575 + $0x78] sm:$0xff]
        %v3592 = vld [vmem:[%s3575 + $0x80] sm:$0xff]
        %v3593 = vld [vmem:[%s3575 + $0x88] sm:$0xff]
        %v3594 = vld [vmem:[%s3575 + $0x90] sm:$0xff]
        %v3595 = vld [vmem:[%s3575 + $0x98] sm:$0xff]
        %v3596 = vld [vmem:[%s3575 + $0xa0] sm:$0xff]
        %v3597 = vld [vmem:[%s3575 + $0xa8] sm:$0xff]
        %v3598 = vld [vmem:[%s3575 + $0xb0] sm:$0xff]
        %v3599 = vld [vmem:[%s3575 + $0xb8] sm:$0xff]
        %v3600 = vld [vmem:[%s3575 + $0xc0] sm:$0xff]
        %v3601 = vld [vmem:[%s3575 + $0xc8] sm:$0xff]
        %v3602 = vld [vmem:[%s3575 + $0xd0] sm:$0xff]
        %v3603 = vld [vmem:[%s3575 + $0xd8] sm:$0xff]
        %v3604 = vld [vmem:[%s3575 + $0xe0] sm:$0xff]
        %v3605 = vld [vmem:[%s3575 + $0xe8] sm:$0xff]
        %v3606 = vld [vmem:[%s3575 + $0xf0] sm:$0xff]
        %v3607 = vld [vmem:[%s3575 + $0xf8] sm:$0xff]
        %v3608 = vld [vmem:[%s3575 + $0x100] sm:$0xff]
        %v3609 = vld [vmem:[%s3575 + $0x108] sm:$0xff]
        %v3610 = vld [vmem:[%s3575 + $0x110] sm:$0xff]
        %v3611 = vld [vmem:[%s3575 + $0x118] sm:$0xff]
        %s3612 = scalar_lea.vmem %s5, 96
        %v3613 = vld [vmem:[%s3612] sm:$0xff]
        %v3614 = vld [vmem:[%s3612 + $0x8] sm:$0xff]
        %v3615 = vld [vmem:[%s3612 + $0x10] sm:$0xff]
        %v3616 = vld [vmem:[%s3612 + $0x18] sm:$0xff]
        %v3617 = vld [vmem:[%s3612 + $0x20] sm:$0xff]
        %v3618 = vld [vmem:[%s3612 + $0x28] sm:$0xff]
        %v3619 = vld [vmem:[%s3612 + $0x30] sm:$0xff]
        %v3620 = vld [vmem:[%s3612 + $0x38] sm:$0xff]
        %v3621 = vld [vmem:[%s3612 + $0x40] sm:$0xff]
        %v3622 = vld [vmem:[%s3612 + $0x48] sm:$0xff]
        %v3623 = vld [vmem:[%s3612 + $0x50] sm:$0xff]
        %v3624 = vld [vmem:[%s3612 + $0x58] sm:$0xff]
        %3626 = vset.pattern.permute.xlu0 0
        %3627 = vperm.xlu0 %3626, %v3613
        %v3628 = vpop.permute.xlu0 %3627
        %3631 = vset.pattern.permute.xlu0 0
        %3632 = vperm.xlu0 %3631, %v3614
        %v3633 = vpop.permute.xlu0 %3632
        %3636 = vset.pattern.permute.xlu0 0
        %3637 = vperm.xlu0 %3636, %v3615
        %v3638 = vpop.permute.xlu0 %3637
        %3641 = vset.pattern.permute.xlu0 0
        %3642 = vperm.xlu0 %3641, %v3616
        %v3643 = vpop.permute.xlu0 %3642
        %3646 = vset.pattern.permute.xlu0 0
        %3647 = vperm.xlu0 %3646, %v3617
        %v3648 = vpop.permute.xlu0 %3647
        %3651 = vset.pattern.permute.xlu0 0
        %3652 = vperm.xlu0 %3651, %v3618
        %v3653 = vpop.permute.xlu0 %3652
        %3656 = vset.pattern.permute.xlu0 0
        %3657 = vperm.xlu0 %3656, %v3619
        %v3658 = vpop.permute.xlu0 %3657
        %3661 = vset.pattern.permute.xlu0 0
        %3662 = vperm.xlu0 %3661, %v3620
        %v3663 = vpop.permute.xlu0 %3662
        %3666 = vset.pattern.permute.xlu0 0
        %3667 = vperm.xlu0 %3666, %v3621
        %v3668 = vpop.permute.xlu0 %3667
        %3671 = vset.pattern.permute.xlu0 0
        %3672 = vperm.xlu0 %3671, %v3622
        %v3673 = vpop.permute.xlu0 %3672
        %3676 = vset.pattern.permute.xlu0 0
        %3677 = vperm.xlu0 %3676, %v3623
        %v3678 = vpop.permute.xlu0 %3677
        %3681 = vset.pattern.permute.xlu0 0
        %3682 = vperm.xlu0 %3681, %v3624
        %v3683 = vpop.permute.xlu0 %3682
        %v3686 = vsel %vm981, %v3578, 0
        %v3689 = vsel %vm981, %v3581, 0
        %v3692 = vsel %vm981, %v3584, 0
        %v3695 = vsel %vm981, %v3587, 0
        %v3698 = vsel %vm981, %v3590, 0
        %v3701 = vsel %vm981, %v3593, 0
        %v3704 = vsel %vm981, %v3596, 0
        %v3707 = vsel %vm981, %v3599, 0
        %v3710 = vsel %vm981, %v3602, 0
        %v3713 = vsel %vm981, %v3605, 0
        %v3716 = vsel %vm981, %v3608, 0
        %v3719 = vsel %vm981, %v3611, 0
        %3721 = vmatprep.subr.mxu0 0.0
        %3722 = vmatpush1.msra.mxu0 %v3071
        %3723 = vmatprep.subr.mxu0 0.0
        %3724 = vmatpush1.msra.mxu0 %v3072
        %3725 = vmatprep.subr.mxu0 0.0
        %3726 = vmatpush1.msra.mxu0 %v3073
        %3727 = vmatprep.subr.mxu0 0.0
        %3728 = vmatpush1.msra.mxu0 %v3074
        %3729 = vmatprep.subr.mxu0 0.0
        %3730 = vmatpush1.msra.mxu0 %v3075
        %3731 = vmatprep.subr.mxu0 0.0
        %3732 = vmatpush1.msra.mxu0 %v3076
        %3733 = vmatprep.subr.mxu0 0.0
        %3734 = vmatpush1.msra.mxu0 %v3077
        %3735 = vmatprep.subr.mxu0 0.0
        %3736 = vmatpush1.msra.mxu0 %v3078
        %3737 = vmatprep.subr.mxu0 0.0
        %3738 = vmatpush1.msra.mxu0 %v3079
        %3739 = vmatprep.subr.mxu0 0.0
        %3740 = vmatpush1.msra.mxu0 %v3080
        %3741 = vmatprep.subr.mxu0 0.0
        %3742 = vmatpush1.msra.mxu0 %v3081
        %3743 = vmatprep.subr.mxu0 0.0
        %3744 = vmatpush1.msra.mxu0 %v3082
        %3745 = vmatprep.subr.mxu0 0.0
        %3746 = vmatpush1.msra.mxu0 %v3096
        %3747 = vmatprep.subr.mxu0 0.0
        %3748 = vmatpush1.msra.mxu0 %v3098
        %3749 = vmatprep.subr.mxu0 0.0
        %3750 = vmatpush1.msra.mxu0 %v3100
        %3751 = vmatprep.subr.mxu0 0.0
        %3752 = vmatpush1.msra.mxu0 %v3102
        %3753 = vmatprep.subr.mxu0 0.0
        %3754 = vmatpush1.msra.mxu0 %v3104
        %3755 = vmatprep.subr.mxu0 0.0
        %3756 = vmatpush1.msra.mxu0 %v3106
        %3757 = vmatprep.subr.mxu0 0.0
        %3758 = vmatpush1.msra.mxu0 %v3108
        %3759 = vmatprep.subr.mxu0 0.0
        %3760 = vmatpush1.msra.mxu0 %v3110
        %3761 = vmatprep.subr.mxu0 0.0
        %3762 = vmatpush1.msra.mxu0 %v3112
        %3763 = vmatprep.subr.mxu0 0.0
        %3764 = vmatpush1.msra.mxu0 %v3114
        %3765 = vmatprep.subr.mxu0 0.0
        %3766 = vmatpush1.msra.mxu0 %v3116
        %3767 = vmatprep.subr.mxu0 0.0
        %3768 = vmatpush1.msra.mxu0 %v3118
        %3769 = vmatprep.subr.mxu0 0.0
        %3770 = vmatpush1.msra.mxu0 %v3132
        %3771 = vmatprep.subr.mxu0 0.0
        %3772 = vmatpush1.msra.mxu0 %v3134
        %3773 = vmatprep.subr.mxu0 0.0
        %3774 = vmatpush1.msra.mxu0 %v3136
        %3775 = vmatprep.subr.mxu0 0.0
        %3776 = vmatpush1.msra.mxu0 %v3138
        %3777 = vmatprep.subr.mxu0 0.0
        %3778 = vmatpush1.msra.mxu0 %v3140
        %3779 = vmatprep.subr.mxu0 0.0
        %3780 = vmatpush1.msra.mxu0 %v3142
        %3781 = vmatprep.subr.mxu0 0.0
        %3782 = vmatpush1.msra.mxu0 %v3144
        %3783 = vmatprep.subr.mxu0 0.0
        %3784 = vmatpush1.msra.mxu0 %v3146
        %3785 = vmatprep.mubr.f32.mxu0 %v3577
        %3786 = vmatmul.mubr.f32.gmra.mrb[0].mxu0 %v3576
        %v3787 = vpop.f32.mrb[0].mxu0
        %v3788 = vadd.f32 %v3628, %v3787
        %v3789 = vpop.f32.mrb[0].mxu0
        %3790 = vmatprep.mubr.f32.mxu0 %v3580
        %3791 = vmatmul.mubr.f32.gmra.mrb[0].mxu0 %v3579
        %v3792 = vpop.f32.mrb[0].mxu0
        %v3793 = vadd.f32 %v3633, %v3792
        %v3794 = vpop.f32.mrb[0].mxu0
        %3795 = vmatprep.mubr.f32.mxu0 %v3583
        %3796 = vmatmul.mubr.f32.gmra.mrb[0].mxu0 %v3582
        %v3797 = vpop.f32.mrb[0].mxu0
        %v3798 = vadd.f32 %v3638, %v3797
        %v3799 = vpop.f32.mrb[0].mxu0
        %3800 = vmatprep.mubr.f32.mxu0 %v3586
        %3801 = vmatmul.mubr.f32.gmra.mrb[0].mxu0 %v3585
        %v3802 = vpop.f32.mrb[0].mxu0
        %v3803 = vadd.f32 %v3643, %v3802
        %v3804 = vpop.f32.mrb[0].mxu0
        %3805 = vmatprep.mubr.f32.mxu0 %v3589
        %3806 = vmatmul.mubr.f32.gmra.mrb[0].mxu0 %v3588
        %v3807 = vpop.f32.mrb[0].mxu0
        %v3808 = vadd.f32 %v3648, %v3807
        %v3809 = vpop.f32.mrb[0].mxu0
        %3810 = vmatprep.mubr.f32.mxu0 %v3592
        %3811 = vmatmul.mubr.f32.gmra.mrb[0].mxu0 %v3591
        %v3812 = vpop.f32.mrb[0].mxu0
        %v3813 = vadd.f32 %v3653, %v3812
        %v3814 = vpop.f32.mrb[0].mxu0
        %3815 = vmatprep.mubr.f32.mxu0 %v3595
        %3816 = vmatmul.mubr.f32.gmra.mrb[0].mxu0 %v3594
        %v3817 = vpop.f32.mrb[0].mxu0
        %v3818 = vadd.f32 %v3658, %v3817
        %v3819 = vpop.f32.mrb[0].mxu0
        %3820 = vmatprep.mubr.f32.mxu0 %v3598
        %3821 = vmatmul.mubr.f32.gmra.mrb[0].mxu0 %v3597
        %v3822 = vpop.f32.mrb[0].mxu0
        %v3823 = vadd.f32 %v3663, %v3822
        %v3824 = vpop.f32.mrb[0].mxu0
        %3825 = vmatprep.mubr.f32.mxu0 %v3601
        %3826 = vmatmul.mubr.f32.gmra.mrb[0].mxu0 %v3600
        %v3827 = vpop.f32.mrb[0].mxu0
        %v3828 = vadd.f32 %v3668, %v3827
        %v3829 = vpop.f32.mrb[0].mxu0
        %3830 = vmatprep.mubr.f32.mxu0 %v3604
        %3831 = vmatmul.mubr.f32.gmra.mrb[0].mxu0 %v3603
        %v3832 = vpop.f32.mrb[0].mxu0
        %v3833 = vadd.f32 %v3673, %v3832
        %v3834 = vpop.f32.mrb[0].mxu0
        %3835 = vmatprep.mubr.f32.mxu0 %v3607
        %3836 = vmatmul.mubr.f32.gmra.mrb[0].mxu0 %v3606
        %v3837 = vpop.f32.mrb[0].mxu0
        %v3838 = vadd.f32 %v3678, %v3837
        %v3839 = vpop.f32.mrb[0].mxu0
        %3840 = vmatprep.mubr.f32.mxu0 %v3610
        %3841 = vmatmul.mubr.f32.gmra.mrb[0].mxu0 %v3609
        %v3842 = vpop.f32.mrb[0].mxu0
        %v3843 = vadd.f32 %v3683, %v3842
        %v3844 = vpop.f32.mrb[0].mxu0
        %3845 = vdwg.mxu0
        %3846 = vmatprep.subr.mxu0 0.0
        %3847 = vmatpush1.msra.mxu0 %v3148
        %3848 = vmatprep.subr.mxu0 0.0
        %3849 = vmatpush1.msra.mxu0 %v3150
        %3850 = vmatprep.subr.mxu0 0.0
        %3851 = vmatpush1.msra.mxu0 %v3152
        %3852 = vmatprep.subr.mxu0 0.0
        %3853 = vmatpush1.msra.mxu0 %v3154
        %3854 = vmatprep.subr.mxu0 0.0
        %3855 = vmatpush1.msra.mxu0 0.0
        %3856 = vmatprep.subr.mxu0 0.0
        %3857 = vmatpush1.msra.mxu0 0.0
        %3858 = vmatprep.subr.mxu0 0.0
        %3859 = vmatpush1.msra.mxu0 0.0
        %3860 = vmatprep.subr.mxu0 0.0
        %3861 = vmatpush1.msra.mxu0 0.0
        %3862 = vmatprep.subr.mxu0 0.0
        %3863 = vmatpush1.msra.mxu0 0.0
        %3864 = vmatprep.subr.mxu0 0.0
        %3865 = vmatpush1.msra.mxu0 0.0
        %3866 = vmatprep.subr.mxu0 0.0
        %3867 = vmatpush1.msra.mxu0 0.0
        %3868 = vmatprep.subr.mxu0 0.0
        %3869 = vmatpush1.msra.mxu0 0.0
        %3870 = vmatprep.subr.mxu0 0.0
        %3871 = vmatpush1.msra.mxu0 0.0
        %3872 = vmatprep.subr.mxu0 0.0
        %3873 = vmatpush1.msra.mxu0 0.0
        %3874 = vmatprep.subr.mxu0 0.0
        %3875 = vmatpush1.msra.mxu0 0.0
        %3876 = vmatprep.subr.mxu0 0.0
        %3877 = vmatpush1.msra.mxu0 0.0
        %3878 = vmatprep.subr.mxu0 0.0
        %3879 = vmatpush1.msra.mxu0 0.0
        %3880 = vmatprep.subr.mxu0 0.0
        %3881 = vmatpush1.msra.mxu0 0.0
        %3882 = vmatprep.subr.mxu0 0.0
        %3883 = vmatpush1.msra.mxu0 0.0
        %3884 = vmatprep.subr.mxu0 0.0
        %3885 = vmatpush1.msra.mxu0 0.0
        %3886 = vmatprep.subr.mxu0 0.0
        %3887 = vmatpush1.msra.mxu0 0.0
        %3888 = vmatprep.subr.mxu0 0.0
        %3889 = vmatpush1.msra.mxu0 0.0
        %3890 = vmatprep.subr.mxu0 0.0
        %3891 = vmatpush1.msra.mxu0 0.0
        %3892 = vmatprep.subr.mxu0 0.0
        %3893 = vmatpush1.msra.mxu0 0.0
        %3894 = vmatprep.subr.mxu0 0.0
        %3895 = vmatpush1.msra.mxu0 0.0
        %3896 = vmatprep.subr.mxu0 0.0
        %3897 = vmatpush1.msra.mxu0 0.0
        %3898 = vmatprep.subr.mxu0 0.0
        %3899 = vmatpush1.msra.mxu0 0.0
        %3900 = vmatprep.subr.mxu0 0.0
        %3901 = vmatpush1.msra.mxu0 0.0
        %3902 = vmatprep.subr.mxu0 0.0
        %3903 = vmatpush1.msra.mxu0 0.0
        %3904 = vmatprep.subr.mxu0 0.0
        %3905 = vmatpush1.msra.mxu0 0.0
        %3906 = vmatprep.subr.mxu0 0.0
        %3907 = vmatpush1.msra.mxu0 0.0
        %3908 = vmatprep.subr.mxu0 0.0
        %3909 = vmatpush1.msra.mxu0 0.0
        %3910 = vmatprep.mubr.f32.mxu0 0.0
        %3911 = vmatmul.mubr.f32.gmra.mrb[0].mxu0 %v3686
        %v3912 = vpop.f32.mrb[0].mxu0
        %v3913 = vadd.f32 %v3788, %v3912
        %v3914 = vpop.f32.mrb[0].mxu0
        %3915 = vmatprep.mubr.f32.mxu0 0.0
        %3916 = vmatmul.mubr.f32.gmra.mrb[0].mxu0 %v3689
        %v3917 = vpop.f32.mrb[0].mxu0
        %v3918 = vadd.f32 %v3793, %v3917
        %v3919 = vpop.f32.mrb[0].mxu0
        %3920 = vmatprep.mubr.f32.mxu0 0.0
        %3921 = vmatmul.mubr.f32.gmra.mrb[0].mxu0 %v3692
        %v3922 = vpop.f32.mrb[0].mxu0
        %v3923 = vadd.f32 %v3798, %v3922
        %v3924 = vpop.f32.mrb[0].mxu0
        %3925 = vmatprep.mubr.f32.mxu0 0.0
        %3926 = vmatmul.mubr.f32.gmra.mrb[0].mxu0 %v3695
        %v3927 = vpop.f32.mrb[0].mxu0
        %v3928 = vadd.f32 %v3803, %v3927
        %v3929 = vpop.f32.mrb[0].mxu0
        %3930 = vmatprep.mubr.f32.mxu0 0.0
        %3931 = vmatmul.mubr.f32.gmra.mrb[0].mxu0 %v3698
        %v3932 = vpop.f32.mrb[0].mxu0
        %v3933 = vadd.f32 %v3808, %v3932
        %v3934 = vpop.f32.mrb[0].mxu0
        %3935 = vmatprep.mubr.f32.mxu0 0.0
        %3936 = vmatmul.mubr.f32.gmra.mrb[0].mxu0 %v3701
        %v3937 = vpop.f32.mrb[0].mxu0
        %v3938 = vadd.f32 %v3813, %v3937
        %v3939 = vpop.f32.mrb[0].mxu0
        %3940 = vmatprep.mubr.f32.mxu0 0.0
        %3941 = vmatmul.mubr.f32.gmra.mrb[0].mxu0 %v3704
        %v3942 = vpop.f32.mrb[0].mxu0
        %v3943 = vadd.f32 %v3818, %v3942
        %v3944 = vpop.f32.mrb[0].mxu0
        %3945 = vmatprep.mubr.f32.mxu0 0.0
        %3946 = vmatmul.mubr.f32.gmra.mrb[0].mxu0 %v3707
        %v3947 = vpop.f32.mrb[0].mxu0
        %v3948 = vadd.f32 %v3823, %v3947
        %v3949 = vpop.f32.mrb[0].mxu0
        %3950 = vmatprep.mubr.f32.mxu0 0.0
        %3951 = vmatmul.mubr.f32.gmra.mrb[0].mxu0 %v3710
        %v3952 = vpop.f32.mrb[0].mxu0
        %v3953 = vadd.f32 %v3828, %v3952
        %v3954 = vpop.f32.mrb[0].mxu0
        %3955 = vmatprep.mubr.f32.mxu0 0.0
        %3956 = vmatmul.mubr.f32.gmra.mrb[0].mxu0 %v3713
        %v3957 = vpop.f32.mrb[0].mxu0
        %v3958 = vadd.f32 %v3833, %v3957
        %v3959 = vpop.f32.mrb[0].mxu0
        %3960 = vmatprep.mubr.f32.mxu0 0.0
        %3961 = vmatmul.mubr.f32.gmra.mrb[0].mxu0 %v3716
        %v3962 = vpop.f32.mrb[0].mxu0
        %v3963 = vadd.f32 %v3838, %v3962
        %v3964 = vpop.f32.mrb[0].mxu0
        %3965 = vmatprep.mubr.f32.mxu0 0.0
        %3966 = vmatmul.mubr.f32.gmra.mrb[0].mxu0 %v3719
        %v3967 = vpop.f32.mrb[0].mxu0
        %v3968 = vadd.f32 %v3843, %v3967
        %v3969 = vpop.f32.mrb[0].mxu0
        %3970 = vdwg.mxu0
        %s3971 = scalar_lea.vmem [#allocation7], 32
        %v3972 = vld [vmem:[%s3971] sm:$0xff]
        %v3973 = vld [vmem:[%s3971 + $0x8] sm:$0xff]
        %v3974 = vld [vmem:[%s3971 + $0x10] sm:$0xff]
        %v3975 = vld [vmem:[%s3971 + $0x18] sm:$0xff]
        %s3976 = scalar_lea.vmem [#allocation8], 1
        %v3977 = vld [vmem:[%s3976] sm:$0x1]
        %v3979 = vlaneseq
        %v3980 = vshrl.u32 %v3979, 7
        %v3981 = vsub.s32 0, %v3980
        %v3982 = vrot.slane %v3977, %v3981
        %v3984 = vsel %vm981, %v3071, 0
        %v3986 = vsel %vm981, %v3072, 0
        %v3988 = vsel %vm981, %v3073, 0
        %v3990 = vsel %vm981, %v3074, 0
        %v3992 = vsel %vm981, %v3075, 0
        %v3994 = vsel %vm981, %v3076, 0
        %v3996 = vsel %vm981, %v3077, 0
        %v3998 = vsel %vm981, %v3078, 0
        %v4000 = vsel %vm981, %v3079, 0
        %v4002 = vsel %vm981, %v3080, 0
        %v4004 = vsel %vm981, %v3081, 0
        %v4006 = vsel %vm981, %v3082, 0
        %4008 = vmatprep.subr.mxu0 0.0
        %4009 = vmatpush1.msra.mxu0 %v3972
        %4010 = vmatprep.subr.mxu0 0.0
        %4011 = vmatpush1.msra.mxu0 %v3973
        %4012 = vmatprep.subr.mxu0 0.0
        %4013 = vmatpush1.msra.mxu0 %v3974
        %4014 = vmatprep.subr.mxu0 0.0
        %4015 = vmatpush1.msra.mxu0 %v3975
        %4016 = vmatprep.subr.mxu0 0.0
        %4017 = vmatpush1.msra.mxu0 0.0
        %4018 = vmatprep.subr.mxu0 0.0
        %4019 = vmatpush1.msra.mxu0 0.0
        %4020 = vmatprep.subr.mxu0 0.0
        %4021 = vmatpush1.msra.mxu0 0.0
        %4022 = vmatprep.subr.mxu0 0.0
        %4023 = vmatpush1.msra.mxu0 0.0
        %4024 = vmatprep.subr.mxu0 0.0
        %4025 = vmatpush1.msra.mxu0 0.0
        %4026 = vmatprep.subr.mxu0 0.0
        %4027 = vmatpush1.msra.mxu0 0.0
        %4028 = vmatprep.subr.mxu0 0.0
        %4029 = vmatpush1.msra.mxu0 0.0
        %4030 = vmatprep.subr.mxu0 0.0
        %4031 = vmatpush1.msra.mxu0 0.0
        %4032 = vmatprep.subr.mxu0 0.0
        %4033 = vmatpush1.msra.mxu0 0.0
        %4034 = vmatprep.subr.mxu0 0.0
        %4035 = vmatpush1.msra.mxu0 0.0
        %4036 = vmatprep.subr.mxu0 0.0
        %4037 = vmatpush1.msra.mxu0 0.0
        %4038 = vmatprep.subr.mxu0 0.0
        %4039 = vmatpush1.msra.mxu0 0.0
        %4040 = vmatprep.subr.mxu0 0.0
        %4041 = vmatpush1.msra.mxu0 0.0
        %4042 = vmatprep.subr.mxu0 0.0
        %4043 = vmatpush1.msra.mxu0 0.0
        %4044 = vmatprep.subr.mxu0 0.0
        %4045 = vmatpush1.msra.mxu0 0.0
        %4046 = vmatprep.subr.mxu0 0.0
        %4047 = vmatpush1.msra.mxu0 0.0
        %4048 = vmatprep.subr.mxu0 0.0
        %4049 = vmatpush1.msra.mxu0 0.0
        %4050 = vmatprep.subr.mxu0 0.0
        %4051 = vmatpush1.msra.mxu0 0.0
        %4052 = vmatprep.subr.mxu0 0.0
        %4053 = vmatpush1.msra.mxu0 0.0
        %4054 = vmatprep.subr.mxu0 0.0
        %4055 = vmatpush1.msra.mxu0 0.0
        %4056 = vmatprep.subr.mxu0 0.0
        %4057 = vmatpush1.msra.mxu0 0.0
        %4058 = vmatprep.subr.mxu0 0.0
        %4059 = vmatpush1.msra.mxu0 0.0
        %4060 = vmatprep.subr.mxu0 0.0
        %4061 = vmatpush1.msra.mxu0 0.0
        %4062 = vmatprep.subr.mxu0 0.0
        %4063 = vmatpush1.msra.mxu0 0.0
        %4064 = vmatprep.subr.mxu0 0.0
        %4065 = vmatpush1.msra.mxu0 0.0
        %4066 = vmatprep.subr.mxu0 0.0
        %4067 = vmatpush1.msra.mxu0 0.0
        %4068 = vmatprep.subr.mxu0 0.0
        %4069 = vmatpush1.msra.mxu0 0.0
        %4070 = vmatprep.subr.mxu0 0.0
        %4071 = vmatpush1.msra.mxu0 0.0
        %4072 = vmatprep.mubr.f32.mxu0 0.0
        %4073 = vmatmul.mubr.f32.gmra.mrb[0].mxu0 %v3984
        %v4074 = vpop.f32.mrb[0].mxu0
        %v4075 = vadd.f32 %v3982, %v4074
        %v4076 = vpop.f32.mrb[0].mxu0
        %4077 = vmatprep.mubr.f32.mxu0 0.0
        %4078 = vmatmul.mubr.f32.gmra.mrb[0].mxu0 %v3986
        %v4079 = vpop.f32.mrb[0].mxu0
        %v4080 = vadd.f32 %v3982, %v4079
        %v4081 = vpop.f32.mrb[0].mxu0
        %4082 = vmatprep.mubr.f32.mxu0 0.0
        %4083 = vmatmul.mubr.f32.gmra.mrb[0].mxu0 %v3988
        %v4084 = vpop.f32.mrb[0].mxu0
        %v4085 = vadd.f32 %v3982, %v4084
        %v4086 = vpop.f32.mrb[0].mxu0
        %4087 = vmatprep.mubr.f32.mxu0 0.0
        %4088 = vmatmul.mubr.f32.gmra.mrb[0].mxu0 %v3990
        %v4089 = vpop.f32.mrb[0].mxu0
        %v4090 = vadd.f32 %v3982, %v4089
        %v4091 = vpop.f32.mrb[0].mxu0
        %4092 = vmatprep.mubr.f32.mxu0 0.0
        %4093 = vmatmul.mubr.f32.gmra.mrb[0].mxu0 %v3992
        %v4094 = vpop.f32.mrb[0].mxu0
        %v4095 = vadd.f32 %v3982, %v4094
        %v4096 = vpop.f32.mrb[0].mxu0
        %4097 = vmatprep.mubr.f32.mxu0 0.0
        %4098 = vmatmul.mubr.f32.gmra.mrb[0].mxu0 %v3994
        %v4099 = vpop.f32.mrb[0].mxu0
        %v4100 = vadd.f32 %v3982, %v4099
        %v4101 = vpop.f32.mrb[0].mxu0
        %4102 = vmatprep.mubr.f32.mxu0 0.0
        %4103 = vmatmul.mubr.f32.gmra.mrb[0].mxu0 %v3996
        %v4104 = vpop.f32.mrb[0].mxu0
        %v4105 = vadd.f32 %v3982, %v4104
        %v4106 = vpop.f32.mrb[0].mxu0
        %4107 = vmatprep.mubr.f32.mxu0 0.0
        %4108 = vmatmul.mubr.f32.gmra.mrb[0].mxu0 %v3998
        %v4109 = vpop.f32.mrb[0].mxu0
        %v4110 = vadd.f32 %v3982, %v4109
        %v4111 = vpop.f32.mrb[0].mxu0
        %4112 = vmatprep.mubr.f32.mxu0 0.0
        %4113 = vmatmul.mubr.f32.gmra.mrb[0].mxu0 %v4000
        %v4114 = vpop.f32.mrb[0].mxu0
        %v4115 = vadd.f32 %v3982, %v4114
        %v4116 = vpop.f32.mrb[0].mxu0
        %4117 = vmatprep.mubr.f32.mxu0 0.0
        %4118 = vmatmul.mubr.f32.gmra.mrb[0].mxu0 %v4002
        %v4119 = vpop.f32.mrb[0].mxu0
        %v4120 = vadd.f32 %v3982, %v4119
        %v4121 = vpop.f32.mrb[0].mxu0
        %4122 = vmatprep.mubr.f32.mxu0 0.0
        %4123 = vmatmul.mubr.f32.gmra.mrb[0].mxu0 %v4004
        %v4124 = vpop.f32.mrb[0].mxu0
        %v4125 = vadd.f32 %v3982, %v4124
        %v4126 = vpop.f32.mrb[0].mxu0
        %4127 = vmatprep.mubr.f32.mxu0 0.0
        %4128 = vmatmul.mubr.f32.gmra.mrb[0].mxu0 %v4006
        %v4129 = vpop.f32.mrb[0].mxu0
        %v4130 = vadd.f32 %v3982, %v4129
        %v4131 = vpop.f32.mrb[0].mxu0
        %4132 = vdwg.mxu0
        %v4134 = vsel %vm1834, %v3563, 0
        %v4137 = vsel %vm1834, %v3564, 0
        %v4140 = vsel %vm1834, %v3565, 0
        %v4143 = vsel %vm1834, %v3566, 0
        %v4146 = vsel %vm1834, %v3567, 0
        %v4149 = vsel %vm1834, %v3568, 0
        %v4152 = vsel %vm1834, %v3569, 0
        %v4155 = vsel %vm1834, %v3570, 0
        %v4158 = vsel %vm1834, %v3571, 0
        %v4161 = vsel %vm1834, %v3572, 0
        %v4164 = vsel %vm1834, %v3573, 0
        %v4167 = vsel %vm1834, %v3574, 0
        %v4170 = vsel %vm1834, %v3913, 0
        %v4173 = vsel %vm1834, %v3918, 0
        %v4176 = vsel %vm1834, %v3923, 0
        %v4179 = vsel %vm1834, %v3928, 0
        %v4182 = vsel %vm1834, %v3933, 0
        %v4185 = vsel %vm1834, %v3938, 0
        %v4188 = vsel %vm1834, %v3943, 0
        %v4191 = vsel %vm1834, %v3948, 0
        %v4194 = vsel %vm1834, %v3953, 0
        %v4197 = vsel %vm1834, %v3958, 0
        %v4200 = vsel %vm1834, %v3963, 0
        %v4203 = vsel %vm1834, %v3968, 0
        %4205 = vmatprep.subr.mxu0 0.0
        %4206 = vmatpush1.xpose.msra.mxu0 %v4170
        %4207 = vmatprep.subr.mxu0 0.0
        %4208 = vmatpush1.xpose.msra.mxu0 %v4173
        %4209 = vmatprep.subr.mxu0 0.0
        %4210 = vmatpush1.xpose.msra.mxu0 %v4176
        %4211 = vmatprep.subr.mxu0 0.0
        %4212 = vmatpush1.xpose.msra.mxu0 %v4179
        %4213 = vmatprep.subr.mxu0 0.0
        %4214 = vmatpush1.xpose.msra.mxu0 %v4182
        %4215 = vmatprep.subr.mxu0 0.0
        %4216 = vmatpush1.xpose.msra.mxu0 %v4185
        %4217 = vmatprep.subr.mxu0 0.0
        %4218 = vmatpush1.xpose.msra.mxu0 %v4188
        %4219 = vmatprep.subr.mxu0 0.0
        %4220 = vmatpush1.xpose.msra.mxu0 %v4191
        %4221 = vmatprep.subr.mxu0 0.0
        %4222 = vmatpush1.xpose.msra.mxu0 %v4194
        %4223 = vmatprep.subr.mxu0 0.0
        %4224 = vmatpush1.xpose.msra.mxu0 %v4197
        %4225 = vmatprep.subr.mxu0 0.0
        %4226 = vmatpush1.xpose.msra.mxu0 %v4200
        %4227 = vmatprep.subr.mxu0 0.0
        %4228 = vmatpush1.xpose.msra.mxu0 %v4203
        %4229 = vmatprep.subr.mxu0 0.0
        %4230 = vmatpush1.xpose.msra.mxu0 0.0
        %4231 = vmatprep.subr.mxu0 0.0
        %4232 = vmatpush1.xpose.msra.mxu0 0.0
        %4233 = vmatprep.subr.mxu0 0.0
        %4234 = vmatpush1.xpose.msra.mxu0 0.0
        %4235 = vmatprep.subr.mxu0 0.0
        %4236 = vmatpush1.xpose.msra.mxu0 0.0
        %4237 = vmatprep.subr.mxu0 0.0
        %4238 = vmatpush1.xpose.msra.mxu0 0.0
        %4239 = vmatprep.subr.mxu0 0.0
        %4240 = vmatpush1.xpose.msra.mxu0 0.0
        %4241 = vmatprep.subr.mxu0 0.0
        %4242 = vmatpush1.xpose.msra.mxu0 0.0
        %4243 = vmatprep.subr.mxu0 0.0
        %4244 = vmatpush1.xpose.msra.mxu0 0.0
        %4245 = vmatprep.subr.mxu0 0.0
        %4246 = vmatpush1.xpose.msra.mxu0 0.0
        %4247 = vmatprep.subr.mxu0 0.0
        %4248 = vmatpush1.xpose.msra.mxu0 0.0
        %4249 = vmatprep.subr.mxu0 0.0
        %4250 = vmatpush1.xpose.msra.mxu0 0.0
        %4251 = vmatprep.subr.mxu0 0.0
        %4252 = vmatpush1.xpose.msra.mxu0 0.0
        %4253 = vmatprep.subr.mxu0 0.0
        %4254 = vmatpush1.xpose.msra.mxu0 0.0
        %4255 = vmatprep.subr.mxu0 0.0
        %4256 = vmatpush1.xpose.msra.mxu0 0.0
        %4257 = vmatprep.subr.mxu0 0.0
        %4258 = vmatpush1.xpose.msra.mxu0 0.0
        %4259 = vmatprep.subr.mxu0 0.0
        %4260 = vmatpush1.xpose.msra.mxu0 0.0
        %4261 = vmatprep.subr.mxu0 0.0
        %4262 = vmatpush1.xpose.msra.mxu0 0.0
        %4263 = vmatprep.subr.mxu0 0.0
        %4264 = vmatpush1.xpose.msra.mxu0 0.0
        %4265 = vmatprep.subr.mxu0 0.0
        %4266 = vmatpush1.xpose.msra.mxu0 0.0
        %4267 = vmatprep.subr.mxu0 0.0
        %4268 = vmatpush1.xpose.msra.mxu0 0.0
        %4269 = vmatprep.mubr.f32.mxu0 0.0
        %4270 = vmatmul.mubr.f32.gmra.mrb[0].mxu0 %v4134
        %v4271 = vpop.f32.mrb[0].mxu0
        %v4272 = vadd.f32 %v777, %v4271
        %v4273 = vpop.f32.mrb[0].mxu0
        %4274 = vmatprep.mubr.f32.mxu0 0.0
        %4275 = vmatmul.mubr.f32.gmra.mrb[0].mxu0 %v4137
        %v4276 = vpop.f32.mrb[0].mxu0
        %v4277 = vadd.f32 %v778, %v4276
        %v4278 = vpop.f32.mrb[0].mxu0
        %4279 = vmatprep.mubr.f32.mxu0 0.0
        %4280 = vmatmul.mubr.f32.gmra.mrb[0].mxu0 %v4140
        %v4281 = vpop.f32.mrb[0].mxu0
        %v4282 = vadd.f32 %v779, %v4281
        %v4283 = vpop.f32.mrb[0].mxu0
        %4284 = vmatprep.mubr.f32.mxu0 0.0
        %4285 = vmatmul.mubr.f32.gmra.mrb[0].mxu0 %v4143
        %v4286 = vpop.f32.mrb[0].mxu0
        %v4287 = vadd.f32 %v780, %v4286
        %v4288 = vpop.f32.mrb[0].mxu0
        %4289 = vmatprep.mubr.f32.mxu0 0.0
        %4290 = vmatmul.mubr.f32.gmra.mrb[0].mxu0 %v4146
        %v4291 = vpop.f32.mrb[0].mxu0
        %v4292 = vadd.f32 %v781, %v4291
        %v4293 = vpop.f32.mrb[0].mxu0
        %4294 = vmatprep.mubr.f32.mxu0 0.0
        %4295 = vmatmul.mubr.f32.gmra.mrb[0].mxu0 %v4149
        %v4296 = vpop.f32.mrb[0].mxu0
        %v4297 = vadd.f32 %v782, %v4296
        %v4298 = vpop.f32.mrb[0].mxu0
        %4299 = vmatprep.mubr.f32.mxu0 0.0
        %4300 = vmatmul.mubr.f32.gmra.mrb[0].mxu0 %v4152
        %v4301 = vpop.f32.mrb[0].mxu0
        %v4302 = vadd.f32 %v783, %v4301
        %v4303 = vpop.f32.mrb[0].mxu0
        %4304 = vmatprep.mubr.f32.mxu0 0.0
        %4305 = vmatmul.mubr.f32.gmra.mrb[0].mxu0 %v4155
        %v4306 = vpop.f32.mrb[0].mxu0
        %v4307 = vadd.f32 %v784, %v4306
        %v4308 = vpop.f32.mrb[0].mxu0
        %4309 = vmatprep.mubr.f32.mxu0 0.0
        %4310 = vmatmul.mubr.f32.gmra.mrb[0].mxu0 %v4158
        %v4311 = vpop.f32.mrb[0].mxu0
        %v4312 = vadd.f32 %v785, %v4311
        %v4313 = vpop.f32.mrb[0].mxu0
        %4314 = vmatprep.mubr.f32.mxu0 0.0
        %4315 = vmatmul.mubr.f32.gmra.mrb[0].mxu0 %v4161
        %v4316 = vpop.f32.mrb[0].mxu0
        %v4317 = vadd.f32 %v786, %v4316
        %v4318 = vpop.f32.mrb[0].mxu0
        %4319 = vmatprep.mubr.f32.mxu0 0.0
        %4320 = vmatmul.mubr.f32.gmra.mrb[0].mxu0 %v4164
        %v4321 = vpop.f32.mrb[0].mxu0
        %v4322 = vadd.f32 %v787, %v4321
        %v4323 = vpop.f32.mrb[0].mxu0
        %4324 = vmatprep.mubr.f32.mxu0 0.0
        %4325 = vmatmul.mubr.f32.gmra.mrb[0].mxu0 %v4167
        %v4326 = vpop.f32.mrb[0].mxu0
        %v4327 = vadd.f32 %v788, %v4326
        %v4328 = vpop.f32.mrb[0].mxu0
        %4329 = vdwg.mxu0
        %v4330 = vsel %vm2032, %v4272, -inf
        %4331 = vmax.xlane.f32.xlu0 %v4330
        %v4332 = vpop.xlane.xlu0 %4331
        %v4333 = vsel %vm2032, %v4277, -inf
        %4334 = vmax.xlane.f32.xlu0 %v4333
        %v4335 = vpop.xlane.xlu0 %4334
        %v4336 = vsel %vm2032, %v4282, -inf
        %4337 = vmax.xlane.f32.xlu0 %v4336
        %v4338 = vpop.xlane.xlu0 %4337
        %v4339 = vsel %vm2032, %v4287, -inf
        %4340 = vmax.xlane.f32.xlu0 %v4339
        %v4341 = vpop.xlane.xlu0 %4340
        %v4342 = vsel %vm2032, %v4292, -inf
        %4343 = vmax.xlane.f32.xlu0 %v4342
        %v4344 = vpop.xlane.xlu0 %4343
        %v4345 = vsel %vm2032, %v4297, -inf
        %4346 = vmax.xlane.f32.xlu0 %v4345
        %v4347 = vpop.xlane.xlu0 %4346
        %v4348 = vsel %vm2032, %v4302, -inf
        %4349 = vmax.xlane.f32.xlu0 %v4348
        %v4350 = vpop.xlane.xlu0 %4349
        %v4351 = vsel %vm2032, %v4307, -inf
        %4352 = vmax.xlane.f32.xlu0 %v4351
        %v4353 = vpop.xlane.xlu0 %4352
        %v4354 = vsel %vm2032, %v4312, -inf
        %4355 = vmax.xlane.f32.xlu0 %v4354
        %v4356 = vpop.xlane.xlu0 %4355
        %v4357 = vsel %vm2032, %v4317, -inf
        %4358 = vmax.xlane.f32.xlu0 %v4357
        %v4359 = vpop.xlane.xlu0 %4358
        %v4360 = vsel %vm2032, %v4322, -inf
        %4361 = vmax.xlane.f32.xlu0 %v4360
        %v4362 = vpop.xlane.xlu0 %4361
        %v4363 = vsel %vm2032, %v4327, -inf
        %4364 = vmax.xlane.f32.xlu0 %v4363
        %v4365 = vpop.xlane.xlu0 %4364
        %v4366 = vsub.f32 %v4272, %v4332
        %v4367 = vsub.f32 %v4277, %v4335
        %v4368 = vsub.f32 %v4282, %v4338
        %v4369 = vsub.f32 %v4287, %v4341
        %v4370 = vsub.f32 %v4292, %v4344
        %v4371 = vsub.f32 %v4297, %v4347
        %v4372 = vsub.f32 %v4302, %v4350
        %v4373 = vsub.f32 %v4307, %v4353
        %v4374 = vsub.f32 %v4312, %v4356
        %v4375 = vsub.f32 %v4317, %v4359
        %v4376 = vsub.f32 %v4322, %v4362
        %v4377 = vsub.f32 %v4327, %v4365
        %v4378 = vmul.f32 %v4366, 1.442695
        %v4379 = vpow.pop %v4378
        %v4380 = vmul.f32 %v4367, 1.442695
        %v4381 = vpow.pop %v4380
        %v4382 = vmul.f32 %v4368, 1.442695
        %v4383 = vpow.pop %v4382
        %v4384 = vmul.f32 %v4369, 1.442695
        %v4385 = vpow.pop %v4384
        %v4386 = vmul.f32 %v4370, 1.442695
        %v4387 = vpow.pop %v4386
        %v4388 = vmul.f32 %v4371, 1.442695
        %v4389 = vpow.pop %v4388
        %v4390 = vmul.f32 %v4372, 1.442695
        %v4391 = vpow.pop %v4390
        %v4392 = vmul.f32 %v4373, 1.442695
        %v4393 = vpow.pop %v4392
        %v4394 = vmul.f32 %v4374, 1.442695
        %v4395 = vpow.pop %v4394
        %v4396 = vmul.f32 %v4375, 1.442695
        %v4397 = vpow.pop %v4396
        %v4398 = vmul.f32 %v4376, 1.442695
        %v4399 = vpow.pop %v4398
        %v4400 = vmul.f32 %v4377, 1.442695
        %v4401 = vpow.pop %v4400
        %v4402 = vsel %vm2032, %v4379, 0.0
        %4403 = vadd.xlane.f32.xlu0 %v4402
        %v4404 = vpop.xlane.xlu0 %4403
        %v4405 = vsel %vm2032, %v4381, 0.0
        %4406 = vadd.xlane.f32.xlu0 %v4405
        %v4407 = vpop.xlane.xlu0 %4406
        %v4408 = vsel %vm2032, %v4383, 0.0
        %4409 = vadd.xlane.f32.xlu0 %v4408
        %v4410 = vpop.xlane.xlu0 %4409
        %v4411 = vsel %vm2032, %v4385, 0.0
        %4412 = vadd.xlane.f32.xlu0 %v4411
        %v4413 = vpop.xlane.xlu0 %4412
        %v4414 = vsel %vm2032, %v4387, 0.0
        %4415 = vadd.xlane.f32.xlu0 %v4414
        %v4416 = vpop.xlane.xlu0 %4415
        %v4417 = vsel %vm2032, %v4389, 0.0
        %4418 = vadd.xlane.f32.xlu0 %v4417
        %v4419 = vpop.xlane.xlu0 %4418
        %v4420 = vsel %vm2032, %v4391, 0.0
        %4421 = vadd.xlane.f32.xlu0 %v4420
        %v4422 = vpop.xlane.xlu0 %4421
        %v4423 = vsel %vm2032, %v4393, 0.0
        %4424 = vadd.xlane.f32.xlu0 %v4423
        %v4425 = vpop.xlane.xlu0 %4424
        %v4426 = vsel %vm2032, %v4395, 0.0
        %4427 = vadd.xlane.f32.xlu0 %v4426
        %v4428 = vpop.xlane.xlu0 %4427
        %v4429 = vsel %vm2032, %v4397, 0.0
        %4430 = vadd.xlane.f32.xlu0 %v4429
        %v4431 = vpop.xlane.xlu0 %4430
        %v4432 = vsel %vm2032, %v4399, 0.0
        %4433 = vadd.xlane.f32.xlu0 %v4432
        %v4434 = vpop.xlane.xlu0 %4433
        %v4435 = vsel %vm2032, %v4401, 0.0
        %4436 = vadd.xlane.f32.xlu0 %v4435
        %v4437 = vpop.xlane.xlu0 %4436
        %v4438 = vrcp.pop %v4404
        %v4439 = vrcp.pop %v4407
        %v4440 = vrcp.pop %v4410
        %v4441 = vrcp.pop %v4413
        %v4442 = vrcp.pop %v4416
        %v4443 = vrcp.pop %v4419
        %v4444 = vrcp.pop %v4422
        %v4445 = vrcp.pop %v4425
        %v4446 = vrcp.pop %v4428
        %v4447 = vrcp.pop %v4431
        %v4448 = vrcp.pop %v4434
        %v4449 = vrcp.pop %v4437
        %v4450 = vmul.f32 %v4379, %v4438
        %v4451 = vmul.f32 %v4381, %v4439
        %v4452 = vmul.f32 %v4383, %v4440
        %v4453 = vmul.f32 %v4385, %v4441
        %v4454 = vmul.f32 %v4387, %v4442
        %v4455 = vmul.f32 %v4389, %v4443
        %v4456 = vmul.f32 %v4391, %v4444
        %v4457 = vmul.f32 %v4393, %v4445
        %v4458 = vmul.f32 %v4395, %v4446
        %v4459 = vmul.f32 %v4397, %v4447
        %v4460 = vmul.f32 %v4399, %v4448
        %v4461 = vmul.f32 %v4401, %v4449
        %v4463 = vsel %vm2032, %v4450, 0
        %v4466 = vsel %vm2032, %v4451, 0
        %v4469 = vsel %vm2032, %v4452, 0
        %v4472 = vsel %vm2032, %v4453, 0
        %v4475 = vsel %vm2032, %v4454, 0
        %v4478 = vsel %vm2032, %v4455, 0
        %v4481 = vsel %vm2032, %v4456, 0
        %v4484 = vsel %vm2032, %v4457, 0
        %v4487 = vsel %vm2032, %v4458, 0
        %v4490 = vsel %vm2032, %v4459, 0
        %v4493 = vsel %vm2032, %v4460, 0
        %v4496 = vsel %vm2032, %v4461, 0
        %4498 = vmatprep.subr.mxu0 0.0
        %4499 = vmatpush1.msra.mxu0 %v4075
        %4500 = vmatprep.subr.mxu0 0.0
        %4501 = vmatpush1.msra.mxu0 %v4080
        %4502 = vmatprep.subr.mxu0 0.0
        %4503 = vmatpush1.msra.mxu0 %v4085
        %4504 = vmatprep.subr.mxu0 0.0
        %4505 = vmatpush1.msra.mxu0 %v4090
        %4506 = vmatprep.subr.mxu0 0.0
        %4507 = vmatpush1.msra.mxu0 %v4095
        %4508 = vmatprep.subr.mxu0 0.0
        %4509 = vmatpush1.msra.mxu0 %v4100
        %4510 = vmatprep.subr.mxu0 0.0
        %4511 = vmatpush1.msra.mxu0 %v4105
        %4512 = vmatprep.subr.mxu0 0.0
        %4513 = vmatpush1.msra.mxu0 %v4110
        %4514 = vmatprep.subr.mxu0 0.0
        %4515 = vmatpush1.msra.mxu0 %v4115
        %4516 = vmatprep.subr.mxu0 0.0
        %4517 = vmatpush1.msra.mxu0 %v4120
        %4518 = vmatprep.subr.mxu0 0.0
        %4519 = vmatpush1.msra.mxu0 %v4125
        %4520 = vmatprep.subr.mxu0 0.0
        %4521 = vmatpush1.msra.mxu0 %v4130
        %4522 = vmatprep.subr.mxu0 0.0
        %4523 = vmatpush1.msra.mxu0 0.0
        %4524 = vmatprep.subr.mxu0 0.0
        %4525 = vmatpush1.msra.mxu0 0.0
        %4526 = vmatprep.subr.mxu0 0.0
        %4527 = vmatpush1.msra.mxu0 0.0
        %4528 = vmatprep.subr.mxu0 0.0
        %4529 = vmatpush1.msra.mxu0 0.0
        %4530 = vmatprep.subr.mxu0 0.0
        %4531 = vmatpush1.msra.mxu0 0.0
        %4532 = vmatprep.subr.mxu0 0.0
        %4533 = vmatpush1.msra.mxu0 0.0
        %4534 = vmatprep.subr.mxu0 0.0
        %4535 = vmatpush1.msra.mxu0 0.0
        %4536 = vmatprep.subr.mxu0 0.0
        %4537 = vmatpush1.msra.mxu0 0.0
        %4538 = vmatprep.subr.mxu0 0.0
        %4539 = vmatpush1.msra.mxu0 0.0
        %4540 = vmatprep.subr.mxu0 0.0
        %4541 = vmatpush1.msra.mxu0 0.0
        %4542 = vmatprep.subr.mxu0 0.0
        %4543 = vmatpush1.msra.mxu0 0.0
        %4544 = vmatprep.subr.mxu0 0.0
        %4545 = vmatpush1.msra.mxu0 0.0
        %4546 = vmatprep.subr.mxu0 0.0
        %4547 = vmatpush1.msra.mxu0 0.0
        %4548 = vmatprep.subr.mxu0 0.0
        %4549 = vmatpush1.msra.mxu0 0.0
        %4550 = vmatprep.subr.mxu0 0.0
        %4551 = vmatpush1.msra.mxu0 0.0
        %4552 = vmatprep.subr.mxu0 0.0
        %4553 = vmatpush1.msra.mxu0 0.0
        %4554 = vmatprep.subr.mxu0 0.0
        %4555 = vmatpush1.msra.mxu0 0.0
        %4556 = vmatprep.subr.mxu0 0.0
        %4557 = vmatpush1.msra.mxu0 0.0
        %4558 = vmatprep.subr.mxu0 0.0
        %4559 = vmatpush1.msra.mxu0 0.0
        %4560 = vmatprep.subr.mxu0 0.0
        %4561 = vmatpush1.msra.mxu0 0.0
        %4562 = vmatprep.mubr.f32.mxu0 0.0
        %4563 = vmatmul.mubr.f32.gmra.mrb[0].mxu0 %v4463
        %v4564 = vpop.f32.mrb[0].mxu0
        %v4565 = vadd.f32 %v3071, %v4564
        %v4566 = vpop.f32.mrb[0].mxu0
        %4567 = vmatprep.mubr.f32.mxu0 0.0
        %4568 = vmatmul.mubr.f32.gmra.mrb[0].mxu0 %v4466
        %v4569 = vpop.f32.mrb[0].mxu0
        %v4570 = vadd.f32 %v3072, %v4569
        %v4571 = vpop.f32.mrb[0].mxu0
        %4572 = vmatprep.mubr.f32.mxu0 0.0
        %4573 = vmatmul.mubr.f32.gmra.mrb[0].mxu0 %v4469
        %v4574 = vpop.f32.mrb[0].mxu0
        %v4575 = vadd.f32 %v3073, %v4574
        %v4576 = vpop.f32.mrb[0].mxu0
        %4577 = vmatprep.mubr.f32.mxu0 0.0
        %4578 = vmatmul.mubr.f32.gmra.mrb[0].mxu0 %v4472
        %v4579 = vpop.f32.mrb[0].mxu0
        %v4580 = vadd.f32 %v3074, %v4579
        %v4581 = vpop.f32.mrb[0].mxu0
        %4582 = vmatprep.mubr.f32.mxu0 0.0
        %4583 = vmatmul.mubr.f32.gmra.mrb[0].mxu0 %v4475
        %v4584 = vpop.f32.mrb[0].mxu0
        %v4585 = vadd.f32 %v3075, %v4584
        %v4586 = vpop.f32.mrb[0].mxu0
        %4587 = vmatprep.mubr.f32.mxu0 0.0
        %4588 = vmatmul.mubr.f32.gmra.mrb[0].mxu0 %v4478
        %v4589 = vpop.f32.mrb[0].mxu0
        %v4590 = vadd.f32 %v3076, %v4589
        %v4591 = vpop.f32.mrb[0].mxu0
        %4592 = vmatprep.mubr.f32.mxu0 0.0
        %4593 = vmatmul.mubr.f32.gmra.mrb[0].mxu0 %v4481
        %v4594 = vpop.f32.mrb[0].mxu0
        %v4595 = vadd.f32 %v3077, %v4594
        %v4596 = vpop.f32.mrb[0].mxu0
        %4597 = vmatprep.mubr.f32.mxu0 0.0
        %4598 = vmatmul.mubr.f32.gmra.mrb[0].mxu0 %v4484
        %v4599 = vpop.f32.mrb[0].mxu0
        %v4600 = vadd.f32 %v3078, %v4599
        %v4601 = vpop.f32.mrb[0].mxu0
        %4602 = vmatprep.mubr.f32.mxu0 0.0
        %4603 = vmatmul.mubr.f32.gmra.mrb[0].mxu0 %v4487
        %v4604 = vpop.f32.mrb[0].mxu0
        %v4605 = vadd.f32 %v3079, %v4604
        %v4606 = vpop.f32.mrb[0].mxu0
        %4607 = vmatprep.mubr.f32.mxu0 0.0
        %4608 = vmatmul.mubr.f32.gmra.mrb[0].mxu0 %v4490
        %v4609 = vpop.f32.mrb[0].mxu0
        %v4610 = vadd.f32 %v3080, %v4609
        %v4611 = vpop.f32.mrb[0].mxu0
        %4612 = vmatprep.mubr.f32.mxu0 0.0
        %4613 = vmatmul.mubr.f32.gmra.mrb[0].mxu0 %v4493
        %v4614 = vpop.f32.mrb[0].mxu0
        %v4615 = vadd.f32 %v3081, %v4614
        %v4616 = vpop.f32.mrb[0].mxu0
        %4617 = vmatprep.mubr.f32.mxu0 0.0
        %4618 = vmatmul.mubr.f32.gmra.mrb[0].mxu0 %v4496
        %v4619 = vpop.f32.mrb[0].mxu0
        %v4620 = vadd.f32 %v3082, %v4619
        %v4621 = vpop.f32.mrb[0].mxu0
        %4622 = vdwg.mxu0
        %s4623 = scalar_lea.vmem [#allocation10], 1
        %v4624 = vld [vmem:[%s4623] sm:$0x1]
        %s4625 = scalar_lea.vmem [#allocation11], 1
        %v4626 = vld [vmem:[%s4625] sm:$0x1]
        %v4627 = vsel %vm981, %v4565, 0.0
        %4628 = vadd.xlane.f32.xlu0 %v4627
        %v4629 = vpop.xlane.xlu0 %4628
        %v4630 = vsel %vm981, %v4570, 0.0
        %4631 = vadd.xlane.f32.xlu0 %v4630
        %v4632 = vpop.xlane.xlu0 %4631
        %v4633 = vsel %vm981, %v4575, 0.0
        %4634 = vadd.xlane.f32.xlu0 %v4633
        %v4635 = vpop.xlane.xlu0 %4634
        %v4636 = vsel %vm981, %v4580, 0.0
        %4637 = vadd.xlane.f32.xlu0 %v4636
        %v4638 = vpop.xlane.xlu0 %4637
        %v4639 = vsel %vm981, %v4585, 0.0
        %4640 = vadd.xlane.f32.xlu0 %v4639
        %v4641 = vpop.xlane.xlu0 %4640
        %v4642 = vsel %vm981, %v4590, 0.0
        %4643 = vadd.xlane.f32.xlu0 %v4642
        %v4644 = vpop.xlane.xlu0 %4643
        %v4645 = vsel %vm981, %v4595, 0.0
        %4646 = vadd.xlane.f32.xlu0 %v4645
        %v4647 = vpop.xlane.xlu0 %4646
        %v4648 = vsel %vm981, %v4600, 0.0
        %4649 = vadd.xlane.f32.xlu0 %v4648
        %v4650 = vpop.xlane.xlu0 %4649
        %v4651 = vsel %vm981, %v4605, 0.0
        %4652 = vadd.xlane.f32.xlu0 %v4651
        %v4653 = vpop.xlane.xlu0 %4652
        %v4654 = vsel %vm981, %v4610, 0.0
        %4655 = vadd.xlane.f32.xlu0 %v4654
        %v4656 = vpop.xlane.xlu0 %4655
        %v4657 = vsel %vm981, %v4615, 0.0
        %4658 = vadd.xlane.f32.xlu0 %v4657
        %v4659 = vpop.xlane.xlu0 %4658
        %v4660 = vsel %vm981, %v4620, 0.0
        %4661 = vadd.xlane.f32.xlu0 %v4660
        %v4662 = vpop.xlane.xlu0 %4661
        %v4663 = vmul.f32 %v4629, %v2364
        %v4664 = vmul.f32 %v4632, %v2364
        %v4665 = vmul.f32 %v4635, %v2364
        %v4666 = vmul.f32 %v4638, %v2364
        %v4667 = vmul.f32 %v4641, %v2364
        %v4668 = vmul.f32 %v4644, %v2364
        %v4669 = vmul.f32 %v4647, %v2364
        %v4670 = vmul.f32 %v4650, %v2364
        %v4671 = vmul.f32 %v4653, %v2364
        %v4672 = vmul.f32 %v4656, %v2364
        %v4673 = vmul.f32 %v4659, %v2364
        %v4674 = vmul.f32 %v4662, %v2364
        %v4675 = vsub.f32 %v4565, %v4663
        %v4676 = vsub.f32 %v4570, %v4664
        %v4677 = vsub.f32 %v4575, %v4665
        %v4678 = vsub.f32 %v4580, %v4666
        %v4679 = vsub.f32 %v4585, %v4667
        %v4680 = vsub.f32 %v4590, %v4668
        %v4681 = vsub.f32 %v4595, %v4669
        %v4682 = vsub.f32 %v4600, %v4670
        %v4683 = vsub.f32 %v4605, %v4671
        %v4684 = vsub.f32 %v4610, %v4672
        %v4685 = vsub.f32 %v4615, %v4673
        %v4686 = vsub.f32 %v4620, %v4674
        %v4687 = vmul.f32 %v4675, %v4675
        %v4688 = vmul.f32 %v4676, %v4676
        %v4689 = vmul.f32 %v4677, %v4677
        %v4690 = vmul.f32 %v4678, %v4678
        %v4691 = vmul.f32 %v4679, %v4679
        %v4692 = vmul.f32 %v4680, %v4680
        %v4693 = vmul.f32 %v4681, %v4681
        %v4694 = vmul.f32 %v4682, %v4682
        %v4695 = vmul.f32 %v4683, %v4683
        %v4696 = vmul.f32 %v4684, %v4684
        %v4697 = vmul.f32 %v4685, %v4685
        %v4698 = vmul.f32 %v4686, %v4686
        %v4699 = vsel %vm981, %v4687, 0.0
        %4700 = vadd.xlane.f32.xlu0 %v4699
        %v4701 = vpop.xlane.xlu0 %4700
        %v4702 = vsel %vm981, %v4688, 0.0
        %4703 = vadd.xlane.f32.xlu0 %v4702
        %v4704 = vpop.xlane.xlu0 %4703
        %v4705 = vsel %vm981, %v4689, 0.0
        %4706 = vadd.xlane.f32.xlu0 %v4705
        %v4707 = vpop.xlane.xlu0 %4706
        %v4708 = vsel %vm981, %v4690, 0.0
        %4709 = vadd.xlane.f32.xlu0 %v4708
        %v4710 = vpop.xlane.xlu0 %4709
        %v4711 = vsel %vm981, %v4691, 0.0
        %4712 = vadd.xlane.f32.xlu0 %v4711
        %v4713 = vpop.xlane.xlu0 %4712
        %v4714 = vsel %vm981, %v4692, 0.0
        %4715 = vadd.xlane.f32.xlu0 %v4714
        %v4716 = vpop.xlane.xlu0 %4715
        %v4717 = vsel %vm981, %v4693, 0.0
        %4718 = vadd.xlane.f32.xlu0 %v4717
        %v4719 = vpop.xlane.xlu0 %4718
        %v4720 = vsel %vm981, %v4694, 0.0
        %4721 = vadd.xlane.f32.xlu0 %v4720
        %v4722 = vpop.xlane.xlu0 %4721
        %v4723 = vsel %vm981, %v4695, 0.0
        %4724 = vadd.xlane.f32.xlu0 %v4723
        %v4725 = vpop.xlane.xlu0 %4724
        %v4726 = vsel %vm981, %v4696, 0.0
        %4727 = vadd.xlane.f32.xlu0 %v4726
        %v4728 = vpop.xlane.xlu0 %4727
        %v4729 = vsel %vm981, %v4697, 0.0
        %4730 = vadd.xlane.f32.xlu0 %v4729
        %v4731 = vpop.xlane.xlu0 %4730
        %v4732 = vsel %vm981, %v4698, 0.0
        %4733 = vadd.xlane.f32.xlu0 %v4732
        %v4734 = vpop.xlane.xlu0 %4733
        %v4735 = vmul.f32 %v4701, %v2364
        %v4736 = vmul.f32 %v4704, %v2364
        %v4737 = vmul.f32 %v4707, %v2364
        %v4738 = vmul.f32 %v4710, %v2364
        %v4739 = vmul.f32 %v4713, %v2364
        %v4740 = vmul.f32 %v4716, %v2364
        %v4741 = vmul.f32 %v4719, %v2364
        %v4742 = vmul.f32 %v4722, %v2364
        %v4743 = vmul.f32 %v4725, %v2364
        %v4744 = vmul.f32 %v4728, %v2364
        %v4745 = vmul.f32 %v4731, %v2364
        %v4746 = vmul.f32 %v4734, %v2364
        %v4747 = vadd.f32 %v4735, 1e-05
        %v4748 = vadd.f32 %v4736, 1e-05
        %v4749 = vadd.f32 %v4737, 1e-05
        %v4750 = vadd.f32 %v4738, 1e-05
        %v4751 = vadd.f32 %v4739, 1e-05
        %v4752 = vadd.f32 %v4740, 1e-05
        %v4753 = vadd.f32 %v4741, 1e-05
        %v4754 = vadd.f32 %v4742, 1e-05
        %v4755 = vadd.f32 %v4743, 1e-05
        %v4756 = vadd.f32 %v4744, 1e-05
        %v4757 = vadd.f32 %v4745, 1e-05
        %v4758 = vadd.f32 %v4746, 1e-05
        %v4759 = vrsqrt.pop %v4747
        %v4760 = vrsqrt.pop %v4748
        %v4761 = vrsqrt.pop %v4749
        %v4762 = vrsqrt.pop %v4750
        %v4763 = vrsqrt.pop %v4751
        %v4764 = vrsqrt.pop %v4752
        %v4765 = vrsqrt.pop %v4753
        %v4766 = vrsqrt.pop %v4754
        %v4767 = vrsqrt.pop %v4755
        %v4768 = vrsqrt.pop %v4756
        %v4769 = vrsqrt.pop %v4757
        %v4770 = vrsqrt.pop %v4758
        %v4771 = vmul.f32 %v4675, %v4759
        %v4772 = vmul.f32 %v4676, %v4760
        %v4773 = vmul.f32 %v4677, %v4761
        %v4774 = vmul.f32 %v4678, %v4762
        %v4775 = vmul.f32 %v4679, %v4763
        %v4776 = vmul.f32 %v4680, %v4764
        %v4777 = vmul.f32 %v4681, %v4765
        %v4778 = vmul.f32 %v4682, %v4766
        %v4779 = vmul.f32 %v4683, %v4767
        %v4780 = vmul.f32 %v4684, %v4768
        %v4781 = vmul.f32 %v4685, %v4769
        %v4782 = vmul.f32 %v4686, %v4770
        %v4784 = vlaneseq
        %v4785 = vshrl.u32 %v4784, 7
        %v4786 = vsub.s32 0, %v4785
        %v4787 = vrot.slane %v4624, %v4786
        %v4789 = vmul.f32 %v4771, %v4787
        %v4790 = vmul.f32 %v4772, %v4787
        %v4791 = vmul.f32 %v4773, %v4787
        %v4792 = vmul.f32 %v4774, %v4787
        %v4793 = vmul.f32 %v4775, %v4787
        %v4794 = vmul.f32 %v4776, %v4787
        %v4795 = vmul.f32 %v4777, %v4787
        %v4796 = vmul.f32 %v4778, %v4787
        %v4797 = vmul.f32 %v4779, %v4787
        %v4798 = vmul.f32 %v4780, %v4787
        %v4799 = vmul.f32 %v4781, %v4787
        %v4800 = vmul.f32 %v4782, %v4787
        %v4802 = vlaneseq
        %v4803 = vshrl.u32 %v4802, 7
        %v4804 = vsub.s32 0, %v4803
        %v4805 = vrot.slane %v4626, %v4804
        %v4807 = vadd.f32 %v4789, %v4805
        %v4808 = vadd.f32 %v4790, %v4805
        %v4809 = vadd.f32 %v4791, %v4805
        %v4810 = vadd.f32 %v4792, %v4805
        %v4811 = vadd.f32 %v4793, %v4805
        %v4812 = vadd.f32 %v4794, %v4805
        %v4813 = vadd.f32 %v4795, %v4805
        %v4814 = vadd.f32 %v4796, %v4805
        %v4815 = vadd.f32 %v4797, %v4805
        %v4816 = vadd.f32 %v4798, %v4805
        %v4817 = vadd.f32 %v4799, %v4805
        %v4818 = vadd.f32 %v4800, %v4805
        %s4819 = scalar_lea.vmem [#allocation13], 32
        %v4820 = vld [vmem:[%s4819] sm:$0xff]
        %v4821 = vld [vmem:[%s4819 + $0x8] sm:$0xff]
        %v4822 = vld [vmem:[%s4819 + $0x10] sm:$0xff]
        %v4823 = vld [vmem:[%s4819 + $0x18] sm:$0xff]
        %s4824 = scalar_lea.vmem [#allocation14], 1
        %v4825 = vld [vmem:[%s4824] sm:$0x1]
        %v4827 = vlaneseq
        %v4828 = vshrl.u32 %v4827, 7
        %v4829 = vsub.s32 0, %v4828
        %v4830 = vrot.slane %v4825, %v4829
        %v4833 = vsel %vm981, %v4807, 0
        %v4836 = vsel %vm981, %v4808, 0
        %v4839 = vsel %vm981, %v4809, 0
        %v4842 = vsel %vm981, %v4810, 0
        %v4845 = vsel %vm981, %v4811, 0
        %v4848 = vsel %vm981, %v4812, 0
        %v4851 = vsel %vm981, %v4813, 0
        %v4854 = vsel %vm981, %v4814, 0
        %v4857 = vsel %vm981, %v4815, 0
        %v4860 = vsel %vm981, %v4816, 0
        %v4863 = vsel %vm981, %v4817, 0
        %v4866 = vsel %vm981, %v4818, 0
        %4868 = vmatprep.subr.mxu0 0.0
        %4869 = vmatpush1.msra.mxu0 %v4820
        %4870 = vmatprep.subr.mxu0 0.0
        %4871 = vmatpush1.msra.mxu0 %v4821
        %4872 = vmatprep.subr.mxu0 0.0
        %4873 = vmatpush1.msra.mxu0 %v4822
        %4874 = vmatprep.subr.mxu0 0.0
        %4875 = vmatpush1.msra.mxu0 %v4823
        %4876 = vmatprep.subr.mxu0 0.0
        %4877 = vmatpush1.msra.mxu0 0.0
        %4878 = vmatprep.subr.mxu0 0.0
        %4879 = vmatpush1.msra.mxu0 0.0
        %4880 = vmatprep.subr.mxu0 0.0
        %4881 = vmatpush1.msra.mxu0 0.0
        %4882 = vmatprep.subr.mxu0 0.0
        %4883 = vmatpush1.msra.mxu0 0.0
        %4884 = vmatprep.subr.mxu0 0.0
        %4885 = vmatpush1.msra.mxu0 0.0
        %4886 = vmatprep.subr.mxu0 0.0
        %4887 = vmatpush1.msra.mxu0 0.0
        %4888 = vmatprep.subr.mxu0 0.0
        %4889 = vmatpush1.msra.mxu0 0.0
        %4890 = vmatprep.subr.mxu0 0.0
        %4891 = vmatpush1.msra.mxu0 0.0
        %4892 = vmatprep.subr.mxu0 0.0
        %4893 = vmatpush1.msra.mxu0 0.0
        %4894 = vmatprep.subr.mxu0 0.0
        %4895 = vmatpush1.msra.mxu0 0.0
        %4896 = vmatprep.subr.mxu0 0.0
        %4897 = vmatpush1.msra.mxu0 0.0
        %4898 = vmatprep.subr.mxu0 0.0
        %4899 = vmatpush1.msra.mxu0 0.0
        %4900 = vmatprep.subr.mxu0 0.0
        %4901 = vmatpush1.msra.mxu0 0.0
        %4902 = vmatprep.subr.mxu0 0.0
        %4903 = vmatpush1.msra.mxu0 0.0
        %4904 = vmatprep.subr.mxu0 0.0
        %4905 = vmatpush1.msra.mxu0 0.0
        %4906 = vmatprep.subr.mxu0 0.0
        %4907 = vmatpush1.msra.mxu0 0.0
        %4908 = vmatprep.subr.mxu0 0.0
        %4909 = vmatpush1.msra.mxu0 0.0
        %4910 = vmatprep.subr.mxu0 0.0
        %4911 = vmatpush1.msra.mxu0 0.0
        %4912 = vmatprep.subr.mxu0 0.0
        %4913 = vmatpush1.msra.mxu0 0.0
        %4914 = vmatprep.subr.mxu0 0.0
        %4915 = vmatpush1.msra.mxu0 0.0
        %4916 = vmatprep.subr.mxu0 0.0
        %4917 = vmatpush1.msra.mxu0 0.0
        %4918 = vmatprep.subr.mxu0 0.0
        %4919 = vmatpush1.msra.mxu0 0.0
        %4920 = vmatprep.subr.mxu0 0.0
        %4921 = vmatpush1.msra.mxu0 0.0
        %4922 = vmatprep.subr.mxu0 0.0
        %4923 = vmatpush1.msra.mxu0 0.0
        %4924 = vmatprep.subr.mxu0 0.0
        %4925 = vmatpush1.msra.mxu0 0.0
        %4926 = vmatprep.subr.mxu0 0.0
        %4927 = vmatpush1.msra.mxu0 0.0
        %4928 = vmatprep.subr.mxu0 0.0
        %4929 = vmatpush1.msra.mxu0 0.0
        %4930 = vmatprep.subr.mxu0 0.0
        %4931 = vmatpush1.msra.mxu0 0.0
        %4932 = vmatprep.mubr.f32.mxu0 0.0
        %4933 = vmatmul.mubr.f32.gmra.mrb[0].mxu0 %v4833
        %v4934 = vpop.f32.mrb[0].mxu0
        %v4935 = vadd.f32 %v4830, %v4934
        %v4936 = vpop.f32.mrb[0].mxu0
        %4937 = vmatprep.mubr.f32.mxu0 0.0
        %4938 = vmatmul.mubr.f32.gmra.mrb[0].mxu0 %v4836
        %v4939 = vpop.f32.mrb[0].mxu0
        %v4940 = vadd.f32 %v4830, %v4939
        %v4941 = vpop.f32.mrb[0].mxu0
        %4942 = vmatprep.mubr.f32.mxu0 0.0
        %4943 = vmatmul.mubr.f32.gmra.mrb[0].mxu0 %v4839
        %v4944 = vpop.f32.mrb[0].mxu0
        %v4945 = vadd.f32 %v4830, %v4944
        %v4946 = vpop.f32.mrb[0].mxu0
        %4947 = vmatprep.mubr.f32.mxu0 0.0
        %4948 = vmatmul.mubr.f32.gmra.mrb[0].mxu0 %v4842
        %v4949 = vpop.f32.mrb[0].mxu0
        %v4950 = vadd.f32 %v4830, %v4949
        %v4951 = vpop.f32.mrb[0].mxu0
        %4952 = vmatprep.mubr.f32.mxu0 0.0
        %4953 = vmatmul.mubr.f32.gmra.mrb[0].mxu0 %v4845
        %v4954 = vpop.f32.mrb[0].mxu0
        %v4955 = vadd.f32 %v4830, %v4954
        %v4956 = vpop.f32.mrb[0].mxu0
        %4957 = vmatprep.mubr.f32.mxu0 0.0
        %4958 = vmatmul.mubr.f32.gmra.mrb[0].mxu0 %v4848
        %v4959 = vpop.f32.mrb[0].mxu0
        %v4960 = vadd.f32 %v4830, %v4959
        %v4961 = vpop.f32.mrb[0].mxu0
        %4962 = vmatprep.mubr.f32.mxu0 0.0
        %4963 = vmatmul.mubr.f32.gmra.mrb[0].mxu0 %v4851
        %v4964 = vpop.f32.mrb[0].mxu0
        %v4965 = vadd.f32 %v4830, %v4964
        %v4966 = vpop.f32.mrb[0].mxu0
        %4967 = vmatprep.mubr.f32.mxu0 0.0
        %4968 = vmatmul.mubr.f32.gmra.mrb[0].mxu0 %v4854
        %v4969 = vpop.f32.mrb[0].mxu0
        %v4970 = vadd.f32 %v4830, %v4969
        %v4971 = vpop.f32.mrb[0].mxu0
        %4972 = vmatprep.mubr.f32.mxu0 0.0
        %4973 = vmatmul.mubr.f32.gmra.mrb[0].mxu0 %v4857
        %v4974 = vpop.f32.mrb[0].mxu0
        %v4975 = vadd.f32 %v4830, %v4974
        %v4976 = vpop.f32.mrb[0].mxu0
        %4977 = vmatprep.mubr.f32.mxu0 0.0
        %4978 = vmatmul.mubr.f32.gmra.mrb[0].mxu0 %v4860
        %v4979 = vpop.f32.mrb[0].mxu0
        %v4980 = vadd.f32 %v4830, %v4979
        %v4981 = vpop.f32.mrb[0].mxu0
        %4982 = vmatprep.mubr.f32.mxu0 0.0
        %4983 = vmatmul.mubr.f32.gmra.mrb[0].mxu0 %v4863
        %v4984 = vpop.f32.mrb[0].mxu0
        %v4985 = vadd.f32 %v4830, %v4984
        %v4986 = vpop.f32.mrb[0].mxu0
        %4987 = vmatprep.mubr.f32.mxu0 0.0
        %4988 = vmatmul.mubr.f32.gmra.mrb[0].mxu0 %v4866
        %v4989 = vpop.f32.mrb[0].mxu0
        %v4990 = vadd.f32 %v4830, %v4989
        %v4991 = vpop.f32.mrb[0].mxu0
        %4992 = vdwg.mxu0
        %v4993 = vmax.f32 %v4935, 0.0
        %v4994 = vmax.f32 %v4940, 0.0
        %v4995 = vmax.f32 %v4945, 0.0
        %v4996 = vmax.f32 %v4950, 0.0
        %v4997 = vmax.f32 %v4955, 0.0
        %v4998 = vmax.f32 %v4960, 0.0
        %v4999 = vmax.f32 %v4965, 0.0
        %v5000 = vmax.f32 %v4970, 0.0
        %v5001 = vmax.f32 %v4975, 0.0
        %v5002 = vmax.f32 %v4980, 0.0
        %v5003 = vmax.f32 %v4985, 0.0
        %v5004 = vmax.f32 %v4990, 0.0
        %s5005 = scalar_lea.vmem [#allocation16], 32
        %v5006 = vld [vmem:[%s5005] sm:$0xff]
        %v5007 = vld [vmem:[%s5005 + $0x8] sm:$0xff]
        %v5008 = vld [vmem:[%s5005 + $0x10] sm:$0xff]
        %v5009 = vld [vmem:[%s5005 + $0x18] sm:$0xff]
        %s5010 = scalar_lea.vmem [#allocation17], 1
        %v5011 = vld [vmem:[%s5010] sm:$0x1]
        %v5013 = vlaneseq
        %v5014 = vshrl.u32 %v5013, 7
        %v5015 = vsub.s32 0, %v5014
        %v5016 = vrot.slane %v5011, %v5015
        %v5019 = vsel %vm981, %v4993, 0
        %v5022 = vsel %vm981, %v4994, 0
        %v5025 = vsel %vm981, %v4995, 0
        %v5028 = vsel %vm981, %v4996, 0
        %v5031 = vsel %vm981, %v4997, 0
        %v5034 = vsel %vm981, %v4998, 0
        %v5037 = vsel %vm981, %v4999, 0
        %v5040 = vsel %vm981, %v5000, 0
        %v5043 = vsel %vm981, %v5001, 0
        %v5046 = vsel %vm981, %v5002, 0
        %v5049 = vsel %vm981, %v5003, 0
        %v5052 = vsel %vm981, %v5004, 0
        %5054 = vmatprep.subr.mxu0 0.0
        %5055 = vmatpush1.msra.mxu0 %v5006
        %5056 = vmatprep.subr.mxu0 0.0
        %5057 = vmatpush1.msra.mxu0 %v5007
        %5058 = vmatprep.subr.mxu0 0.0
        %5059 = vmatpush1.msra.mxu0 %v5008
        %5060 = vmatprep.subr.mxu0 0.0
        %5061 = vmatpush1.msra.mxu0 %v5009
        %5062 = vmatprep.subr.mxu0 0.0
        %5063 = vmatpush1.msra.mxu0 0.0
        %5064 = vmatprep.subr.mxu0 0.0
        %5065 = vmatpush1.msra.mxu0 0.0
        %5066 = vmatprep.subr.mxu0 0.0
        %5067 = vmatpush1.msra.mxu0 0.0
        %5068 = vmatprep.subr.mxu0 0.0
        %5069 = vmatpush1.msra.mxu0 0.0
        %5070 = vmatprep.subr.mxu0 0.0
        %5071 = vmatpush1.msra.mxu0 0.0
        %5072 = vmatprep.subr.mxu0 0.0
        %5073 = vmatpush1.msra.mxu0 0.0
        %5074 = vmatprep.subr.mxu0 0.0
        %5075 = vmatpush1.msra.mxu0 0.0
        %5076 = vmatprep.subr.mxu0 0.0
        %5077 = vmatpush1.msra.mxu0 0.0
        %5078 = vmatprep.subr.mxu0 0.0
        %5079 = vmatpush1.msra.mxu0 0.0
        %5080 = vmatprep.subr.mxu0 0.0
        %5081 = vmatpush1.msra.mxu0 0.0
        %5082 = vmatprep.subr.mxu0 0.0
        %5083 = vmatpush1.msra.mxu0 0.0
        %5084 = vmatprep.subr.mxu0 0.0
        %5085 = vmatpush1.msra.mxu0 0.0
        %5086 = vmatprep.subr.mxu0 0.0
        %5087 = vmatpush1.msra.mxu0 0.0
        %5088 = vmatprep.subr.mxu0 0.0
        %5089 = vmatpush1.msra.mxu0 0.0
        %5090 = vmatprep.subr.mxu0 0.0
        %5091 = vmatpush1.msra.mxu0 0.0
        %5092 = vmatprep.subr.mxu0 0.0
        %5093 = vmatpush1.msra.mxu0 0.0
        %5094 = vmatprep.subr.mxu0 0.0
        %5095 = vmatpush1.msra.mxu0 0.0
        %5096 = vmatprep.subr.mxu0 0.0
        %5097 = vmatpush1.msra.mxu0 0.0
        %5098 = vmatprep.subr.mxu0 0.0
        %5099 = vmatpush1.msra.mxu0 0.0
        %5100 = vmatprep.subr.mxu0 0.0
        %5101 = vmatpush1.msra.mxu0 0.0
        %5102 = vmatprep.subr.mxu0 0.0
        %5103 = vmatpush1.msra.mxu0 0.0
        %5104 = vmatprep.subr.mxu0 0.0
        %5105 = vmatpush1.msra.mxu0 0.0
        %5106 = vmatprep.subr.mxu0 0.0
        %5107 = vmatpush1.msra.mxu0 0.0
        %5108 = vmatprep.subr.mxu0 0.0
        %5109 = vmatpush1.msra.mxu0 0.0
        %5110 = vmatprep.subr.mxu0 0.0
        %5111 = vmatpush1.msra.mxu0 0.0
        %5112 = vmatprep.subr.mxu0 0.0
        %5113 = vmatpush1.msra.mxu0 0.0
        %5114 = vmatprep.subr.mxu0 0.0
        %5115 = vmatpush1.msra.mxu0 0.0
        %5116 = vmatprep.subr.mxu0 0.0
        %5117 = vmatpush1.msra.mxu0 0.0
        %5118 = vmatprep.mubr.f32.mxu0 0.0
        %5119 = vmatmul.mubr.f32.gmra.mrb[0].mxu0 %v5019
        %v5120 = vpop.f32.mrb[0].mxu0
        %v5121 = vadd.f32 %v5016, %v5120
        %v5122 = vpop.f32.mrb[0].mxu0
        %5123 = vmatprep.mubr.f32.mxu0 0.0
        %5124 = vmatmul.mubr.f32.gmra.mrb[0].mxu0 %v5022
        %v5125 = vpop.f32.mrb[0].mxu0
        %v5126 = vadd.f32 %v5016, %v5125
        %v5127 = vpop.f32.mrb[0].mxu0
        %5128 = vmatprep.mubr.f32.mxu0 0.0
        %5129 = vmatmul.mubr.f32.gmra.mrb[0].mxu0 %v5025
        %v5130 = vpop.f32.mrb[0].mxu0
        %v5131 = vadd.f32 %v5016, %v5130
        %v5132 = vpop.f32.mrb[0].mxu0
        %5133 = vmatprep.mubr.f32.mxu0 0.0
        %5134 = vmatmul.mubr.f32.gmra.mrb[0].mxu0 %v5028
        %v5135 = vpop.f32.mrb[0].mxu0
        %v5136 = vadd.f32 %v5016, %v5135
        %v5137 = vpop.f32.mrb[0].mxu0
        %5138 = vmatprep.mubr.f32.mxu0 0.0
        %5139 = vmatmul.mubr.f32.gmra.mrb[0].mxu0 %v5031
        %v5140 = vpop.f32.mrb[0].mxu0
        %v5141 = vadd.f32 %v5016, %v5140
        %v5142 = vpop.f32.mrb[0].mxu0
        %5143 = vmatprep.mubr.f32.mxu0 0.0
        %5144 = vmatmul.mubr.f32.gmra.mrb[0].mxu0 %v5034
        %v5145 = vpop.f32.mrb[0].mxu0
        %v5146 = vadd.f32 %v5016, %v5145
        %v5147 = vpop.f32.mrb[0].mxu0
        %5148 = vmatprep.mubr.f32.mxu0 0.0
        %5149 = vmatmul.mubr.f32.gmra.mrb[0].mxu0 %v5037
        %v5150 = vpop.f32.mrb[0].mxu0
        %v5151 = vadd.f32 %v5016, %v5150
        %v5152 = vpop.f32.mrb[0].mxu0
        %5153 = vmatprep.mubr.f32.mxu0 0.0
        %5154 = vmatmul.mubr.f32.gmra.mrb[0].mxu0 %v5040
        %v5155 = vpop.f32.mrb[0].mxu0
        %v5156 = vadd.f32 %v5016, %v5155
        %v5157 = vpop.f32.mrb[0].mxu0
        %5158 = vmatprep.mubr.f32.mxu0 0.0
        %5159 = vmatmul.mubr.f32.gmra.mrb[0].mxu0 %v5043
        %v5160 = vpop.f32.mrb[0].mxu0
        %v5161 = vadd.f32 %v5016, %v5160
        %v5162 = vpop.f32.mrb[0].mxu0
        %5163 = vmatprep.mubr.f32.mxu0 0.0
        %5164 = vmatmul.mubr.f32.gmra.mrb[0].mxu0 %v5046
        %v5165 = vpop.f32.mrb[0].mxu0
        %v5166 = vadd.f32 %v5016, %v5165
        %v5167 = vpop.f32.mrb[0].mxu0
        %5168 = vmatprep.mubr.f32.mxu0 0.0
        %5169 = vmatmul.mubr.f32.gmra.mrb[0].mxu0 %v5049
        %v5170 = vpop.f32.mrb[0].mxu0
        %v5171 = vadd.f32 %v5016, %v5170
        %v5172 = vpop.f32.mrb[0].mxu0
        %5173 = vmatprep.mubr.f32.mxu0 0.0
        %5174 = vmatmul.mubr.f32.gmra.mrb[0].mxu0 %v5052
        %v5175 = vpop.f32.mrb[0].mxu0
        %v5176 = vadd.f32 %v5016, %v5175
        %v5177 = vpop.f32.mrb[0].mxu0
        %5178 = vdwg.mxu0
        %v5179 = vadd.f32 %v5121, %v4807
        %v5180 = vadd.f32 %v5126, %v4808
        %v5181 = vadd.f32 %v5131, %v4809
        %v5182 = vadd.f32 %v5136, %v4810
        %v5183 = vadd.f32 %v5141, %v4811
        %v5184 = vadd.f32 %v5146, %v4812
        %v5185 = vadd.f32 %v5151, %v4813
        %v5186 = vadd.f32 %v5156, %v4814
        %v5187 = vadd.f32 %v5161, %v4815
        %v5188 = vadd.f32 %v5166, %v4816
        %v5189 = vadd.f32 %v5171, %v4817
        %v5190 = vadd.f32 %v5176, %v4818
        %s5191 = scalar_lea.vmem [#allocation19], 1
        %v5192 = vld [vmem:[%s5191] sm:$0x1]
        %s5193 = scalar_lea.vmem [#allocation20], 1
        %v5194 = vld [vmem:[%s5193] sm:$0x1]
        %v5195 = vsel %vm981, %v5179, 0.0
        %5196 = vadd.xlane.f32.xlu0 %v5195
        %v5197 = vpop.xlane.xlu0 %5196
        %v5198 = vsel %vm981, %v5180, 0.0
        %5199 = vadd.xlane.f32.xlu0 %v5198
        %v5200 = vpop.xlane.xlu0 %5199
        %v5201 = vsel %vm981, %v5181, 0.0
        %5202 = vadd.xlane.f32.xlu0 %v5201
        %v5203 = vpop.xlane.xlu0 %5202
        %v5204 = vsel %vm981, %v5182, 0.0
        %5205 = vadd.xlane.f32.xlu0 %v5204
        %v5206 = vpop.xlane.xlu0 %5205
        %v5207 = vsel %vm981, %v5183, 0.0
        %5208 = vadd.xlane.f32.xlu0 %v5207
        %v5209 = vpop.xlane.xlu0 %5208
        %v5210 = vsel %vm981, %v5184, 0.0
        %5211 = vadd.xlane.f32.xlu0 %v5210
        %v5212 = vpop.xlane.xlu0 %5211
        %v5213 = vsel %vm981, %v5185, 0.0
        %5214 = vadd.xlane.f32.xlu0 %v5213
        %v5215 = vpop.xlane.xlu0 %5214
        %v5216 = vsel %vm981, %v5186, 0.0
        %5217 = vadd.xlane.f32.xlu0 %v5216
        %v5218 = vpop.xlane.xlu0 %5217
        %v5219 = vsel %vm981, %v5187, 0.0
        %5220 = vadd.xlane.f32.xlu0 %v5219
        %v5221 = vpop.xlane.xlu0 %5220
        %v5222 = vsel %vm981, %v5188, 0.0
        %5223 = vadd.xlane.f32.xlu0 %v5222
        %v5224 = vpop.xlane.xlu0 %5223
        %v5225 = vsel %vm981, %v5189, 0.0
        %5226 = vadd.xlane.f32.xlu0 %v5225
        %v5227 = vpop.xlane.xlu0 %5226
        %v5228 = vsel %vm981, %v5190, 0.0
        %5229 = vadd.xlane.f32.xlu0 %v5228
        %v5230 = vpop.xlane.xlu0 %5229
        %v5231 = vmul.f32 %v5197, %v2364
        %v5232 = vmul.f32 %v5200, %v2364
        %v5233 = vmul.f32 %v5203, %v2364
        %v5234 = vmul.f32 %v5206, %v2364
        %v5235 = vmul.f32 %v5209, %v2364
        %v5236 = vmul.f32 %v5212, %v2364
        %v5237 = vmul.f32 %v5215, %v2364
        %v5238 = vmul.f32 %v5218, %v2364
        %v5239 = vmul.f32 %v5221, %v2364
        %v5240 = vmul.f32 %v5224, %v2364
        %v5241 = vmul.f32 %v5227, %v2364
        %v5242 = vmul.f32 %v5230, %v2364
        %v5243 = vsub.f32 %v5179, %v5231
        %v5244 = vsub.f32 %v5180, %v5232
        %v5245 = vsub.f32 %v5181, %v5233
        %v5246 = vsub.f32 %v5182, %v5234
        %v5247 = vsub.f32 %v5183, %v5235
        %v5248 = vsub.f32 %v5184, %v5236
        %v5249 = vsub.f32 %v5185, %v5237
        %v5250 = vsub.f32 %v5186, %v5238
        %v5251 = vsub.f32 %v5187, %v5239
        %v5252 = vsub.f32 %v5188, %v5240
        %v5253 = vsub.f32 %v5189, %v5241
        %v5254 = vsub.f32 %v5190, %v5242
        %v5255 = vmul.f32 %v5243, %v5243
        %v5256 = vmul.f32 %v5244, %v5244
        %v5257 = vmul.f32 %v5245, %v5245
        %v5258 = vmul.f32 %v5246, %v5246
        %v5259 = vmul.f32 %v5247, %v5247
        %v5260 = vmul.f32 %v5248, %v5248
        %v5261 = vmul.f32 %v5249, %v5249
        %v5262 = vmul.f32 %v5250, %v5250
        %v5263 = vmul.f32 %v5251, %v5251
        %v5264 = vmul.f32 %v5252, %v5252
        %v5265 = vmul.f32 %v5253, %v5253
        %v5266 = vmul.f32 %v5254, %v5254
        %v5267 = vsel %vm981, %v5255, 0.0
        %5268 = vadd.xlane.f32.xlu0 %v5267
        %v5269 = vpop.xlane.xlu0 %5268
        %v5270 = vsel %vm981, %v5256, 0.0
        %5271 = vadd.xlane.f32.xlu0 %v5270
        %v5272 = vpop.xlane.xlu0 %5271
        %v5273 = vsel %vm981, %v5257, 0.0
        %5274 = vadd.xlane.f32.xlu0 %v5273
        %v5275 = vpop.xlane.xlu0 %5274
        %v5276 = vsel %vm981, %v5258, 0.0
        %5277 = vadd.xlane.f32.xlu0 %v5276
        %v5278 = vpop.xlane.xlu0 %5277
        %v5279 = vsel %vm981, %v5259, 0.0
        %5280 = vadd.xlane.f32.xlu0 %v5279
        %v5281 = vpop.xlane.xlu0 %5280
        %v5282 = vsel %vm981, %v5260, 0.0
        %5283 = vadd.xlane.f32.xlu0 %v5282
        %v5284 = vpop.xlane.xlu0 %5283
        %v5285 = vsel %vm981, %v5261, 0.0
        %5286 = vadd.xlane.f32.xlu0 %v5285
        %v5287 = vpop.xlane.xlu0 %5286
        %v5288 = vsel %vm981, %v5262, 0.0
        %5289 = vadd.xlane.f32.xlu0 %v5288
        %v5290 = vpop.xlane.xlu0 %5289
        %v5291 = vsel %vm981, %v5263, 0.0
        %5292 = vadd.xlane.f32.xlu0 %v5291
        %v5293 = vpop.xlane.xlu0 %5292
        %v5294 = vsel %vm981, %v5264, 0.0
        %5295 = vadd.xlane.f32.xlu0 %v5294
        %v5296 = vpop.xlane.xlu0 %5295
        %v5297 = vsel %vm981, %v5265, 0.0
        %5298 = vadd.xlane.f32.xlu0 %v5297
        %v5299 = vpop.xlane.xlu0 %5298
        %v5300 = vsel %vm981, %v5266, 0.0
        %5301 = vadd.xlane.f32.xlu0 %v5300
        %v5302 = vpop.xlane.xlu0 %5301
        %v5303 = vmul.f32 %v5269, %v2364
        %v5304 = vmul.f32 %v5272, %v2364
        %v5305 = vmul.f32 %v5275, %v2364
        %v5306 = vmul.f32 %v5278, %v2364
        %v5307 = vmul.f32 %v5281, %v2364
        %v5308 = vmul.f32 %v5284, %v2364
        %v5309 = vmul.f32 %v5287, %v2364
        %v5310 = vmul.f32 %v5290, %v2364
        %v5311 = vmul.f32 %v5293, %v2364
        %v5312 = vmul.f32 %v5296, %v2364
        %v5313 = vmul.f32 %v5299, %v2364
        %v5314 = vmul.f32 %v5302, %v2364
        %v5315 = vadd.f32 %v5303, 1e-05
        %v5316 = vadd.f32 %v5304, 1e-05
        %v5317 = vadd.f32 %v5305, 1e-05
        %v5318 = vadd.f32 %v5306, 1e-05
        %v5319 = vadd.f32 %v5307, 1e-05
        %v5320 = vadd.f32 %v5308, 1e-05
        %v5321 = vadd.f32 %v5309, 1e-05
        %v5322 = vadd.f32 %v5310, 1e-05
        %v5323 = vadd.f32 %v5311, 1e-05
        %v5324 = vadd.f32 %v5312, 1e-05
        %v5325 = vadd.f32 %v5313, 1e-05
        %v5326 = vadd.f32 %v5314, 1e-05
        %v5327 = vrsqrt.pop %v5315
        %v5328 = vrsqrt.pop %v5316
        %v5329 = vrsqrt.pop %v5317
        %v5330 = vrsqrt.pop %v5318
        %v5331 = vrsqrt.pop %v5319
        %v5332 = vrsqrt.pop %v5320
        %v5333 = vrsqrt.pop %v5321
        %v5334 = vrsqrt.pop %v5322
        %v5335 = vrsqrt.pop %v5323
        %v5336 = vrsqrt.pop %v5324
        %v5337 = vrsqrt.pop %v5325
        %v5338 = vrsqrt.pop %v5326
        %v5339 = vmul.f32 %v5243, %v5327
        %v5340 = vmul.f32 %v5244, %v5328
        %v5341 = vmul.f32 %v5245, %v5329
        %v5342 = vmul.f32 %v5246, %v5330
        %v5343 = vmul.f32 %v5247, %v5331
        %v5344 = vmul.f32 %v5248, %v5332
        %v5345 = vmul.f32 %v5249, %v5333
        %v5346 = vmul.f32 %v5250, %v5334
        %v5347 = vmul.f32 %v5251, %v5335
        %v5348 = vmul.f32 %v5252, %v5336
        %v5349 = vmul.f32 %v5253, %v5337
        %v5350 = vmul.f32 %v5254, %v5338
        %v5352 = vlaneseq
        %v5353 = vshrl.u32 %v5352, 7
        %v5354 = vsub.s32 0, %v5353
        %v5355 = vrot.slane %v5192, %v5354
        %v5357 = vmul.f32 %v5339, %v5355
        %v5358 = vmul.f32 %v5340, %v5355
        %v5359 = vmul.f32 %v5341, %v5355
        %v5360 = vmul.f32 %v5342, %v5355
        %v5361 = vmul.f32 %v5343, %v5355
        %v5362 = vmul.f32 %v5344, %v5355
        %v5363 = vmul.f32 %v5345, %v5355
        %v5364 = vmul.f32 %v5346, %v5355
        %v5365 = vmul.f32 %v5347, %v5355
        %v5366 = vmul.f32 %v5348, %v5355
        %v5367 = vmul.f32 %v5349, %v5355
        %v5368 = vmul.f32 %v5350, %v5355
        %v5370 = vlaneseq
        %v5371 = vshrl.u32 %v5370, 7
        %v5372 = vsub.s32 0, %v5371
        %v5373 = vrot.slane %v5194, %v5372
        %v5375 = vadd.f32 %v5357, %v5373
        %v5376 = vadd.f32 %v5358, %v5373
        %v5377 = vadd.f32 %v5359, %v5373
        %v5378 = vadd.f32 %v5360, %v5373
        %v5379 = vadd.f32 %v5361, %v5373
        %v5380 = vadd.f32 %v5362, %v5373
        %v5381 = vadd.f32 %v5363, %v5373
        %v5382 = vadd.f32 %v5364, %v5373
        %v5383 = vadd.f32 %v5365, %v5373
        %v5384 = vadd.f32 %v5366, %v5373
        %v5385 = vadd.f32 %v5367, %v5373
        %v5386 = vadd.f32 %v5368, %v5373
        %5387 = vst.msk [vmem:[%s740] sm:$0xff] %vm981, %v5375
        %5388 = vst.msk [vmem:[%s740 + $0x8] sm:$0xff] %vm981, %v5376
        %5389 = vst.msk [vmem:[%s740 + $0x10] sm:$0xff] %vm981, %v5377
        %5390 = vst.msk [vmem:[%s740 + $0x18] sm:$0xff] %vm981, %v5378
        %5391 = vst.msk [vmem:[%s740 + $0x20] sm:$0xff] %vm981, %v5379
        %5392 = vst.msk [vmem:[%s740 + $0x28] sm:$0xff] %vm981, %v5380
        %5393 = vst.msk [vmem:[%s740 + $0x30] sm:$0xff] %vm981, %v5381
        %5394 = vst.msk [vmem:[%s740 + $0x38] sm:$0xff] %vm981, %v5382
        %5395 = vst.msk [vmem:[%s740 + $0x40] sm:$0xff] %vm981, %v5383
        %5396 = vst.msk [vmem:[%s740 + $0x48] sm:$0xff] %vm981, %v5384
        %5397 = vst.msk [vmem:[%s740 + $0x50] sm:$0xff] %vm981, %v5385
        %5398 = vst.msk [vmem:[%s740 + $0x58] sm:$0xff] %vm981, %v5386
        %s5399 = sand.u32 %s410, 1
        %s5400 = scalar_lea.sflag [#allocation4], %s5399
        %s5401 = sand.u32 %s410, 1
        %s5402 = smul.addr %s5401, 96
        %s5403 = scalar_lea.vmem [#allocation23], %s5402
        // Predicated region
        $region141: #{transformer_layer_forward.1} parent=87 // pred_check
          %p5404 = pneg %p420
        $region142: #{transformer_layer_forward.1} parent=87 // pred_check_branch
          %5406 = sbr.rel (%p5404) target = $region144
        $region143: #{transformer_layer_forward.1} parent=87 // pred_region
          %s5408 = ssub.s32 1536, 1536
          %5409 = vsyncadd %s5400, %s5408
          %s5410 = smul.addr %s40, 12
          %s5411 = smul.addr %s5410, 128
          %s5412 = scalar_lea.hbm %s17, %s5411
          %s5413 = sshll.u32 %s5403, 4
          %s5414 = int_to_ptr.vmem [resolvable:$true] %s5413
          %5419 = dma.vmem_to_hbm [thread:$0]  %s5414, 1536, %s5412, %s5400, 128, 128, 8
        $region144: #{transformer_layer_forward.1} parent=87 // pred_fallthru
          _
      $region88: #{transformer_layer_forward.1} parent=5 // pred_fallthru
        _
      %p5420 = scmp.le.s32.totalorder 2, %s35
      // Predicated region
      $region145: #{transformer_layer_forward.1} parent=5 // pred_check
        %p5421 = pneg %p5420
      $region146: #{transformer_layer_forward.1} parent=5 // pred_check_branch
        %5423 = sbr.rel (%p5421) target = $region148
      $region147: #{transformer_layer_forward.1} parent=5 // pred_region
        %s5424 = ssub.s32 %s35, 2
        // Predicated region
        $region149: #{transformer_layer_forward.1} parent=147 // pred_check
          %p5425 = pneg %p426
        $region150: #{transformer_layer_forward.1} parent=147 // pred_check_branch
          %5427 = sbr.rel (%p5425) target = $region152
        $region151: #{transformer_layer_forward.1} parent=147 // pred_region
          %s5428 = sand.u32 %s411, 1
          %s5429 = scalar_lea.sflag [#allocation4], %s5428
          %s5430 = sand.u32 %s411, 1
          %s5431 = smul.addr %s5430, 96
          %s5432 = scalar_lea.vmem [#allocation23], %s5431
          %5433 = dma.done %s5429, 1536
        $region152: #{transformer_layer_forward.1} parent=147 // pred_fallthru
          _
      $region148: #{transformer_layer_forward.1} parent=5 // pred_fallthru
        _
    $region6: #{transformer_layer_forward.1} parent=1 // loop_footer
      %s39 = sadd.s32 1, %s35
    $region7: #{transformer_layer_forward.1} parent=1 // loop_footer_branch
      %34 = sbr.rel target = $region3
    $region8: #{transformer_layer_forward.1} parent=1 // loop_exit
      _
    %5434 = vsyncpa [#allocation3], 1
    %s5435 = scalar_lea.sflag [#allocation3], 1
    %5436 = vsyncpa %s5435, 1
    %5437 = vsyncpa [#allocation6], 1
    %5438 = vsyncpa [#allocation9], 1
    %5439 = vsyncpa [#allocation12], 1
    %5440 = vsyncpa [#allocation15], 1
    %5441 = vsyncpa [#allocation18], 1
    %5442 = vsyncpa [#allocation21], 1
    %5443 = vsyncpa [#allocation4], 1
    %s5444 = scalar_lea.sflag [#allocation4], 1
    %5445 = vsyncpa %s5444, 1

</llo_original>
